<compile_context>
chip_gen: v5e
topology: v5e:2x2
jax: 0.10.0
libtpu: 0.0.40
codegen_flags: <defaults>
</compile_context>

<pallas_src>
import functools
import math

import jax
import jax.numpy as jnp
from jax.experimental import pallas as pl
from jax.experimental.pallas import tpu as pltpu

_ACT_DTYPE = jnp.bfloat16          # inter-kernel activations
_PARAM_DTYPE = jnp.bfloat16        # stored weights
_MM_DTYPE = jnp.bfloat16           # MXU operand dtype (accumulation stays f32)
_MAX_ROW_BLOCK = 256               # rows per tile for row-tiled kernels

_BUFFERED_CONST = None             # set in __main__ if pl.Buffered(1) is supported


@functools.lru_cache(maxsize=None)
def _vmem_limit_bytes():
    """Generation-aware scoped-VMEM request (~75% of physical, capped)."""
    try:
        cap = getattr(pltpu.get_tpu_info(), "vmem_capacity_bytes", None)
        if cap:
            return min(int(cap * 0.75), 112 * 1024 * 1024)
    except Exception:
        pass
    return 64 * 1024 * 1024


def _cparams():
    return pltpu.CompilerParams(
        dimension_semantics=("parallel",),
        vmem_limit_bytes=_vmem_limit_bytes(),
    )


def _round_up(x, m):
    return (x + m - 1) // m * m


def _row_plan(n):
    """Pick a large row tile (multiple of 16, <= _MAX_ROW_BLOCK), preferring exact
    divisors of the padded row count so that pad/slice copies are avoided."""
    n16 = _round_up(n, 16)                       # 16-row granularity: bf16 (16,128) packing
    bn_cap = min(n16, _MAX_ROW_BLOCK)
    for cand in range(bn_cap, 0, -16):
        if n16 % cand == 0 and (cand >= 64 or n16 <= _MAX_ROW_BLOCK):
            return cand, n16
    return bn_cap, _round_up(n16, bn_cap)


def _pad_rows(x, n_pad):
    n = x.shape[0]
    return x if n == n_pad else jnp.pad(x, ((0, n_pad - n), (0, 0)))


def _unpad_rows(x, n):
    return x if x.shape[0] == n else x[:n]


def _const_spec(shape):
    """BlockSpec for a grid-invariant (weight/bias) block; single-buffered if supported."""
    zeros = (0,) * len(shape)
    if _BUFFERED_CONST is not None:
        return pl.BlockSpec(shape, lambda *_: zeros, pipeline_mode=_BUFFERED_CONST)
    return pl.BlockSpec(shape, lambda *_: zeros)


def _mm(a, b):
    return jnp.dot(a.astype(_MM_DTYPE), b.astype(_MM_DTYPE),
                   preferred_element_type=jnp.float32)


def _ln_val(x, g, b, eps):
    xf = x.astype(jnp.float32)
    mu = jnp.mean(xf, axis=-1, keepdims=True)
    c = xf - mu
    var = jnp.mean(c * c, axis=-1, keepdims=True)
    return c * jax.lax.rsqrt(var + eps) * g.astype(jnp.float32) + b.astype(jnp.float32)


# --------------------------------------------------------------------------
# Pallas kernels
# --------------------------------------------------------------------------
def _rows_kernel(*refs, has_ln, has_res, eps):
    """[res +] ( LN(x) ) @ W + b   on a (bn, D) row tile; f32 accumulation."""
    refs = list(refs)
    x_ref = refs.pop(0)
    if has_ln:
        g_ref = refs.pop(0)
        b_ref = refs.pop(0)
    w_ref = refs.pop(0)
    bias_ref = refs.pop(0)
    if has_res:
        res_ref = refs.pop(0)
    o_ref = refs.pop(0)

    h = x_ref[...].astype(jnp.float32)
    if has_ln:
        h = _ln_val(h, g_ref[...], b_ref[...], eps)
    y = _mm(h, w_ref[...]) + bias_ref[...].astype(jnp.float32)
    if has_res:
        y = y + res_ref[...].astype(jnp.float32)
    o_ref[...] = y.astype(o_ref.dtype)


def dense_rows(x, w, b, *, ln=None, residual=None, eps=1e-5, out_dtype=None):
    """Row-tiled fused (LN ->) matmul (+ bias) (+ residual)."""
    n, d_in = x.shape
    d_out = w.shape[1]
    bn, n_pad = _row_plan(n)
    xp = _pad_rows(x, n_pad)
    out_dtype = out_dtype or _ACT_DTYPE

    args = [xp]
    in_specs = [pl.BlockSpec((bn, d_in), lambda i: (i, 0))]
    if ln is not None:
        args += [ln[0], ln[1]]
        in_specs += [_const_spec((1, d_in)), _const_spec((1, d_in))]
    args += [w, b.reshape(1, -1)]
    in_specs += [_const_spec((d_in, d_out)), _const_spec((1, d_out))]
    if residual is not None:
        args.append(_pad_rows(residual, n_pad))
        in_specs.append(pl.BlockSpec((bn, d_out), lambda i: (i, 0)))

    kern = functools.partial(_rows_kernel, has_ln=ln is not None,
                             has_res=residual is not None, eps=eps)
    out = pl.pallas_call(
        kern,
        out_shape=jax.ShapeDtypeStruct((n_pad, d_out), out_dtype),
        grid=(n_pad // bn,),
        in_specs=in_specs,
        out_specs=pl.BlockSpec((bn, d_out), lambda i: (i, 0)),
        compiler_params=_cparams(),
    )(*args)
    return _unpad_rows(out, n)


def _ffn_kernel(*refs, final_ln, eps):
    """y = x + 0.5 * (SiLU(LN(x) @ W1 + b1) @ W2 + b2);  optionally y = LN2(y)."""
    refs = list(refs)
    x_ref, g1, b1, w1, bb1, w2, bb2 = refs[:7]
    rest = refs[7:]
    if final_ln:
        g2, b2, o_ref = rest
    else:
        (o_ref,) = rest
    x = x_ref[...].astype(jnp.float32)
    h = _ln_val(x, g1[...], b1[...], eps)
    h = _mm(h, w1[...]) + bb1[...].astype(jnp.float32)
    h = h * jax.nn.sigmoid(h)                            # Swish
    y = x + 0.5 * (_mm(h, w2[...]) + bb2[...].astype(jnp.float32))
    if final_ln:
        y = _ln_val(y, g2[...], b2[...], eps)
    o_ref[...] = y.astype(o_ref.dtype)


def ffn_residual(x2d, p, prefix, out_ln=None):
    # TODO(synk): add a d_ffn column tile (2-D grid + VMEM accumulator) for very large d_ffn on v7x.
    n, d = x2d.shape
    d_ffn = p[prefix + "_w1"].shape[1]
    bn, n_pad = _row_plan(n)
    xp = _pad_rows(x2d, n_pad)

    args = [xp, p[prefix + "_ln_g"], p[prefix + "_ln_b"],
            p[prefix + "_w1"], p[prefix + "_b1"].reshape(1, -1),
            p[prefix + "_w2"], p[prefix + "_b2"].reshape(1, -1)]
    in_specs = [
        pl.BlockSpec((bn, d), lambda i: (i, 0)),
        _const_spec((1, d)), _const_spec((1, d)),
        _const_spec((d, d_ffn)), _const_spec((1, d_ffn)),
        _const_spec((d_ffn, d)), _const_spec((1, d)),
    ]
    if out_ln is not None:
        args += [out_ln[0], out_ln[1]]
        in_specs += [_const_spec((1, d)), _const_spec((1, d))]

    out = pl.pallas_call(
        functools.partial(_ffn_kernel, final_ln=out_ln is not None, eps=1e-5),
        out_shape=jax.ShapeDtypeStruct((n_pad, d), _ACT_DTYPE),
        grid=(n_pad // bn,),
        in_specs=in_specs,
        out_specs=pl.BlockSpec((bn, d), lambda i: (i, 0)),
        compiler_params=_cparams(),
    )(*args)
    return _unpad_rows(out, n)


def _ln_glu_kernel(x_ref, g_ref, b_ref, wa_ref, ba_ref, wb_ref, bb_ref, o_ref, *, eps):
    h = _ln_val(x_ref[...], g_ref[...], b_ref[...], eps)
    a = _mm(h, wa_ref[...]) + ba_ref[...].astype(jnp.float32)
    c = _mm(h, wb_ref[...]) + bb_ref[...].astype(jnp.float32)
    o_ref[...] = (a * jax.nn.sigmoid(c)).astype(o_ref.dtype)


def ln_glu(x2d, g, b, w, bias):
    """LayerNorm -> pointwise Conv1d(D -> 2D, k=1) -> GLU, fused."""
    n, d = x2d.shape
    d_out = w.shape[1] // 2
    wa, wb = w[:, :d_out], w[:, d_out:]
    ba, bb = bias[:d_out].reshape(1, -1), bias[d_out:].reshape(1, -1)
    bn, n_pad = _row_plan(n)
    xp = _pad_rows(x2d, n_pad)
    out = pl.pallas_call(
        functools.partial(_ln_glu_kernel, eps=1e-5),
        out_shape=jax.ShapeDtypeStruct((n_pad, d_out), _ACT_DTYPE),
        grid=(n_pad // bn,),
        in_specs=[
            pl.BlockSpec((bn, d), lambda i: (i, 0)),
            _const_spec((1, d)), _const_spec((1, d)),
            _const_spec((d, d_out)), _const_spec((1, d_out)),
            _const_spec((d, d_out)), _const_spec((1, d_out)),
        ],
        out_specs=pl.BlockSpec((bn, d_out), lambda i: (i, 0)),
        compiler_params=_cparams(),
    )(xp, g, b, wa, ba, wb, bb)
    return _unpad_rows(out, n)


def _ln_kernel(x_ref, g_ref, b_ref, o_ref, *, eps):
    o_ref[...] = _ln_val(x_ref[...], g_ref[...], b_ref[...], eps).astype(o_ref.dtype)


def layernorm(x2d, g, b, eps=1e-5, out_dtype=None):
    n, d = x2d.shape
    bn, n_pad = _row_plan(n)
    xp = _pad_rows(x2d, n_pad)
    out_dtype = out_dtype or _ACT_DTYPE
    out = pl.pallas_call(
        functools.partial(_ln_kernel, eps=eps),
        out_shape=jax.ShapeDtypeStruct((n_pad, d), out_dtype),
        grid=(n_pad // bn,),
        in_specs=[pl.BlockSpec((bn, d), lambda i: (i, 0)),
                  _const_spec((1, d)), _const_spec((1, d))],
        out_specs=pl.BlockSpec((bn, d), lambda i: (i, 0)),
        compiler_params=_cparams(),
    )(xp, g, b)
    return _unpad_rows(out, n)


def _dwconv_tail_kernel(x_ref, res_ref, w_ref, b_ref, g_ref, beta_ref,
                        pw_ref, pwb_ref, o_ref, *, t_out, eps):
    """Depthwise conv + fused [LN -> Swish -> pointwise2 -> +residual] epilogue."""
    k = w_ref.shape[0]
    x = x_ref[0]                                         # (T + K - 1, D)
    acc = jnp.zeros((t_out, x.shape[1]), jnp.float32)
    # TODO(synk): pre-rotate tap slices to 8-aligned sublane offsets to cut XLU relayout work.
    for kk in range(k):                                  # K static -> unrolled
        acc = acc + (x[kk:kk + t_out, :].astype(jnp.float32)
                     * w_ref[kk:kk + 1, :].astype(jnp.float32))
    acc = acc + b_ref[...].astype(jnp.float32)
    h = _ln_val(acc, g_ref[...], beta_ref[...], eps)
    h = h * jax.nn.sigmoid(h)                            # Swish
    y = _mm(h, pw_ref[...]) + pwb_ref[...].astype(jnp.float32) \
        + res_ref[0].astype(jnp.float32)
    o_ref[0] = y.astype(o_ref.dtype)


def depthwise_conv_tail(x, res, p):
    """Depthwise 'same' Conv1d over time + fused conv-module tail.  x/res: (B, T, D)."""
    bsz, t, d = x.shape
    k = p["dw_w"].shape[0]
    pad = (k - 1) // 2
    x_pad = jnp.pad(x, ((0, 0), (pad, pad), (0, 0)))
    # TODO(synk): for very long T, tile over (B, time chunks with a K-1 halo) instead of grid=(B,)
    # (also gives >=2 independent steps for v7x's two TensorCores at small B).
    return pl.pallas_call(
        functools.partial(_dwconv_tail_kernel, t_out=t, eps=1e-5),
        out_shape=jax.ShapeDtypeStruct((bsz, t, d), _ACT_DTYPE),
        grid=(bsz,),
        in_specs=[
            pl.BlockSpec((1, t + 2 * pad, d), lambda i: (i, 0, 0)),
            pl.BlockSpec((1, t, d), lambda i: (i, 0, 0)),
            _const_spec((k, d)),
            _const_spec((1, d)),
            _const_spec((1, d)),
            _const_spec((1, d)),
            _const_spec((d, d)),
            _const_spec((1, d)),
        ],
        out_specs=pl.BlockSpec((1, t, d), lambda i: (i, 0, 0)),
        compiler_params=_cparams(),
    )(x_pad, res, p["dw_w"], p["dw_b"].reshape(1, -1),
      p["conv_ln2_g"], p["conv_ln2_b"], p["pw2_w"], p["pw2_b"].reshape(1, -1))


def _attn_kernel(*refs, nhead, dh, t, scale, shift, fused_shift):
    """One batch row-block: all heads' bias add, ac/bd scores, rel-shift, softmax, P@V.
    Output is a lane-dense (T, D) slab with heads already merged."""
    if fused_shift:
        qkv_ref, pk_ref, bu_ref, bv_ref, o_ref = refs
    else:
        qkv_ref, bd_ref, bu_ref, o_ref = refs

    d = nhead * dh
    qkv = qkv_ref[0]                                     # (T, 3D)
    dn = (((1,), (1,)), ((), ()))                        # A @ B^T
    if fused_shift:
        pk = pk_ref[...]                                 # (P_pad, D)

    outs = []
    for h in range(nhead):                               # static -> unrolled
        q = qkv[:, h * dh:(h + 1) * dh]
        k = qkv[:, d + h * dh:d + (h + 1) * dh]
        v = qkv[:, 2 * d + h * dh:2 * d + (h + 1) * dh]

        qu = (q.astype(jnp.float32) + bu_ref[h].astype(jnp.float32)).astype(_MM_DTYPE)
        ac = jax.lax.dot_general(qu, k.astype(_MM_DTYPE), dn,
                                 preferred_element_type=jnp.float32)      # (T, T)
        if fused_shift:
            qv = (q.astype(jnp.float32) + bv_ref[h].astype(jnp.float32)).astype(_MM_DTYPE)
            pk_h = pk[:, h * dh:(h + 1) * dh]
            bd = jax.lax.dot_general(qv, pk_h.astype(_MM_DTYPE), dn,
                                     preferred_element_type=jnp.float32)  # (T, P_pad)
            # Transformer-XL rel-shift: out[i, j] = bd[i, (T-1) - i + j] via a per-row
            # (strided) lane rotation on the XLU — no gather, no HBM round trip.
            bd_shift = pltpu.roll(bd, shift, 1, stride=1, stride_axis=0)[:, :t]
        else:
            bd_shift = bd_ref[0, h]                       # precomputed (T, T)

        s = (ac + bd_shift) * scale
        m = jnp.max(s, axis=-1, keepdims=True)
        e = jnp.exp(s - m)
        l = jnp.sum(e, axis=-1, keepdims=True)
        prob = e * pl.reciprocal(l, approx=True)          # EUP slot, not a VPU divide
        outs.append(jnp.dot(prob.astype(_MM_DTYPE), v.astype(_MM_DTYPE),
                            preferred_element_type=jnp.float32))

    o_ref[0] = jnp.concatenate(outs, axis=-1).astype(o_ref.dtype)


# --------------------------------------------------------------------------
# Feature probes (run once, outside jit)
# --------------------------------------------------------------------------
def _roll_skew_available():
    """True iff pltpu.roll with a per-sublane stride exists and follows the np.roll
    convention out[i, j] = x[i, (j - shift - i*stride) mod n]."""
    try:
        def kern(x_ref, o_ref):
            o_ref[...] = pltpu.roll(x_ref[...], 1, 1, stride=1, stride_axis=0)

        x = jax.lax.broadcasted_iota(jnp.float32, (8, 128), 1)
        out = jax.device_get(
            pl.pallas_call(kern, out_shape=jax.ShapeDtypeStruct((8, 128), jnp.float32))(x)
        )
        return (int(round(float(out[0, 0]))) == 127
                and int(round(float(out[1, 0]))) == 126)
    except Exception:
        return False


def _probe_buffered_const():
    """Return pl.Buffered(1) if single-buffered constant-index BlockSpecs work, else None."""
    try:
        mode = pl.Buffered(1)

        def kern(x_ref, w_ref, o_ref):
            o_ref[...] = x_ref[...] + w_ref[...]

        x = jnp.zeros((8, 128), jnp.float32)
        w = jnp.zeros((1, 128), jnp.float32)
        out = pl.pallas_call(
            kern,
            out_shape=jax.ShapeDtypeStruct((8, 128), jnp.float32),
            grid=(1,),
            in_specs=[pl.BlockSpec((8, 128), lambda i: (0, 0)),
                      pl.BlockSpec((1, 128), lambda i: (0, 0), pipeline_mode=mode)],
            out_specs=pl.BlockSpec((8, 128), lambda i: (0, 0)),
        )(x, w)
        jax.block_until_ready(out)
        return mode
    except Exception:
        return None


# --------------------------------------------------------------------------
# Model glue (plain JAX: tiny reshapes / slices only — no head transposes)
# --------------------------------------------------------------------------
def rel_pos_enc_xl(t, d):
    """RelPosEncXL -> (2T-1, D)."""
    inv_freq = jnp.exp(
        jnp.arange(0, d, 2, dtype=jnp.float32) * -(math.log(10000.0) / d)
    )
    pos = jnp.arange(t, dtype=jnp.float32)[:, None]
    sin, cos = jnp.sin(pos * inv_freq), jnp.cos(pos * inv_freq)
    pe_past = jnp.zeros((t, d), jnp.float32).at[:, 0::2].set(sin).at[:, 1::2].set(cos)
    pe_future = jnp.zeros((t, d), jnp.float32).at[:, 0::2].set(-sin).at[:, 1::2].set(cos)
    pe_past = jnp.flip(pe_past, axis=0)
    return jnp.concatenate([pe_past, pe_future[1:]], axis=0)


def rel_pos_mha_xl(x2d_pad, pe, p, nhead, bsz, t, n, use_fused_shift):
    """speechbrain RelPosMHAXL self-attention (no masks, dropout=0), residual folded."""
    n_pad, d = x2d_pad.shape
    dh = d // nhead
    scale = 1.0 / math.sqrt(dh)

    # pre-LN (norm1) fused into the QKV projection (RelPosMHAXL projections have no bias).
    qkv = dense_rows(x2d_pad, p["qkv_w"], jnp.zeros((3 * d,), _PARAM_DTYPE),
                     ln=(p["norm1_g"], p["norm1_b"]))
    qkv = _unpad_rows(qkv, n).reshape(bsz, t, 3 * d)     # heads stay packed: no transposes

    # positional keys; position axis padded to a lane-dense multiple of 128 (linear_pos has
    # no bias, so zero-padded positions stay zero and never enter the rel-shift window)
    pp = pe.shape[0]                                     # 2T - 1
    p_pad = _round_up(pp, 128)
    pe_pad = jnp.pad(pe, ((0, p_pad - pp), (0, 0))).astype(_ACT_DTYPE)
    pk = dense_rows(pe_pad, p["pos_w"], jnp.zeros((d,), _PARAM_DTYPE))   # (P_pad, D)

    bu = p["pos_bias_u"].reshape(nhead, 1, dh)
    bv = p["pos_bias_v"].reshape(nhead, 1, dh)

    if use_fused_shift:
        # TODO(synk): for very long T (v7x 64 MiB VMEM), tile the key/position axis with an
        # online-softmax (flash) accumulator instead of full (T,T)/(T,P_pad) score tiles.
        shift = (p_pad - (t - 1)) % p_pad
        kern = functools.partial(_attn_kernel, nhead=nhead, dh=dh, t=t,
                                 scale=scale, shift=shift, fused_shift=True)
        arrays = (qkv, pk, bu, bv)
        in_specs = [
            pl.BlockSpec((1, t, 3 * d), lambda i: (i, 0, 0)),
            _const_spec((p_pad, d)),
            _const_spec((nhead, 1, dh)),
            _const_spec((nhead, 1, dh)),
        ]
    else:
        # Fallback: gather-free JAX-side rel-shift (pad + reshape trick), then the same fused
        # scores/softmax/AV kernel.  Only used if the strided in-kernel roll is unavailable.
        qv = (qkv[..., :d].reshape(bsz, t, nhead, dh).astype(jnp.float32)
              + p["pos_bias_v"].astype(jnp.float32)[None, None])
        pkf = pk[:pp].reshape(pp, nhead, dh).astype(jnp.float32)
        bd = jnp.einsum("bthd,phd->bhtp", qv, pkf)                 # (B,H,T,2T-1)
        bd = jnp.pad(bd, ((0, 0), (0, 0), (0, 0), (1, 0)))         # (B,H,T,2T)
        bd = bd.reshape(bsz, nhead, 2 * t, t)[:, :, 1:, :]         # (B,H,2T-1,T)
        bd_shift = bd.reshape(bsz, nhead, t, 2 * t - 1)[..., :t]   # (B,H,T,T)
        kern = functools.partial(_attn_kernel, nhead=nhead, dh=dh, t=t,
                                 scale=scale, shift=0, fused_shift=False)
        arrays = (qkv, bd_shift, bu)
        in_specs = [
            pl.BlockSpec((1, t, 3 * d), lambda i: (i, 0, 0)),
            pl.BlockSpec((1, nhead, t, t), lambda i: (i, 0, 0, 0)),
            _const_spec((nhead, 1, dh)),
        ]

    ctx = pl.pallas_call(
        kern,
        out_shape=jax.ShapeDtypeStruct((bsz, t, d), _ACT_DTYPE),   # lane-dense per-batch slab
        grid=(bsz,),
        in_specs=in_specs,
        out_specs=pl.BlockSpec((1, t, d), lambda i: (i, 0, 0)),
        compiler_params=_cparams(),
    )(*arrays)

    # out-projection + residual fused; heads already merged so no transpose is needed
    ctx2d = _pad_rows(ctx.reshape(n, d), n_pad)
    return dense_rows(ctx2d, p["out_w"], p["out_b"], residual=x2d_pad)


def conformer_layer(x2d_pad, p, pe, nhead, bsz, t, n, use_fused_shift):
    n_pad, d = x2d_pad.shape
    # x = x + 0.5 * FFN1(x)                    (single fused kernel)
    x2d_pad = ffn_residual(x2d_pad, p, "ffn1")
    # x = MHSA(LN(x), pe) + x                  (QKV/LN fused, attention fused, out-proj+res fused)
    x2d_pad = rel_pos_mha_xl(x2d_pad, pe, p, nhead, bsz, t, n, use_fused_shift)
    # x = x + ConvModule(x)                    (LN+pw1+GLU fused; dwconv+LN+Swish+pw2+res fused)
    h = ln_glu(x2d_pad, p["conv_ln1_g"], p["conv_ln1_b"], p["pw1_w"], p["pw1_b"])
    h3 = _unpad_rows(h, n).reshape(bsz, t, d)
    res3 = _unpad_rows(x2d_pad, n).reshape(bsz, t, d)
    y3 = depthwise_conv_tail(h3, res3, p)
    x2d_pad = _pad_rows(y3.reshape(n, d), n_pad)
    # x = LN2(x + 0.5 * FFN2(x))               (single fused kernel, norm2 folded in)
    x2d_pad = ffn_residual(x2d_pad, p, "ffn2", out_ln=(p["norm2_g"], p["norm2_b"]))
    return x2d_pad


def cus_encoder_forward(src, layers, final, nhead,
                        src_mask=None, src_key_padding_mask=None,
                        use_fused_shift=True):
    # TODO(synk): src_mask / src_key_padding_mask handling not implemented (module is called with None).
    assert src_mask is None and src_key_padding_mask is None
    bsz, t, d = src.shape
    n = bsz * t
    _, n_pad = _row_plan(n)
    pe = rel_pos_enc_xl(t, d)                             # RelPosEncXL
    # pad B*T once; all row-tiled kernels run on the padded slab with no per-call pad/slice
    x2d = _pad_rows(src.reshape(n, d).astype(_ACT_DTYPE), n_pad)
    for p in layers:                                      # ConformerEncoder layers
        x2d = conformer_layer(x2d, p, pe, nhead, bsz, t, n, use_fused_shift)
    x2d = layernorm(x2d, final["g"], final["b"], eps=1e-6, out_dtype=jnp.float32)
    return _unpad_rows(x2d, n).reshape(bsz, t, d)


# --------------------------------------------------------------------------
# Deterministic synthetic parameters (stored in bf16; f32 accumulation in-kernel)
# --------------------------------------------------------------------------
def init_params(key, num_layers, d_model, d_ffn, nhead, kernel_size=31):
    d, dh = d_model, d_model // nhead

    def dense(k, shape, fan_in):
        return (1.0 / math.sqrt(fan_in)) * jax.random.normal(k, shape, jnp.float32)

    layers = []
    for l in range(num_layers):
        ks = jax.random.split(jax.random.fold_in(key, l), 16)
        layers.append(dict(
            ffn1_ln_g=jnp.ones((1, d)), ffn1_ln_b=jnp.zeros((1, d)),
            ffn1_w1=dense(ks[0], (d, d_ffn), d), ffn1_b1=dense(ks[1], (d_ffn,), d),
            ffn1_w2=dense(ks[2], (d_ffn, d), d_ffn), ffn1_b2=dense(ks[3], (d,), d_ffn),
            norm1_g=jnp.ones((1, d)), norm1_b=jnp.zeros((1, d)),
            qkv_w=dense(ks[4], (d, 3 * d), d),              # [Wq | Wk | Wv], no bias in RelPosMHAXL
            pos_w=dense(ks[5], (d, d), d),                  # linear_pos (no bias)
            pos_bias_u=0.02 * jax.random.normal(ks[6], (nhead, dh), jnp.float32),
            pos_bias_v=0.02 * jax.random.normal(ks[7], (nhead, dh), jnp.float32),
            out_w=dense(ks[8], (d, d), d), out_b=jnp.zeros((d,)),
            conv_ln1_g=jnp.ones((1, d)), conv_ln1_b=jnp.zeros((1, d)),
            pw1_w=dense(ks[9], (d, 2 * d), d), pw1_b=dense(ks[10], (2 * d,), d),
            dw_w=dense(ks[11], (kernel_size, d), kernel_size), dw_b=jnp.zeros((d,)),
            conv_ln2_g=jnp.ones((1, d)), conv_ln2_b=jnp.zeros((1, d)),
            pw2_w=dense(ks[12], (d, d), d), pw2_b=jnp.zeros((d,)),
            ffn2_ln_g=jnp.ones((1, d)), ffn2_ln_b=jnp.zeros((1, d)),
            ffn2_w1=dense(ks[13], (d, d_ffn), d), ffn2_b1=jnp.zeros((d_ffn,)),
            ffn2_w2=dense(ks[14], (d_ffn, d), d_ffn), ffn2_b2=jnp.zeros((d,)),
            norm2_g=jnp.ones((1, d)), norm2_b=jnp.zeros((1, d)),
        ))
    final = dict(g=jnp.ones((1, d)), b=jnp.zeros((1, d)))  # encoder-final LN (eps 1e-6)
    cast = lambda t_: jax.tree_util.tree_map(lambda a: a.astype(_PARAM_DTYPE), t_)
    return cast(layers), cast(final)


if __name__ == "__main__":
    B, T, D, H, D_FFN, N_LAYERS = 2, 8, 32, 4, 64, 2

    key = jax.random.PRNGKey(0)
    k_src, k_par = jax.random.split(key)
    src = jax.random.normal(k_src, (B, T, D), jnp.float32)      # (batch, time, d_model)
    layers, final = init_params(k_par, N_LAYERS, D, D_FFN, H, kernel_size=31)

    _BUFFERED_CONST = _probe_buffered_const()                   # single-buffer constant specs
    use_fused_shift = _roll_skew_available()                    # in-kernel rel-shift if supported

    fwd = jax.jit(lambda s: cus_encoder_forward(
        s, layers, final, H, use_fused_shift=use_fused_shift))
    out = jax.block_until_ready(fwd(src))

    assert out.shape == (B, T, D)
    assert out.dtype == jnp.float32
    assert bool(jnp.all(jnp.isfinite(out)))
    print("KERNEL_OK")
</pallas_src>

<mosaic_0001>
module attributes {stable_mosaic.version = 11 : i64} {
  func.func @kern(%arg0: i32, %arg1: memref<8x128xf32, #tpu.memory_space<vmem>>, %arg2: memref<1x128xf32, #tpu.memory_space<vmem>>, %arg3: memref<8x128xf32, #tpu.memory_space<vmem>>) attributes {dimension_semantics = [#tpu.dimension_semantics<arbitrary>], iteration_bounds = array<i64: 1>, scalar_prefetch = 0 : i64, scratch_operands = 0 : i64, tpu.core_type = #tpu.core_type<tc>, window_params = [{pipeline_mode = #tpu.pipeline_mode<synchronous>, transform_indices = @transform_0, window_bounds = array<i64: 8, 128>}, {pipeline_mode = #tpu.pipeline_mode<synchronous>, transform_indices = @transform_1, window_bounds = array<i64: 1, 128>}, {pipeline_mode = #tpu.pipeline_mode<synchronous>, transform_indices = @transform_2, window_bounds = array<i64: 8, 128>}]} {
    %c0 = arith.constant 0 : index
    %c0_0 = arith.constant 0 : index
    %0 = vector.load %arg1[%c0, %c0_0] : memref<8x128xf32, #tpu.memory_space<vmem>>, vector<8x128xf32>
    %c0_1 = arith.constant 0 : index
    %c0_2 = arith.constant 0 : index
    %1 = vector.load %arg2[%c0_1, %c0_2] : memref<1x128xf32, #tpu.memory_space<vmem>>, vector<1x128xf32>
    %2 = vector.broadcast %1 : vector<1x128xf32> to vector<8x128xf32>
    %3 = arith.addf %0, %2 : vector<8x128xf32>
    %c0_3 = arith.constant 0 : index
    %c0_4 = arith.constant 0 : index
    %4 = vector.load %arg3[%c0_3, %c0_4] : memref<8x128xf32, #tpu.memory_space<vmem>>, vector<8x128xf32>
    tpu.vector_store %arg3[%c0_3, %c0_4], %3 {strides = array<i32>} : memref<8x128xf32, #tpu.memory_space<vmem>>, vector<8x128xf32>,
    return
  }
  func.func @transform_0(%arg0: i32) -> (i32, i32) {
    %c0_i32 = arith.constant 0 : i32
    %c0_i32_0 = arith.constant 0 : i32
    %c0_i32_1 = arith.constant 0 : i32
    return %c0_i32, %c0_i32_0 : i32, i32
  }
  func.func @transform_1(%arg0: i32) -> (i32, i32) {
    %c0_i32 = arith.constant 0 : i32
    %c0_i32_0 = arith.constant 0 : i32
    %c0_i32_1 = arith.constant 0 : i32
    return %c0_i32, %c0_i32_0 : i32, i32
  }
  func.func @transform_2(%arg0: i32) -> (i32, i32) {
    %c0_i32 = arith.constant 0 : i32
    %c0_i32_0 = arith.constant 0 : i32
    %c0_i32_1 = arith.constant 0 : i32
    return %c0_i32, %c0_i32_0 : i32, i32
  }
}

module attributes {stable_mosaic.version = 11 : i64} {
  func.func @kern(%arg0: memref<8x128xf32, #tpu.memory_space<vmem>>, %arg1: memref<8x128xf32, #tpu.memory_space<vmem>>) attributes {dimension_semantics = [], scalar_prefetch = 0 : i64, scratch_operands = 0 : i64, tpu.core_type = #tpu.core_type<tc>} {
    %c0 = arith.constant 0 : index
    %c0_0 = arith.constant 0 : index
    %0 = vector.load %arg0[%c0, %c0_0] : memref<8x128xf32, #tpu.memory_space<vmem>>, vector<8x128xf32>
    %c1_i32 = arith.constant 1 : i32
    %1 = tpu.dynamic_rotate %0 by %c1_i32 dim 1 {stride = 1 : si32, stride_dimension = 0 : si32} : vector<8x128xf32>, i32 -> vector<8x128xf32>
    %c0_1 = arith.constant 0 : index
    %c0_2 = arith.constant 0 : index
    %2 = vector.load %arg1[%c0_1, %c0_2] : memref<8x128xf32, #tpu.memory_space<vmem>>, vector<8x128xf32>
    tpu.vector_store %arg1[%c0_1, %c0_2], %1 {strides = array<i32>} : memref<8x128xf32, #tpu.memory_space<vmem>>, vector<8x128xf32>,
    return
  }
}

module attributes {stable_mosaic.version = 11 : i64} {
  func.func @_ffn_kernel(%arg0: i32, %arg1: memref<16x32xbf16, #tpu.memory_space<vmem>>, %arg2: memref<1x32xbf16, #tpu.memory_space<vmem>>, %arg3: memref<1x32xbf16, #tpu.memory_space<vmem>>, %arg4: memref<32x64xbf16, #tpu.memory_space<vmem>>, %arg5: memref<1x64xbf16, #tpu.memory_space<vmem>>, %arg6: memref<64x32xbf16, #tpu.memory_space<vmem>>, %arg7: memref<1x32xbf16, #tpu.memory_space<vmem>>, %arg8: memref<16x32xbf16, #tpu.memory_space<vmem>>) attributes {dimension_semantics = [#tpu.dimension_semantics<parallel>], iteration_bounds = array<i64: 1>, scalar_prefetch = 0 : i64, scratch_operands = 0 : i64, tpu.core_type = #tpu.core_type<tc>, window_params = [{transform_indices = @transform_0, window_bounds = array<i64: 16, 32>}, {pipeline_mode = #tpu.pipeline_mode<synchronous>, transform_indices = @transform_1, window_bounds = array<i64: 1, 32>}, {pipeline_mode = #tpu.pipeline_mode<synchronous>, transform_indices = @transform_2, window_bounds = array<i64: 1, 32>}, {pipeline_mode = #tpu.pipeline_mode<synchronous>, transform_indices = @transform_3, window_bounds = array<i64: 32, 64>}, {pipeline_mode = #tpu.pipeline_mode<synchronous>, transform_indices = @transform_4, window_bounds = array<i64: 1, 64>}, {pipeline_mode = #tpu.pipeline_mode<synchronous>, transform_indices = @transform_5, window_bounds = array<i64: 64, 32>}, {pipeline_mode = #tpu.pipeline_mode<synchronous>, transform_indices = @transform_6, window_bounds = array<i64: 1, 32>}, {transform_indices = @transform_7, window_bounds = array<i64: 16, 32>}]} {
    %c0 = arith.constant 0 : index
    %c0_0 = arith.constant 0 : index
    %0 = vector.load %arg1[%c0, %c0_0] : memref<16x32xbf16, #tpu.memory_space<vmem>>, vector<16x32xbf16>
    %1 = arith.extf %0 : vector<16x32xbf16> to vector<16x32xf32>
    %c0_1 = arith.constant 0 : index
    %c0_2 = arith.constant 0 : index
    %2 = vector.load %arg2[%c0_1, %c0_2] : memref<1x32xbf16, #tpu.memory_space<vmem>>, vector<1x32xbf16>
    %c0_3 = arith.constant 0 : index
    %c0_4 = arith.constant 0 : index
    %3 = vector.load %arg3[%c0_3, %c0_4] : memref<1x32xbf16, #tpu.memory_space<vmem>>, vector<1x32xbf16>
    %cst = arith.constant dense<0.000000e+00> : vector<16xf32>
    %4 = vector.multi_reduction <add>, %1, %cst [1] : vector<16x32xf32> to vector<16xf32>
    %5 = vector.shape_cast %4 : vector<16xf32> to vector<16x1xf32>
    %cst_5 = arith.constant 3.200000e+01 : f32
    %6 = vector.broadcast %cst_5 : f32 to vector<16x1xf32>
    %7 = arith.divf %5, %6 : vector<16x1xf32>
    %8 = vector.broadcast %7 : vector<16x1xf32> to vector<16x32xf32>
    %9 = arith.subf %1, %8 : vector<16x32xf32>
    %10 = arith.mulf %9, %9 : vector<16x32xf32>
    %cst_6 = arith.constant dense<0.000000e+00> : vector<16xf32>
    %11 = vector.multi_reduction <add>, %10, %cst_6 [1] : vector<16x32xf32> to vector<16xf32>
    %12 = vector.shape_cast %11 : vector<16xf32> to vector<16x1xf32>
    %cst_7 = arith.constant 3.200000e+01 : f32
    %13 = vector.broadcast %cst_7 : f32 to vector<16x1xf32>
    %14 = arith.divf %12, %13 : vector<16x1xf32>
    %cst_8 = arith.constant 9.99999974E-6 : f32
    %15 = vector.broadcast %cst_8 : f32 to vector<16x1xf32>
    %16 = arith.addf %14, %15 : vector<16x1xf32>
    %17 = math.rsqrt %16 : vector<16x1xf32>
    %18 = vector.broadcast %17 : vector<16x1xf32> to vector<16x32xf32>
    %19 = arith.mulf %9, %18 : vector<16x32xf32>
    %20 = arith.extf %2 : vector<1x32xbf16> to vector<1x32xf32>
    %21 = vector.broadcast %20 : vector<1x32xf32> to vector<16x32xf32>
    %22 = arith.mulf %19, %21 : vector<16x32xf32>
    %23 = arith.extf %3 : vector<1x32xbf16> to vector<1x32xf32>
    %24 = vector.broadcast %23 : vector<1x32xf32> to vector<16x32xf32>
    %25 = arith.addf %22, %24 : vector<16x32xf32>
    %c0_9 = arith.constant 0 : index
    %c0_10 = arith.constant 0 : index
    %26 = vector.load %arg4[%c0_9, %c0_10] : memref<32x64xbf16, #tpu.memory_space<vmem>>, vector<32x64xbf16>
    %27 = arith.truncf %25 : vector<16x32xf32> to vector<16x32xbf16>
    %cst_11 = arith.constant dense<0.000000e+00> : vector<16x64xf32>
    %28 = tpu.matmul %27, %26, %cst_11 {dimension_numbers = #tpu.dot_dimension_numbers<[1], [0], [0], [1], [0, 0, 1, 1], [], []>} : vector<16x32xbf16>, vector<32x64xbf16>, vector<16x64xf32> -> vector<16x64xf32>
    %c0_12 = arith.constant 0 : index
    %c0_13 = arith.constant 0 : index
    %29 = vector.load %arg5[%c0_12, %c0_13] : memref<1x64xbf16, #tpu.memory_space<vmem>>, vector<1x64xbf16>
    %30 = arith.extf %29 : vector<1x64xbf16> to vector<1x64xf32>
    %31 = vector.broadcast %30 : vector<1x64xf32> to vector<16x64xf32>
    %32 = arith.addf %28, %31 : vector<16x64xf32>
    %33 = arith.negf %32 : vector<16x64xf32>
    %34 = math.exp %33 : vector<16x64xf32>
    %cst_14 = arith.constant 1.000000e+00 : f32
    %35 = vector.broadcast %cst_14 : f32 to vector<16x64xf32>
    %36 = arith.addf %35, %34 : vector<16x64xf32>
    %37 = arith.divf %35, %36 : vector<16x64xf32>
    %38 = arith.mulf %32, %37 : vector<16x64xf32>
    %c0_15 = arith.constant 0 : index
    %c0_16 = arith.constant 0 : index
    %39 = vector.load %arg6[%c0_15, %c0_16] : memref<64x32xbf16, #tpu.memory_space<vmem>>, vector<64x32xbf16>
    %40 = arith.truncf %38 : vector<16x64xf32> to vector<16x64xbf16>
    %cst_17 = arith.constant dense<0.000000e+00> : vector<16x32xf32>
    %41 = tpu.matmul %40, %39, %cst_17 {dimension_numbers = #tpu.dot_dimension_numbers<[1], [0], [0], [1], [0, 0, 1, 1], [], []>} : vector<16x64xbf16>, vector<64x32xbf16>, vector<16x32xf32> -> vector<16x32xf32>
    %c0_18 = arith.constant 0 : index
    %c0_19 = arith.constant 0 : index
    %42 = vector.load %arg7[%c0_18, %c0_19] : memref<1x32xbf16, #tpu.memory_space<vmem>>, vector<1x32xbf16>
    %43 = arith.extf %42 : vector<1x32xbf16> to vector<1x32xf32>
    %44 = vector.broadcast %43 : vector<1x32xf32> to vector<16x32xf32>
    %45 = arith.addf %41, %44 : vector<16x32xf32>
    %cst_20 = arith.constant 5.000000e-01 : f32
    %46 = vector.broadcast %cst_20 : f32 to vector<16x32xf32>
    %47 = arith.mulf %46, %45 : vector<16x32xf32>
    %48 = arith.addf %1, %47 : vector<16x32xf32>
    %49 = arith.truncf %48 : vector<16x32xf32> to vector<16x32xbf16>
    %c0_21 = arith.constant 0 : index
    %c0_22 = arith.constant 0 : index
    %50 = vector.load %arg8[%c0_21, %c0_22] : memref<16x32xbf16, #tpu.memory_space<vmem>>, vector<16x32xbf16>
    tpu.vector_store %arg8[%c0_21, %c0_22], %49 {strides = array<i32>} : memref<16x32xbf16, #tpu.memory_space<vmem>>, vector<16x32xbf16>,
    return
  }
  func.func @transform_0(%arg0: i32) -> (i32, i32) {
    %c0_i32 = arith.constant 0 : i32
    %c0_i32_0 = arith.constant 0 : i32
    return %arg0, %c0_i32 : i32, i32
  }
  func.func @transform_1(%arg0: i32) -> (i32, i32) {
    %c0_i32 = arith.constant 0 : i32
    %c0_i32_0 = arith.constant 0 : i32
    %c0_i32_1 = arith.constant 0 : i32
    return %c0_i32, %c0_i32_0 : i32, i32
  }
  func.func @transform_2(%arg0: i32) -> (i32, i32) {
    %c0_i32 = arith.constant 0 : i32
    %c0_i32_0 = arith.constant 0 : i32
    %c0_i32_1 = arith.constant 0 : i32
    return %c0_i32, %c0_i32_0 : i32, i32
  }
  func.func @transform_3(%arg0: i32) -> (i32, i32) {
    %c0_i32 = arith.constant 0 : i32
    %c0_i32_0 = arith.constant 0 : i32
    %c0_i32_1 = arith.constant 0 : i32
    return %c0_i32, %c0_i32_0 : i32, i32
  }
  func.func @transform_4(%arg0: i32) -> (i32, i32) {
    %c0_i32 = arith.constant 0 : i32
    %c0_i32_0 = arith.constant 0 : i32
    %c0_i32_1 = arith.constant 0 : i32
    return %c0_i32, %c0_i32_0 : i32, i32
  }
  func.func @transform_5(%arg0: i32) -> (i32, i32) {
    %c0_i32 = arith.constant 0 : i32
    %c0_i32_0 = arith.constant 0 : i32
    %c0_i32_1 = arith.constant 0 : i32
    return %c0_i32, %c0_i32_0 : i32, i32
  }
  func.func @transform_6(%arg0: i32) -> (i32, i32) {
    %c0_i32 = arith.constant 0 : i32
    %c0_i32_0 = arith.constant 0 : i32
    %c0_i32_1 = arith.constant 0 : i32
    return %c0_i32, %c0_i32_0 : i32, i32
  }
  func.func @transform_7(%arg0: i32) -> (i32, i32) {
    %c0_i32 = arith.constant 0 : i32
    %c0_i32_0 = arith.constant 0 : i32
    return %arg0, %c0_i32 : i32, i32
  }
}

module attributes {stable_mosaic.version = 11 : i64} {
  func.func @_rows_kernel(%arg0: i32, %arg1: memref<16x32xbf16, #tpu.memory_space<vmem>>, %arg2: memref<1x32xbf16, #tpu.memory_space<vmem>>, %arg3: memref<1x32xbf16, #tpu.memory_space<vmem>>, %arg4: memref<32x96xbf16, #tpu.memory_space<vmem>>, %arg5: memref<1x96xbf16, #tpu.memory_space<vmem>>, %arg6: memref<16x96xbf16, #tpu.memory_space<vmem>>) attributes {dimension_semantics = [#tpu.dimension_semantics<parallel>], iteration_bounds = array<i64: 1>, scalar_prefetch = 0 : i64, scratch_operands = 0 : i64, tpu.core_type = #tpu.core_type<tc>, window_params = [{transform_indices = @transform_0, window_bounds = array<i64: 16, 32>}, {pipeline_mode = #tpu.pipeline_mode<synchronous>, transform_indices = @transform_1, window_bounds = array<i64: 1, 32>}, {pipeline_mode = #tpu.pipeline_mode<synchronous>, transform_indices = @transform_2, window_bounds = array<i64: 1, 32>}, {pipeline_mode = #tpu.pipeline_mode<synchronous>, transform_indices = @transform_3, window_bounds = array<i64: 32, 96>}, {pipeline_mode = #tpu.pipeline_mode<synchronous>, transform_indices = @transform_4, window_bounds = array<i64: 1, 96>}, {transform_indices = @transform_5, window_bounds = array<i64: 16, 96>}]} {
    %c0 = arith.constant 0 : index
    %c0_0 = arith.constant 0 : index
    %0 = vector.load %arg1[%c0, %c0_0] : memref<16x32xbf16, #tpu.memory_space<vmem>>, vector<16x32xbf16>
    %1 = arith.extf %0 : vector<16x32xbf16> to vector<16x32xf32>
    %c0_1 = arith.constant 0 : index
    %c0_2 = arith.constant 0 : index
    %2 = vector.load %arg2[%c0_1, %c0_2] : memref<1x32xbf16, #tpu.memory_space<vmem>>, vector<1x32xbf16>
    %c0_3 = arith.constant 0 : index
    %c0_4 = arith.constant 0 : index
    %3 = vector.load %arg3[%c0_3, %c0_4] : memref<1x32xbf16, #tpu.memory_space<vmem>>, vector<1x32xbf16>
    %cst = arith.constant dense<0.000000e+00> : vector<16xf32>
    %4 = vector.multi_reduction <add>, %1, %cst [1] : vector<16x32xf32> to vector<16xf32>
    %5 = vector.shape_cast %4 : vector<16xf32> to vector<16x1xf32>
    %cst_5 = arith.constant 3.200000e+01 : f32
    %6 = vector.broadcast %cst_5 : f32 to vector<16x1xf32>
    %7 = arith.divf %5, %6 : vector<16x1xf32>
    %8 = vector.broadcast %7 : vector<16x1xf32> to vector<16x32xf32>
    %9 = arith.subf %1, %8 : vector<16x32xf32>
    %10 = arith.mulf %9, %9 : vector<16x32xf32>
    %cst_6 = arith.constant dense<0.000000e+00> : vector<16xf32>
    %11 = vector.multi_reduction <add>, %10, %cst_6 [1] : vector<16x32xf32> to vector<16xf32>
    %12 = vector.shape_cast %11 : vector<16xf32> to vector<16x1xf32>
    %cst_7 = arith.constant 3.200000e+01 : f32
    %13 = vector.broadcast %cst_7 : f32 to vector<16x1xf32>
    %14 = arith.divf %12, %13 : vector<16x1xf32>
    %cst_8 = arith.constant 9.99999974E-6 : f32
    %15 = vector.broadcast %cst_8 : f32 to vector<16x1xf32>
    %16 = arith.addf %14, %15 : vector<16x1xf32>
    %17 = math.rsqrt %16 : vector<16x1xf32>
    %18 = vector.broadcast %17 : vector<16x1xf32> to vector<16x32xf32>
    %19 = arith.mulf %9, %18 : vector<16x32xf32>
    %20 = arith.extf %2 : vector<1x32xbf16> to vector<1x32xf32>
    %21 = vector.broadcast %20 : vector<1x32xf32> to vector<16x32xf32>
    %22 = arith.mulf %19, %21 : vector<16x32xf32>
    %23 = arith.extf %3 : vector<1x32xbf16> to vector<1x32xf32>
    %24 = vector.broadcast %23 : vector<1x32xf32> to vector<16x32xf32>
    %25 = arith.addf %22, %24 : vector<16x32xf32>
    %c0_9 = arith.constant 0 : index
    %c0_10 = arith.constant 0 : index
    %26 = vector.load %arg4[%c0_9, %c0_10] : memref<32x96xbf16, #tpu.memory_space<vmem>>, vector<32x96xbf16>
    %27 = arith.truncf %25 : vector<16x32xf32> to vector<16x32xbf16>
    %cst_11 = arith.constant dense<0.000000e+00> : vector<16x96xf32>
    %28 = tpu.matmul %27, %26, %cst_11 {dimension_numbers = #tpu.dot_dimension_numbers<[1], [0], [0], [1], [0, 0, 1, 1], [], []>} : vector<16x32xbf16>, vector<32x96xbf16>, vector<16x96xf32> -> vector<16x96xf32>
    %c0_12 = arith.constant 0 : index
    %c0_13 = arith.constant 0 : index
    %29 = vector.load %arg5[%c0_12, %c0_13] : memref<1x96xbf16, #tpu.memory_space<vmem>>, vector<1x96xbf16>
    %30 = arith.extf %29 : vector<1x96xbf16> to vector<1x96xf32>
    %31 = vector.broadcast %30 : vector<1x96xf32> to vector<16x96xf32>
    %32 = arith.addf %28, %31 : vector<16x96xf32>
    %33 = arith.truncf %32 : vector<16x96xf32> to vector<16x96xbf16>
    %c0_14 = arith.constant 0 : index
    %c0_15 = arith.constant 0 : index
    %34 = vector.load %arg6[%c0_14, %c0_15] : memref<16x96xbf16, #tpu.memory_space<vmem>>, vector<16x96xbf16>
    tpu.vector_store %arg6[%c0_14, %c0_15], %33 {strides = array<i32>} : memref<16x96xbf16, #tpu.memory_space<vmem>>, vector<16x96xbf16>,
    return
  }
  func.func @transform_0(%arg0: i32) -> (i32, i32) {
    %c0_i32 = arith.constant 0 : i32
    %c0_i32_0 = arith.constant 0 : i32
    return %arg0, %c0_i32 : i32, i32
  }
  func.func @transform_1(%arg0: i32) -> (i32, i32) {
    %c0_i32 = arith.constant 0 : i32
    %c0_i32_0 = arith.constant 0 : i32
    %c0_i32_1 = arith.constant 0 : i32
    return %c0_i32, %c0_i32_0 : i32, i32
  }
  func.func @transform_2(%arg0: i32) -> (i32, i32) {
    %c0_i32 = arith.constant 0 : i32
    %c0_i32_0 = arith.constant 0 : i32
    %c0_i32_1 = arith.constant 0 : i32
    return %c0_i32, %c0_i32_0 : i32, i32
  }
  func.func @transform_3(%arg0: i32) -> (i32, i32) {
    %c0_i32 = arith.constant 0 : i32
    %c0_i32_0 = arith.constant 0 : i32
    %c0_i32_1 = arith.constant 0 : i32
    return %c0_i32, %c0_i32_0 : i32, i32
  }
  func.func @transform_4(%arg0: i32) -> (i32, i32) {
    %c0_i32 = arith.constant 0 : i32
    %c0_i32_0 = arith.constant 0 : i32
    %c0_i32_1 = arith.constant 0 : i32
    return %c0_i32, %c0_i32_0 : i32, i32
  }
  func.func @transform_5(%arg0: i32) -> (i32, i32) {
    %c0_i32 = arith.constant 0 : i32
    %c0_i32_0 = arith.constant 0 : i32
    return %arg0, %c0_i32 : i32, i32
  }
}

module attributes {stable_mosaic.version = 11 : i64} {
  func.func @_rows_kernel(%arg0: i32, %arg1: memref<128x32xbf16, #tpu.memory_space<vmem>>, %arg2: memref<32x32xbf16, #tpu.memory_space<vmem>>, %arg3: memref<1x32xbf16, #tpu.memory_space<vmem>>, %arg4: memref<128x32xbf16, #tpu.memory_space<vmem>>) attributes {dimension_semantics = [#tpu.dimension_semantics<parallel>], iteration_bounds = array<i64: 1>, scalar_prefetch = 0 : i64, scratch_operands = 0 : i64, tpu.core_type = #tpu.core_type<tc>, window_params = [{transform_indices = @transform_0, window_bounds = array<i64: 128, 32>}, {pipeline_mode = #tpu.pipeline_mode<synchronous>, transform_indices = @transform_1, window_bounds = array<i64: 32, 32>}, {pipeline_mode = #tpu.pipeline_mode<synchronous>, transform_indices = @transform_2, window_bounds = array<i64: 1, 32>}, {transform_indices = @transform_3, window_bounds = array<i64: 128, 32>}]} {
    %c0 = arith.constant 0 : index
    %c0_0 = arith.constant 0 : index
    %0 = vector.load %arg1[%c0, %c0_0] : memref<128x32xbf16, #tpu.memory_space<vmem>>, vector<128x32xbf16>
    %1 = arith.extf %0 : vector<128x32xbf16> to vector<128x32xf32>
    %c0_1 = arith.constant 0 : index
    %c0_2 = arith.constant 0 : index
    %2 = vector.load %arg2[%c0_1, %c0_2] : memref<32x32xbf16, #tpu.memory_space<vmem>>, vector<32x32xbf16>
    %3 = arith.truncf %1 : vector<128x32xf32> to vector<128x32xbf16>
    %cst = arith.constant dense<0.000000e+00> : vector<128x32xf32>
    %4 = tpu.matmul %3, %2, %cst {dimension_numbers = #tpu.dot_dimension_numbers<[1], [0], [0], [1], [0, 0, 1, 1], [], []>} : vector<128x32xbf16>, vector<32x32xbf16>, vector<128x32xf32> -> vector<128x32xf32>
    %c0_3 = arith.constant 0 : index
    %c0_4 = arith.constant 0 : index
    %5 = vector.load %arg3[%c0_3, %c0_4] : memref<1x32xbf16, #tpu.memory_space<vmem>>, vector<1x32xbf16>
    %6 = arith.extf %5 : vector<1x32xbf16> to vector<1x32xf32>
    %7 = vector.broadcast %6 : vector<1x32xf32> to vector<128x32xf32>
    %8 = arith.addf %4, %7 : vector<128x32xf32>
    %9 = arith.truncf %8 : vector<128x32xf32> to vector<128x32xbf16>
    %c0_5 = arith.constant 0 : index
    %c0_6 = arith.constant 0 : index
    %10 = vector.load %arg4[%c0_5, %c0_6] : memref<128x32xbf16, #tpu.memory_space<vmem>>, vector<128x32xbf16>
    tpu.vector_store %arg4[%c0_5, %c0_6], %9 {strides = array<i32>} : memref<128x32xbf16, #tpu.memory_space<vmem>>, vector<128x32xbf16>,
    return
  }
  func.func @transform_0(%arg0: i32) -> (i32, i32) {
    %c0_i32 = arith.constant 0 : i32
    %c0_i32_0 = arith.constant 0 : i32
    return %arg0, %c0_i32 : i32, i32
  }
  func.func @transform_1(%arg0: i32) -> (i32, i32) {
    %c0_i32 = arith.constant 0 : i32
    %c0_i32_0 = arith.constant 0 : i32
    %c0_i32_1 = arith.constant 0 : i32
    return %c0_i32, %c0_i32_0 : i32, i32
  }
  func.func @transform_2(%arg0: i32) -> (i32, i32) {
    %c0_i32 = arith.constant 0 : i32
    %c0_i32_0 = arith.constant 0 : i32
    %c0_i32_1 = arith.constant 0 : i32
    return %c0_i32, %c0_i32_0 : i32, i32
  }
  func.func @transform_3(%arg0: i32) -> (i32, i32) {
    %c0_i32 = arith.constant 0 : i32
    %c0_i32_0 = arith.constant 0 : i32
    return %arg0, %c0_i32 : i32, i32
  }
}

module attributes {stable_mosaic.version = 11 : i64} {
  func.func @_attn_kernel(%arg0: i32, %arg1: memref<1x8x96xbf16, #tpu.memory_space<vmem>>, %arg2: memref<1x4x8x8xf32, #tpu.memory_space<vmem>>, %arg3: memref<4x1x8xbf16, #tpu.memory_space<vmem>>, %arg4: memref<1x8x32xbf16, #tpu.memory_space<vmem>>) attributes {dimension_semantics = [#tpu.dimension_semantics<parallel>], iteration_bounds = array<i64: 2>, scalar_prefetch = 0 : i64, scratch_operands = 0 : i64, tpu.core_type = #tpu.core_type<tc>, window_params = [{transform_indices = @transform_0, window_bounds = array<i64: 1, 8, 96>}, {transform_indices = @transform_1, window_bounds = array<i64: 1, 4, 8, 8>}, {pipeline_mode = #tpu.pipeline_mode<synchronous>, transform_indices = @transform_2, window_bounds = array<i64: 4, 1, 8>}, {transform_indices = @transform_3, window_bounds = array<i64: 1, 8, 32>}]} {
    %c0 = arith.constant 0 : index
    %c0_0 = arith.constant 0 : index
    %c0_1 = arith.constant 0 : index
    %0 = vector.load %arg1[%c0, %c0_0, %c0_1] : memref<1x8x96xbf16, #tpu.memory_space<vmem>>, vector<1x8x96xbf16>
    %1 = vector.shape_cast %0 : vector<1x8x96xbf16> to vector<8x96xbf16>
    %2 = vector.extract_strided_slice %1 {offsets = [0, 0], sizes = [8, 8], strides = [1, 1]} : vector<8x96xbf16> to vector<8x8xbf16>
    %3 = vector.extract_strided_slice %1 {offsets = [0, 32], sizes = [8, 8], strides = [1, 1]} : vector<8x96xbf16> to vector<8x8xbf16>
    %4 = vector.extract_strided_slice %1 {offsets = [0, 64], sizes = [8, 8], strides = [1, 1]} : vector<8x96xbf16> to vector<8x8xbf16>
    %5 = arith.extf %2 : vector<8x8xbf16> to vector<8x8xf32>
    %c0_2 = arith.constant 0 : index
    %c0_3 = arith.constant 0 : index
    %c0_4 = arith.constant 0 : index
    %6 = vector.load %arg3[%c0_2, %c0_3, %c0_4] : memref<4x1x8xbf16, #tpu.memory_space<vmem>>, vector<1x1x8xbf16>
    %7 = vector.shape_cast %6 : vector<1x1x8xbf16> to vector<1x8xbf16>
    %8 = arith.extf %7 : vector<1x8xbf16> to vector<1x8xf32>
    %9 = vector.broadcast %8 : vector<1x8xf32> to vector<8x8xf32>
    %10 = arith.addf %5, %9 : vector<8x8xf32>
    %11 = arith.truncf %10 : vector<8x8xf32> to vector<8x8xbf16>
    %cst = arith.constant dense<0.000000e+00> : vector<8x8xf32>
    %12 = tpu.matmul %11, %3, %cst {dimension_numbers = #tpu.dot_dimension_numbers<[1], [1], [0], [0], [0, 0, 1, 0], [], []>} : vector<8x8xbf16>, vector<8x8xbf16>, vector<8x8xf32> -> vector<8x8xf32>
    %c0_5 = arith.constant 0 : index
    %c0_6 = arith.constant 0 : index
    %c0_7 = arith.constant 0 : index
    %c0_8 = arith.constant 0 : index
    %13 = vector.load %arg2[%c0_5, %c0_6, %c0_7, %c0_8] : memref<1x4x8x8xf32, #tpu.memory_space<vmem>>, vector<1x1x8x8xf32>
    %14 = vector.shape_cast %13 : vector<1x1x8x8xf32> to vector<8x8xf32>
    %15 = arith.addf %12, %14 : vector<8x8xf32>
    %cst_9 = arith.constant 0.353553385 : f32
    %16 = vector.broadcast %cst_9 : f32 to vector<8x8xf32>
    %17 = arith.mulf %15, %16 : vector<8x8xf32>
    %cst_10 = arith.constant dense<0xFF800000> : vector<8xf32>
    %18 = vector.multi_reduction <maximumf>, %17, %cst_10 [1] : vector<8x8xf32> to vector<8xf32>
    %19 = vector.shape_cast %18 : vector<8xf32> to vector<8x1xf32>
    %20 = vector.broadcast %19 : vector<8x1xf32> to vector<8x8xf32>
    %21 = arith.subf %17, %20 : vector<8x8xf32>
    %22 = math.exp %21 : vector<8x8xf32>
    %cst_11 = arith.constant dense<0.000000e+00> : vector<8xf32>
    %23 = vector.multi_reduction <add>, %22, %cst_11 [1] : vector<8x8xf32> to vector<8xf32>
    %24 = vector.shape_cast %23 : vector<8xf32> to vector<8x1xf32>
    %25 = tpu.reciprocal %24 {approx = true} : vector<8x1xf32> -> vector<8x1xf32>
    %26 = vector.broadcast %25 : vector<8x1xf32> to vector<8x8xf32>
    %27 = arith.mulf %22, %26 : vector<8x8xf32>
    %28 = arith.truncf %27 : vector<8x8xf32> to vector<8x8xbf16>
    %cst_12 = arith.constant dense<0.000000e+00> : vector<8x8xf32>
    %29 = tpu.matmul %28, %4, %cst_12 {dimension_numbers = #tpu.dot_dimension_numbers<[1], [0], [0], [1], [0, 0, 1, 1], [], []>} : vector<8x8xbf16>, vector<8x8xbf16>, vector<8x8xf32> -> vector<8x8xf32>
    %30 = vector.extract_strided_slice %1 {offsets = [0, 8], sizes = [8, 8], strides = [1, 1]} : vector<8x96xbf16> to vector<8x8xbf16>
    %31 = vector.extract_strided_slice %1 {offsets = [0, 40], sizes = [8, 8], strides = [1, 1]} : vector<8x96xbf16> to vector<8x8xbf16>
    %32 = vector.extract_strided_slice %1 {offsets = [0, 72], sizes = [8, 8], strides = [1, 1]} : vector<8x96xbf16> to vector<8x8xbf16>
    %33 = arith.extf %30 : vector<8x8xbf16> to vector<8x8xf32>
    %c1 = arith.constant 1 : index
    %c0_13 = arith.constant 0 : index
    %c0_14 = arith.constant 0 : index
    %34 = vector.load %arg3[%c1, %c0_13, %c0_14] : memref<4x1x8xbf16, #tpu.memory_space<vmem>>, vector<1x1x8xbf16>
    %35 = vector.shape_cast %34 : vector<1x1x8xbf16> to vector<1x8xbf16>
    %36 = arith.extf %35 : vector<1x8xbf16> to vector<1x8xf32>
    %37 = vector.broadcast %36 : vector<1x8xf32> to vector<8x8xf32>
    %38 = arith.addf %33, %37 : vector<8x8xf32>
    %39 = arith.truncf %38 : vector<8x8xf32> to vector<8x8xbf16>
    %cst_15 = arith.constant dense<0.000000e+00> : vector<8x8xf32>
    %40 = tpu.matmul %39, %31, %cst_15 {dimension_numbers = #tpu.dot_dimension_numbers<[1], [1], [0], [0], [0, 0, 1, 0], [], []>} : vector<8x8xbf16>, vector<8x8xbf16>, vector<8x8xf32> -> vector<8x8xf32>
    %c0_16 = arith.constant 0 : index
    %c1_17 = arith.constant 1 : index
    %c0_18 = arith.constant 0 : index
    %c0_19 = arith.constant 0 : index
    %41 = vector.load %arg2[%c0_16, %c1_17, %c0_18, %c0_19] : memref<1x4x8x8xf32, #tpu.memory_space<vmem>>, vector<1x1x8x8xf32>
    %42 = vector.shape_cast %41 : vector<1x1x8x8xf32> to vector<8x8xf32>
    %43 = arith.addf %40, %42 : vector<8x8xf32>
    %cst_20 = arith.constant 0.353553385 : f32
    %44 = vector.broadcast %cst_20 : f32 to vector<8x8xf32>
    %45 = arith.mulf %43, %44 : vector<8x8xf32>
    %cst_21 = arith.constant dense<0xFF800000> : vector<8xf32>
    %46 = vector.multi_reduction <maximumf>, %45, %cst_21 [1] : vector<8x8xf32> to vector<8xf32>
    %47 = vector.shape_cast %46 : vector<8xf32> to vector<8x1xf32>
    %48 = vector.broadcast %47 : vector<8x1xf32> to vector<8x8xf32>
    %49 = arith.subf %45, %48 : vector<8x8xf32>
    %50 = math.exp %49 : vector<8x8xf32>
    %cst_22 = arith.constant dense<0.000000e+00> : vector<8xf32>
    %51 = vector.multi_reduction <add>, %50, %cst_22 [1] : vector<8x8xf32> to vector<8xf32>
    %52 = vector.shape_cast %51 : vector<8xf32> to vector<8x1xf32>
    %53 = tpu.reciprocal %52 {approx = true} : vector<8x1xf32> -> vector<8x1xf32>
    %54 = vector.broadcast %53 : vector<8x1xf32> to vector<8x8xf32>
    %55 = arith.mulf %50, %54 : vector<8x8xf32>
    %56 = arith.truncf %55 : vector<8x8xf32> to vector<8x8xbf16>
    %cst_23 = arith.constant dense<0.000000e+00> : vector<8x8xf32>
    %57 = tpu.matmul %56, %32, %cst_23 {dimension_numbers = #tpu.dot_dimension_numbers<[1], [0], [0], [1], [0, 0, 1, 1], [], []>} : vector<8x8xbf16>, vector<8x8xbf16>, vector<8x8xf32> -> vector<8x8xf32>
    %58 = vector.extract_strided_slice %1 {offsets = [0, 16], sizes = [8, 8], strides = [1, 1]} : vector<8x96xbf16> to vector<8x8xbf16>
    %59 = vector.extract_strided_slice %1 {offsets = [0, 48], sizes = [8, 8], strides = [1, 1]} : vector<8x96xbf16> to vector<8x8xbf16>
    %60 = vector.extract_strided_slice %1 {offsets = [0, 80], sizes = [8, 8], strides = [1, 1]} : vector<8x96xbf16> to vector<8x8xbf16>
    %61 = arith.extf %58 : vector<8x8xbf16> to vector<8x8xf32>
    %c2 = arith.constant 2 : index
    %c0_24 = arith.constant 0 : index
    %c0_25 = arith.constant 0 : index
    %62 = vector.load %arg3[%c2, %c0_24, %c0_25] : memref<4x1x8xbf16, #tpu.memory_space<vmem>>, vector<1x1x8xbf16>
    %63 = vector.shape_cast %62 : vector<1x1x8xbf16> to vector<1x8xbf16>
    %64 = arith.extf %63 : vector<1x8xbf16> to vector<1x8xf32>
    %65 = vector.broadcast %64 : vector<1x8xf32> to vector<8x8xf32>
    %66 = arith.addf %61, %65 : vector<8x8xf32>
    %67 = arith.truncf %66 : vector<8x8xf32> to vector<8x8xbf16>
    %cst_26 = arith.constant dense<0.000000e+00> : vector<8x8xf32>
    %68 = tpu.matmul %67, %59, %cst_26 {dimension_numbers = #tpu.dot_dimension_numbers<[1], [1], [0], [0], [0, 0, 1, 0], [], []>} : vector<8x8xbf16>, vector<8x8xbf16>, vector<8x8xf32> -> vector<8x8xf32>
    %c0_27 = arith.constant 0 : index
    %c2_28 = arith.constant 2 : index
    %c0_29 = arith.constant 0 : index
    %c0_30 = arith.constant 0 : index
    %69 = vector.load %arg2[%c0_27, %c2_28, %c0_29, %c0_30] : memref<1x4x8x8xf32, #tpu.memory_space<vmem>>, vector<1x1x8x8xf32>
    %70 = vector.shape_cast %69 : vector<1x1x8x8xf32> to vector<8x8xf32>
    %71 = arith.addf %68, %70 : vector<8x8xf32>
    %cst_31 = arith.constant 0.353553385 : f32
    %72 = vector.broadcast %cst_31 : f32 to vector<8x8xf32>
    %73 = arith.mulf %71, %72 : vector<8x8xf32>
    %cst_32 = arith.constant dense<0xFF800000> : vector<8xf32>
    %74 = vector.multi_reduction <maximumf>, %73, %cst_32 [1] : vector<8x8xf32> to vector<8xf32>
    %75 = vector.shape_cast %74 : vector<8xf32> to vector<8x1xf32>
    %76 = vector.broadcast %75 : vector<8x1xf32> to vector<8x8xf32>
    %77 = arith.subf %73, %76 : vector<8x8xf32>
    %78 = math.exp %77 : vector<8x8xf32>
    %cst_33 = arith.constant dense<0.000000e+00> : vector<8xf32>
    %79 = vector.multi_reduction <add>, %78, %cst_33 [1] : vector<8x8xf32> to vector<8xf32>
    %80 = vector.shape_cast %79 : vector<8xf32> to vector<8x1xf32>
    %81 = tpu.reciprocal %80 {approx = true} : vector<8x1xf32> -> vector<8x1xf32>
    %82 = vector.broadcast %81 : vector<8x1xf32> to vector<8x8xf32>
    %83 = arith.mulf %78, %82 : vector<8x8xf32>
    %84 = arith.truncf %83 : vector<8x8xf32> to vector<8x8xbf16>
    %cst_34 = arith.constant dense<0.000000e+00> : vector<8x8xf32>
    %85 = tpu.matmul %84, %60, %cst_34 {dimension_numbers = #tpu.dot_dimension_numbers<[1], [0], [0], [1], [0, 0, 1, 1], [], []>} : vector<8x8xbf16>, vector<8x8xbf16>, vector<8x8xf32> -> vector<8x8xf32>
    %86 = vector.extract_strided_slice %1 {offsets = [0, 24], sizes = [8, 8], strides = [1, 1]} : vector<8x96xbf16> to vector<8x8xbf16>
    %87 = vector.extract_strided_slice %1 {offsets = [0, 56], sizes = [8, 8], strides = [1, 1]} : vector<8x96xbf16> to vector<8x8xbf16>
    %88 = vector.extract_strided_slice %1 {offsets = [0, 88], sizes = [8, 8], strides = [1, 1]} : vector<8x96xbf16> to vector<8x8xbf16>
    %89 = arith.extf %86 : vector<8x8xbf16> to vector<8x8xf32>
    %c3 = arith.constant 3 : index
    %c0_35 = arith.constant 0 : index
    %c0_36 = arith.constant 0 : index
    %90 = vector.load %arg3[%c3, %c0_35, %c0_36] : memref<4x1x8xbf16, #tpu.memory_space<vmem>>, vector<1x1x8xbf16>
    %91 = vector.shape_cast %90 : vector<1x1x8xbf16> to vector<1x8xbf16>
    %92 = arith.extf %91 : vector<1x8xbf16> to vector<1x8xf32>
    %93 = vector.broadcast %92 : vector<1x8xf32> to vector<8x8xf32>
    %94 = arith.addf %89, %93 : vector<8x8xf32>
    %95 = arith.truncf %94 : vector<8x8xf32> to vector<8x8xbf16>
    %cst_37 = arith.constant dense<0.000000e+00> : vector<8x8xf32>
    %96 = tpu.matmul %95, %87, %cst_37 {dimension_numbers = #tpu.dot_dimension_numbers<[1], [1], [0], [0], [0, 0, 1, 0], [], []>} : vector<8x8xbf16>, vector<8x8xbf16>, vector<8x8xf32> -> vector<8x8xf32>
    %c0_38 = arith.constant 0 : index
    %c3_39 = arith.constant 3 : index
    %c0_40 = arith.constant 0 : index
    %c0_41 = arith.constant 0 : index
    %97 = vector.load %arg2[%c0_38, %c3_39, %c0_40, %c0_41] : memref<1x4x8x8xf32, #tpu.memory_space<vmem>>, vector<1x1x8x8xf32>
    %98 = vector.shape_cast %97 : vector<1x1x8x8xf32> to vector<8x8xf32>
    %99 = arith.addf %96, %98 : vector<8x8xf32>
    %cst_42 = arith.constant 0.353553385 : f32
    %100 = vector.broadcast %cst_42 : f32 to vector<8x8xf32>
    %101 = arith.mulf %99, %100 : vector<8x8xf32>
    %cst_43 = arith.constant dense<0xFF800000> : vector<8xf32>
    %102 = vector.multi_reduction <maximumf>, %101, %cst_43 [1] : vector<8x8xf32> to vector<8xf32>
    %103 = vector.shape_cast %102 : vector<8xf32> to vector<8x1xf32>
    %104 = vector.broadcast %103 : vector<8x1xf32> to vector<8x8xf32>
    %105 = arith.subf %101, %104 : vector<8x8xf32>
    %106 = math.exp %105 : vector<8x8xf32>
    %cst_44 = arith.constant dense<0.000000e+00> : vector<8xf32>
    %107 = vector.multi_reduction <add>, %106, %cst_44 [1] : vector<8x8xf32> to vector<8xf32>
    %108 = vector.shape_cast %107 : vector<8xf32> to vector<8x1xf32>
    %109 = tpu.reciprocal %108 {approx = true} : vector<8x1xf32> -> vector<8x1xf32>
    %110 = vector.broadcast %109 : vector<8x1xf32> to vector<8x8xf32>
    %111 = arith.mulf %106, %110 : vector<8x8xf32>
    %112 = arith.truncf %111 : vector<8x8xf32> to vector<8x8xbf16>
    %cst_45 = arith.constant dense<0.000000e+00> : vector<8x8xf32>
    %113 = tpu.matmul %112, %88, %cst_45 {dimension_numbers = #tpu.dot_dimension_numbers<[1], [0], [0], [1], [0, 0, 1, 1], [], []>} : vector<8x8xbf16>, vector<8x8xbf16>, vector<8x8xf32> -> vector<8x8xf32>
    %114 = tpu.concatenate %29, %57, %85, %113 in 1 : vector<8x8xf32>, vector<8x8xf32>, vector<8x8xf32>, vector<8x8xf32> -> vector<8x32xf32>
    %115 = arith.truncf %114 : vector<8x32xf32> to vector<8x32xbf16>
    %c0_46 = arith.constant 0 : index
    %c0_47 = arith.constant 0 : index
    %c0_48 = arith.constant 0 : index
    %116 = vector.load %arg4[%c0_46, %c0_47, %c0_48] : memref<1x8x32xbf16, #tpu.memory_space<vmem>>, vector<1x8x32xbf16>
    %117 = vector.shape_cast %116 : vector<1x8x32xbf16> to vector<8x32xbf16>
    %118 = vector.shape_cast %115 : vector<8x32xbf16> to vector<1x8x32xbf16>
    tpu.vector_store %arg4[%c0_46, %c0_47, %c0_48], %118 {strides = array<i32>} : memref<1x8x32xbf16, #tpu.memory_space<vmem>>, vector<1x8x32xbf16>,
    return
  }
  func.func @transform_0(%arg0: i32) -> (i32, i32, i32) {
    %c0_i32 = arith.constant 0 : i32
    %c0_i32_0 = arith.constant 0 : i32
    %c0_i32_1 = arith.constant 0 : i32
    return %arg0, %c0_i32, %c0_i32_0 : i32, i32, i32
  }
  func.func @transform_1(%arg0: i32) -> (i32, i32, i32, i32) {
    %c0_i32 = arith.constant 0 : i32
    %c0_i32_0 = arith.constant 0 : i32
    %c0_i32_1 = arith.constant 0 : i32
    %c0_i32_2 = arith.constant 0 : i32
    return %arg0, %c0_i32, %c0_i32_0, %c0_i32_1 : i32, i32, i32, i32
  }
  func.func @transform_2(%arg0: i32) -> (i32, i32, i32) {
    %c0_i32 = arith.constant 0 : i32
    %c0_i32_0 = arith.constant 0 : i32
    %c0_i32_1 = arith.constant 0 : i32
    %c0_i32_2 = arith.constant 0 : i32
    return %c0_i32, %c0_i32_0, %c0_i32_1 : i32, i32, i32
  }
  func.func @transform_3(%arg0: i32) -> (i32, i32, i32) {
    %c0_i32 = arith.constant 0 : i32
    %c0_i32_0 = arith.constant 0 : i32
    %c0_i32_1 = arith.constant 0 : i32
    return %arg0, %c0_i32, %c0_i32_0 : i32, i32, i32
  }
}

module attributes {stable_mosaic.version = 11 : i64} {
  func.func @_rows_kernel(%arg0: i32, %arg1: memref<16x32xbf16, #tpu.memory_space<vmem>>, %arg2: memref<32x32xbf16, #tpu.memory_space<vmem>>, %arg3: memref<1x32xbf16, #tpu.memory_space<vmem>>, %arg4: memref<16x32xbf16, #tpu.memory_space<vmem>>, %arg5: memref<16x32xbf16, #tpu.memory_space<vmem>>) attributes {dimension_semantics = [#tpu.dimension_semantics<parallel>], iteration_bounds = array<i64: 1>, scalar_prefetch = 0 : i64, scratch_operands = 0 : i64, tpu.core_type = #tpu.core_type<tc>, window_params = [{transform_indices = @transform_0, window_bounds = array<i64: 16, 32>}, {pipeline_mode = #tpu.pipeline_mode<synchronous>, transform_indices = @transform_1, window_bounds = array<i64: 32, 32>}, {pipeline_mode = #tpu.pipeline_mode<synchronous>, transform_indices = @transform_2, window_bounds = array<i64: 1, 32>}, {transform_indices = @transform_3, window_bounds = array<i64: 16, 32>}, {transform_indices = @transform_4, window_bounds = array<i64: 16, 32>}]} {
    %c0 = arith.constant 0 : index
    %c0_0 = arith.constant 0 : index
    %0 = vector.load %arg1[%c0, %c0_0] : memref<16x32xbf16, #tpu.memory_space<vmem>>, vector<16x32xbf16>
    %1 = arith.extf %0 : vector<16x32xbf16> to vector<16x32xf32>
    %c0_1 = arith.constant 0 : index
    %c0_2 = arith.constant 0 : index
    %2 = vector.load %arg2[%c0_1, %c0_2] : memref<32x32xbf16, #tpu.memory_space<vmem>>, vector<32x32xbf16>
    %3 = arith.truncf %1 : vector<16x32xf32> to vector<16x32xbf16>
    %cst = arith.constant dense<0.000000e+00> : vector<16x32xf32>
    %4 = tpu.matmul %3, %2, %cst {dimension_numbers = #tpu.dot_dimension_numbers<[1], [0], [0], [1], [0, 0, 1, 1], [], []>} : vector<16x32xbf16>, vector<32x32xbf16>, vector<16x32xf32> -> vector<16x32xf32>
    %c0_3 = arith.constant 0 : index
    %c0_4 = arith.constant 0 : index
    %5 = vector.load %arg3[%c0_3, %c0_4] : memref<1x32xbf16, #tpu.memory_space<vmem>>, vector<1x32xbf16>
    %6 = arith.extf %5 : vector<1x32xbf16> to vector<1x32xf32>
    %7 = vector.broadcast %6 : vector<1x32xf32> to vector<16x32xf32>
    %8 = arith.addf %4, %7 : vector<16x32xf32>
    %c0_5 = arith.constant 0 : index
    %c0_6 = arith.constant 0 : index
    %9 = vector.load %arg4[%c0_5, %c0_6] : memref<16x32xbf16, #tpu.memory_space<vmem>>, vector<16x32xbf16>
    %10 = arith.extf %9 : vector<16x32xbf16> to vector<16x32xf32>
    %11 = arith.addf %8, %10 : vector<16x32xf32>
    %12 = arith.truncf %11 : vector<16x32xf32> to vector<16x32xbf16>
    %c0_7 = arith.constant 0 : index
    %c0_8 = arith.constant 0 : index
    %13 = vector.load %arg5[%c0_7, %c0_8] : memref<16x32xbf16, #tpu.memory_space<vmem>>, vector<16x32xbf16>
    tpu.vector_store %arg5[%c0_7, %c0_8], %12 {strides = array<i32>} : memref<16x32xbf16, #tpu.memory_space<vmem>>, vector<16x32xbf16>,
    return
  }
  func.func @transform_0(%arg0: i32) -> (i32, i32) {
    %c0_i32 = arith.constant 0 : i32
    %c0_i32_0 = arith.constant 0 : i32
    return %arg0, %c0_i32 : i32, i32
  }
  func.func @transform_1(%arg0: i32) -> (i32, i32) {
    %c0_i32 = arith.constant 0 : i32
    %c0_i32_0 = arith.constant 0 : i32
    %c0_i32_1 = arith.constant 0 : i32
    return %c0_i32, %c0_i32_0 : i32, i32
  }
  func.func @transform_2(%arg0: i32) -> (i32, i32) {
    %c0_i32 = arith.constant 0 : i32
    %c0_i32_0 = arith.constant 0 : i32
    %c0_i32_1 = arith.constant 0 : i32
    return %c0_i32, %c0_i32_0 : i32, i32
  }
  func.func @transform_3(%arg0: i32) -> (i32, i32) {
    %c0_i32 = arith.constant 0 : i32
    %c0_i32_0 = arith.constant 0 : i32
    return %arg0, %c0_i32 : i32, i32
  }
  func.func @transform_4(%arg0: i32) -> (i32, i32) {
    %c0_i32 = arith.constant 0 : i32
    %c0_i32_0 = arith.constant 0 : i32
    return %arg0, %c0_i32 : i32, i32
  }
}

module attributes {stable_mosaic.version = 11 : i64} {
  func.func @_dwconv_tail_kernel(%arg0: i32, %arg1: memref<1x38x32xbf16, #tpu.memory_space<vmem>>, %arg2: memref<1x8x32xbf16, #tpu.memory_space<vmem>>, %arg3: memref<31x32xbf16, #tpu.memory_space<vmem>>, %arg4: memref<1x32xbf16, #tpu.memory_space<vmem>>, %arg5: memref<1x32xbf16, #tpu.memory_space<vmem>>, %arg6: memref<1x32xbf16, #tpu.memory_space<vmem>>, %arg7: memref<32x32xbf16, #tpu.memory_space<vmem>>, %arg8: memref<1x32xbf16, #tpu.memory_space<vmem>>, %arg9: memref<1x8x32xbf16, #tpu.memory_space<vmem>>) attributes {dimension_semantics = [#tpu.dimension_semantics<parallel>], iteration_bounds = array<i64: 2>, scalar_prefetch = 0 : i64, scratch_operands = 0 : i64, tpu.core_type = #tpu.core_type<tc>, window_params = [{transform_indices = @transform_0, window_bounds = array<i64: 1, 38, 32>}, {transform_indices = @transform_1, window_bounds = array<i64: 1, 8, 32>}, {pipeline_mode = #tpu.pipeline_mode<synchronous>, transform_indices = @transform_2, window_bounds = array<i64: 31, 32>}, {pipeline_mode = #tpu.pipeline_mode<synchronous>, transform_indices = @transform_3, window_bounds = array<i64: 1, 32>}, {pipeline_mode = #tpu.pipeline_mode<synchronous>, transform_indices = @transform_4, window_bounds = array<i64: 1, 32>}, {pipeline_mode = #tpu.pipeline_mode<synchronous>, transform_indices = @transform_5, window_bounds = array<i64: 1, 32>}, {pipeline_mode = #tpu.pipeline_mode<synchronous>, transform_indices = @transform_6, window_bounds = array<i64: 32, 32>}, {pipeline_mode = #tpu.pipeline_mode<synchronous>, transform_indices = @transform_7, window_bounds = array<i64: 1, 32>}, {transform_indices = @transform_8, window_bounds = array<i64: 1, 8, 32>}]} {
    %c0 = arith.constant 0 : index
    %c0_0 = arith.constant 0 : index
    %c0_1 = arith.constant 0 : index
    %0 = vector.load %arg1[%c0, %c0_0, %c0_1] : memref<1x38x32xbf16, #tpu.memory_space<vmem>>, vector<1x38x32xbf16>
    %1 = vector.shape_cast %0 : vector<1x38x32xbf16> to vector<38x32xbf16>
    %cst = arith.constant 0.000000e+00 : f32
    %2 = vector.broadcast %cst : f32 to vector<8x32xf32>
    %3 = vector.extract_strided_slice %1 {offsets = [0, 0], sizes = [8, 32], strides = [1, 1]} : vector<38x32xbf16> to vector<8x32xbf16>
    %4 = arith.extf %3 : vector<8x32xbf16> to vector<8x32xf32>
    %c0_2 = arith.constant 0 : index
    %c0_3 = arith.constant 0 : index
    %5 = vector.load %arg3[%c0_2, %c0_3] : memref<31x32xbf16, #tpu.memory_space<vmem>>, vector<1x32xbf16>
    %6 = arith.extf %5 : vector<1x32xbf16> to vector<1x32xf32>
    %7 = vector.broadcast %6 : vector<1x32xf32> to vector<8x32xf32>
    %8 = arith.mulf %4, %7 : vector<8x32xf32>
    %9 = arith.addf %2, %8 : vector<8x32xf32>
    %10 = vector.extract_strided_slice %1 {offsets = [1, 0], sizes = [8, 32], strides = [1, 1]} : vector<38x32xbf16> to vector<8x32xbf16>
    %11 = arith.extf %10 : vector<8x32xbf16> to vector<8x32xf32>
    %c1 = arith.constant 1 : index
    %c0_4 = arith.constant 0 : index
    %12 = vector.load %arg3[%c1, %c0_4] : memref<31x32xbf16, #tpu.memory_space<vmem>>, vector<1x32xbf16>
    %13 = arith.extf %12 : vector<1x32xbf16> to vector<1x32xf32>
    %14 = vector.broadcast %13 : vector<1x32xf32> to vector<8x32xf32>
    %15 = arith.mulf %11, %14 : vector<8x32xf32>
    %16 = arith.addf %9, %15 : vector<8x32xf32>
    %17 = vector.extract_strided_slice %1 {offsets = [2, 0], sizes = [8, 32], strides = [1, 1]} : vector<38x32xbf16> to vector<8x32xbf16>
    %18 = arith.extf %17 : vector<8x32xbf16> to vector<8x32xf32>
    %c2 = arith.constant 2 : index
    %c0_5 = arith.constant 0 : index
    %19 = vector.load %arg3[%c2, %c0_5] : memref<31x32xbf16, #tpu.memory_space<vmem>>, vector<1x32xbf16>
    %20 = arith.extf %19 : vector<1x32xbf16> to vector<1x32xf32>
    %21 = vector.broadcast %20 : vector<1x32xf32> to vector<8x32xf32>
    %22 = arith.mulf %18, %21 : vector<8x32xf32>
    %23 = arith.addf %16, %22 : vector<8x32xf32>
    %24 = vector.extract_strided_slice %1 {offsets = [3, 0], sizes = [8, 32], strides = [1, 1]} : vector<38x32xbf16> to vector<8x32xbf16>
    %25 = arith.extf %24 : vector<8x32xbf16> to vector<8x32xf32>
    %c3 = arith.constant 3 : index
    %c0_6 = arith.constant 0 : index
    %26 = vector.load %arg3[%c3, %c0_6] : memref<31x32xbf16, #tpu.memory_space<vmem>>, vector<1x32xbf16>
    %27 = arith.extf %26 : vector<1x32xbf16> to vector<1x32xf32>
    %28 = vector.broadcast %27 : vector<1x32xf32> to vector<8x32xf32>
    %29 = arith.mulf %25, %28 : vector<8x32xf32>
    %30 = arith.addf %23, %29 : vector<8x32xf32>
    %31 = vector.extract_strided_slice %1 {offsets = [4, 0], sizes = [8, 32], strides = [1, 1]} : vector<38x32xbf16> to vector<8x32xbf16>
    %32 = arith.extf %31 : vector<8x32xbf16> to vector<8x32xf32>
    %c4 = arith.constant 4 : index
    %c0_7 = arith.constant 0 : index
    %33 = vector.load %arg3[%c4, %c0_7] : memref<31x32xbf16, #tpu.memory_space<vmem>>, vector<1x32xbf16>
    %34 = arith.extf %33 : vector<1x32xbf16> to vector<1x32xf32>
    %35 = vector.broadcast %34 : vector<1x32xf32> to vector<8x32xf32>
    %36 = arith.mulf %32, %35 : vector<8x32xf32>
    %37 = arith.addf %30, %36 : vector<8x32xf32>
    %38 = vector.extract_strided_slice %1 {offsets = [5, 0], sizes = [8, 32], strides = [1, 1]} : vector<38x32xbf16> to vector<8x32xbf16>
    %39 = arith.extf %38 : vector<8x32xbf16> to vector<8x32xf32>
    %c5 = arith.constant 5 : index
    %c0_8 = arith.constant 0 : index
    %40 = vector.load %arg3[%c5, %c0_8] : memref<31x32xbf16, #tpu.memory_space<vmem>>, vector<1x32xbf16>
    %41 = arith.extf %40 : vector<1x32xbf16> to vector<1x32xf32>
    %42 = vector.broadcast %41 : vector<1x32xf32> to vector<8x32xf32>
    %43 = arith.mulf %39, %42 : vector<8x32xf32>
    %44 = arith.addf %37, %43 : vector<8x32xf32>
    %45 = vector.extract_strided_slice %1 {offsets = [6, 0], sizes = [8, 32], strides = [1, 1]} : vector<38x32xbf16> to vector<8x32xbf16>
    %46 = arith.extf %45 : vector<8x32xbf16> to vector<8x32xf32>
    %c6 = arith.constant 6 : index
    %c0_9 = arith.constant 0 : index
    %47 = vector.load %arg3[%c6, %c0_9] : memref<31x32xbf16, #tpu.memory_space<vmem>>, vector<1x32xbf16>
    %48 = arith.extf %47 : vector<1x32xbf16> to vector<1x32xf32>
    %49 = vector.broadcast %48 : vector<1x32xf32> to vector<8x32xf32>
    %50 = arith.mulf %46, %49 : vector<8x32xf32>
    %51 = arith.addf %44, %50 : vector<8x32xf32>
    %52 = vector.extract_strided_slice %1 {offsets = [7, 0], sizes = [8, 32], strides = [1, 1]} : vector<38x32xbf16> to vector<8x32xbf16>
    %53 = arith.extf %52 : vector<8x32xbf16> to vector<8x32xf32>
    %c7 = arith.constant 7 : index
    %c0_10 = arith.constant 0 : index
    %54 = vector.load %arg3[%c7, %c0_10] : memref<31x32xbf16, #tpu.memory_space<vmem>>, vector<1x32xbf16>
    %55 = arith.extf %54 : vector<1x32xbf16> to vector<1x32xf32>
    %56 = vector.broadcast %55 : vector<1x32xf32> to vector<8x32xf32>
    %57 = arith.mulf %53, %56 : vector<8x32xf32>
    %58 = arith.addf %51, %57 : vector<8x32xf32>
    %59 = vector.extract_strided_slice %1 {offsets = [8, 0], sizes = [8, 32], strides = [1, 1]} : vector<38x32xbf16> to vector<8x32xbf16>
    %60 = arith.extf %59 : vector<8x32xbf16> to vector<8x32xf32>
    %c8 = arith.constant 8 : index
    %c0_11 = arith.constant 0 : index
    %61 = vector.load %arg3[%c8, %c0_11] : memref<31x32xbf16, #tpu.memory_space<vmem>>, vector<1x32xbf16>
    %62 = arith.extf %61 : vector<1x32xbf16> to vector<1x32xf32>
    %63 = vector.broadcast %62 : vector<1x32xf32> to vector<8x32xf32>
    %64 = arith.mulf %60, %63 : vector<8x32xf32>
    %65 = arith.addf %58, %64 : vector<8x32xf32>
    %66 = vector.extract_strided_slice %1 {offsets = [9, 0], sizes = [8, 32], strides = [1, 1]} : vector<38x32xbf16> to vector<8x32xbf16>
    %67 = arith.extf %66 : vector<8x32xbf16> to vector<8x32xf32>
    %c9 = arith.constant 9 : index
    %c0_12 = arith.constant 0 : index
    %68 = vector.load %arg3[%c9, %c0_12] : memref<31x32xbf16, #tpu.memory_space<vmem>>, vector<1x32xbf16>
    %69 = arith.extf %68 : vector<1x32xbf16> to vector<1x32xf32>
    %70 = vector.broadcast %69 : vector<1x32xf32> to vector<8x32xf32>
    %71 = arith.mulf %67, %70 : vector<8x32xf32>
    %72 = arith.addf %65, %71 : vector<8x32xf32>
    %73 = vector.extract_strided_slice %1 {offsets = [10, 0], sizes = [8, 32], strides = [1, 1]} : vector<38x32xbf16> to vector<8x32xbf16>
    %74 = arith.extf %73 : vector<8x32xbf16> to vector<8x32xf32>
    %c10 = arith.constant 10 : index
    %c0_13 = arith.constant 0 : index
    %75 = vector.load %arg3[%c10, %c0_13] : memref<31x32xbf16, #tpu.memory_space<vmem>>, vector<1x32xbf16>
    %76 = arith.extf %75 : vector<1x32xbf16> to vector<1x32xf32>
    %77 = vector.broadcast %76 : vector<1x32xf32> to vector<8x32xf32>
    %78 = arith.mulf %74, %77 : vector<8x32xf32>
    %79 = arith.addf %72, %78 : vector<8x32xf32>
    %80 = vector.extract_strided_slice %1 {offsets = [11, 0], sizes = [8, 32], strides = [1, 1]} : vector<38x32xbf16> to vector<8x32xbf16>
    %81 = arith.extf %80 : vector<8x32xbf16> to vector<8x32xf32>
    %c11 = arith.constant 11 : index
    %c0_14 = arith.constant 0 : index
    %82 = vector.load %arg3[%c11, %c0_14] : memref<31x32xbf16, #tpu.memory_space<vmem>>, vector<1x32xbf16>
    %83 = arith.extf %82 : vector<1x32xbf16> to vector<1x32xf32>
    %84 = vector.broadcast %83 : vector<1x32xf32> to vector<8x32xf32>
    %85 = arith.mulf %81, %84 : vector<8x32xf32>
    %86 = arith.addf %79, %85 : vector<8x32xf32>
    %87 = vector.extract_strided_slice %1 {offsets = [12, 0], sizes = [8, 32], strides = [1, 1]} : vector<38x32xbf16> to vector<8x32xbf16>
    %88 = arith.extf %87 : vector<8x32xbf16> to vector<8x32xf32>
    %c12 = arith.constant 12 : index
    %c0_15 = arith.constant 0 : index
    %89 = vector.load %arg3[%c12, %c0_15] : memref<31x32xbf16, #tpu.memory_space<vmem>>, vector<1x32xbf16>
    %90 = arith.extf %89 : vector<1x32xbf16> to vector<1x32xf32>
    %91 = vector.broadcast %90 : vector<1x32xf32> to vector<8x32xf32>
    %92 = arith.mulf %88, %91 : vector<8x32xf32>
    %93 = arith.addf %86, %92 : vector<8x32xf32>
    %94 = vector.extract_strided_slice %1 {offsets = [13, 0], sizes = [8, 32], strides = [1, 1]} : vector<38x32xbf16> to vector<8x32xbf16>
    %95 = arith.extf %94 : vector<8x32xbf16> to vector<8x32xf32>
    %c13 = arith.constant 13 : index
    %c0_16 = arith.constant 0 : index
    %96 = vector.load %arg3[%c13, %c0_16] : memref<31x32xbf16, #tpu.memory_space<vmem>>, vector<1x32xbf16>
    %97 = arith.extf %96 : vector<1x32xbf16> to vector<1x32xf32>
    %98 = vector.broadcast %97 : vector<1x32xf32> to vector<8x32xf32>
    %99 = arith.mulf %95, %98 : vector<8x32xf32>
    %100 = arith.addf %93, %99 : vector<8x32xf32>
    %101 = vector.extract_strided_slice %1 {offsets = [14, 0], sizes = [8, 32], strides = [1, 1]} : vector<38x32xbf16> to vector<8x32xbf16>
    %102 = arith.extf %101 : vector<8x32xbf16> to vector<8x32xf32>
    %c14 = arith.constant 14 : index
    %c0_17 = arith.constant 0 : index
    %103 = vector.load %arg3[%c14, %c0_17] : memref<31x32xbf16, #tpu.memory_space<vmem>>, vector<1x32xbf16>
    %104 = arith.extf %103 : vector<1x32xbf16> to vector<1x32xf32>
    %105 = vector.broadcast %104 : vector<1x32xf32> to vector<8x32xf32>
    %106 = arith.mulf %102, %105 : vector<8x32xf32>
    %107 = arith.addf %100, %106 : vector<8x32xf32>
    %108 = vector.extract_strided_slice %1 {offsets = [15, 0], sizes = [8, 32], strides = [1, 1]} : vector<38x32xbf16> to vector<8x32xbf16>
    %109 = arith.extf %108 : vector<8x32xbf16> to vector<8x32xf32>
    %c15 = arith.constant 15 : index
    %c0_18 = arith.constant 0 : index
    %110 = vector.load %arg3[%c15, %c0_18] : memref<31x32xbf16, #tpu.memory_space<vmem>>, vector<1x32xbf16>
    %111 = arith.extf %110 : vector<1x32xbf16> to vector<1x32xf32>
    %112 = vector.broadcast %111 : vector<1x32xf32> to vector<8x32xf32>
    %113 = arith.mulf %109, %112 : vector<8x32xf32>
    %114 = arith.addf %107, %113 : vector<8x32xf32>
    %115 = vector.extract_strided_slice %1 {offsets = [16, 0], sizes = [8, 32], strides = [1, 1]} : vector<38x32xbf16> to vector<8x32xbf16>
    %116 = arith.extf %115 : vector<8x32xbf16> to vector<8x32xf32>
    %c16 = arith.constant 16 : index
    %c0_19 = arith.constant 0 : index
    %117 = vector.load %arg3[%c16, %c0_19] : memref<31x32xbf16, #tpu.memory_space<vmem>>, vector<1x32xbf16>
    %118 = arith.extf %117 : vector<1x32xbf16> to vector<1x32xf32>
    %119 = vector.broadcast %118 : vector<1x32xf32> to vector<8x32xf32>
    %120 = arith.mulf %116, %119 : vector<8x32xf32>
    %121 = arith.addf %114, %120 : vector<8x32xf32>
    %122 = vector.extract_strided_slice %1 {offsets = [17, 0], sizes = [8, 32], strides = [1, 1]} : vector<38x32xbf16> to vector<8x32xbf16>
    %123 = arith.extf %122 : vector<8x32xbf16> to vector<8x32xf32>
    %c17 = arith.constant 17 : index
    %c0_20 = arith.constant 0 : index
    %124 = vector.load %arg3[%c17, %c0_20] : memref<31x32xbf16, #tpu.memory_space<vmem>>, vector<1x32xbf16>
    %125 = arith.extf %124 : vector<1x32xbf16> to vector<1x32xf32>
    %126 = vector.broadcast %125 : vector<1x32xf32> to vector<8x32xf32>
    %127 = arith.mulf %123, %126 : vector<8x32xf32>
    %128 = arith.addf %121, %127 : vector<8x32xf32>
    %129 = vector.extract_strided_slice %1 {offsets = [18, 0], sizes = [8, 32], strides = [1, 1]} : vector<38x32xbf16> to vector<8x32xbf16>
    %130 = arith.extf %129 : vector<8x32xbf16> to vector<8x32xf32>
    %c18 = arith.constant 18 : index
    %c0_21 = arith.constant 0 : index
    %131 = vector.load %arg3[%c18, %c0_21] : memref<31x32xbf16, #tpu.memory_space<vmem>>, vector<1x32xbf16>
    %132 = arith.extf %131 : vector<1x32xbf16> to vector<1x32xf32>
    %133 = vector.broadcast %132 : vector<1x32xf32> to vector<8x32xf32>
    %134 = arith.mulf %130, %133 : vector<8x32xf32>
    %135 = arith.addf %128, %134 : vector<8x32xf32>
    %136 = vector.extract_strided_slice %1 {offsets = [19, 0], sizes = [8, 32], strides = [1, 1]} : vector<38x32xbf16> to vector<8x32xbf16>
    %137 = arith.extf %136 : vector<8x32xbf16> to vector<8x32xf32>
    %c19 = arith.constant 19 : index
    %c0_22 = arith.constant 0 : index
    %138 = vector.load %arg3[%c19, %c0_22] : memref<31x32xbf16, #tpu.memory_space<vmem>>, vector<1x32xbf16>
    %139 = arith.extf %138 : vector<1x32xbf16> to vector<1x32xf32>
    %140 = vector.broadcast %139 : vector<1x32xf32> to vector<8x32xf32>
    %141 = arith.mulf %137, %140 : vector<8x32xf32>
    %142 = arith.addf %135, %141 : vector<8x32xf32>
    %143 = vector.extract_strided_slice %1 {offsets = [20, 0], sizes = [8, 32], strides = [1, 1]} : vector<38x32xbf16> to vector<8x32xbf16>
    %144 = arith.extf %143 : vector<8x32xbf16> to vector<8x32xf32>
    %c20 = arith.constant 20 : index
    %c0_23 = arith.constant 0 : index
    %145 = vector.load %arg3[%c20, %c0_23] : memref<31x32xbf16, #tpu.memory_space<vmem>>, vector<1x32xbf16>
    %146 = arith.extf %145 : vector<1x32xbf16> to vector<1x32xf32>
    %147 = vector.broadcast %146 : vector<1x32xf32> to vector<8x32xf32>
    %148 = arith.mulf %144, %147 : vector<8x32xf32>
    %149 = arith.addf %142, %148 : vector<8x32xf32>
    %150 = vector.extract_strided_slice %1 {offsets = [21, 0], sizes = [8, 32], strides = [1, 1]} : vector<38x32xbf16> to vector<8x32xbf16>
    %151 = arith.extf %150 : vector<8x32xbf16> to vector<8x32xf32>
    %c21 = arith.constant 21 : index
    %c0_24 = arith.constant 0 : index
    %152 = vector.load %arg3[%c21, %c0_24] : memref<31x32xbf16, #tpu.memory_space<vmem>>, vector<1x32xbf16>
    %153 = arith.extf %152 : vector<1x32xbf16> to vector<1x32xf32>
    %154 = vector.broadcast %153 : vector<1x32xf32> to vector<8x32xf32>
    %155 = arith.mulf %151, %154 : vector<8x32xf32>
    %156 = arith.addf %149, %155 : vector<8x32xf32>
    %157 = vector.extract_strided_slice %1 {offsets = [22, 0], sizes = [8, 32], strides = [1, 1]} : vector<38x32xbf16> to vector<8x32xbf16>
    %158 = arith.extf %157 : vector<8x32xbf16> to vector<8x32xf32>
    %c22 = arith.constant 22 : index
    %c0_25 = arith.constant 0 : index
    %159 = vector.load %arg3[%c22, %c0_25] : memref<31x32xbf16, #tpu.memory_space<vmem>>, vector<1x32xbf16>
    %160 = arith.extf %159 : vector<1x32xbf16> to vector<1x32xf32>
    %161 = vector.broadcast %160 : vector<1x32xf32> to vector<8x32xf32>
    %162 = arith.mulf %158, %161 : vector<8x32xf32>
    %163 = arith.addf %156, %162 : vector<8x32xf32>
    %164 = vector.extract_strided_slice %1 {offsets = [23, 0], sizes = [8, 32], strides = [1, 1]} : vector<38x32xbf16> to vector<8x32xbf16>
    %165 = arith.extf %164 : vector<8x32xbf16> to vector<8x32xf32>
    %c23 = arith.constant 23 : index
    %c0_26 = arith.constant 0 : index
    %166 = vector.load %arg3[%c23, %c0_26] : memref<31x32xbf16, #tpu.memory_space<vmem>>, vector<1x32xbf16>
    %167 = arith.extf %166 : vector<1x32xbf16> to vector<1x32xf32>
    %168 = vector.broadcast %167 : vector<1x32xf32> to vector<8x32xf32>
    %169 = arith.mulf %165, %168 : vector<8x32xf32>
    %170 = arith.addf %163, %169 : vector<8x32xf32>
    %171 = vector.extract_strided_slice %1 {offsets = [24, 0], sizes = [8, 32], strides = [1, 1]} : vector<38x32xbf16> to vector<8x32xbf16>
    %172 = arith.extf %171 : vector<8x32xbf16> to vector<8x32xf32>
    %c24 = arith.constant 24 : index
    %c0_27 = arith.constant 0 : index
    %173 = vector.load %arg3[%c24, %c0_27] : memref<31x32xbf16, #tpu.memory_space<vmem>>, vector<1x32xbf16>
    %174 = arith.extf %173 : vector<1x32xbf16> to vector<1x32xf32>
    %175 = vector.broadcast %174 : vector<1x32xf32> to vector<8x32xf32>
    %176 = arith.mulf %172, %175 : vector<8x32xf32>
    %177 = arith.addf %170, %176 : vector<8x32xf32>
    %178 = vector.extract_strided_slice %1 {offsets = [25, 0], sizes = [8, 32], strides = [1, 1]} : vector<38x32xbf16> to vector<8x32xbf16>
    %179 = arith.extf %178 : vector<8x32xbf16> to vector<8x32xf32>
    %c25 = arith.constant 25 : index
    %c0_28 = arith.constant 0 : index
    %180 = vector.load %arg3[%c25, %c0_28] : memref<31x32xbf16, #tpu.memory_space<vmem>>, vector<1x32xbf16>
    %181 = arith.extf %180 : vector<1x32xbf16> to vector<1x32xf32>
    %182 = vector.broadcast %181 : vector<1x32xf32> to vector<8x32xf32>
    %183 = arith.mulf %179, %182 : vector<8x32xf32>
    %184 = arith.addf %177, %183 : vector<8x32xf32>
    %185 = vector.extract_strided_slice %1 {offsets = [26, 0], sizes = [8, 32], strides = [1, 1]} : vector<38x32xbf16> to vector<8x32xbf16>
    %186 = arith.extf %185 : vector<8x32xbf16> to vector<8x32xf32>
    %c26 = arith.constant 26 : index
    %c0_29 = arith.constant 0 : index
    %187 = vector.load %arg3[%c26, %c0_29] : memref<31x32xbf16, #tpu.memory_space<vmem>>, vector<1x32xbf16>
    %188 = arith.extf %187 : vector<1x32xbf16> to vector<1x32xf32>
    %189 = vector.broadcast %188 : vector<1x32xf32> to vector<8x32xf32>
    %190 = arith.mulf %186, %189 : vector<8x32xf32>
    %191 = arith.addf %184, %190 : vector<8x32xf32>
    %192 = vector.extract_strided_slice %1 {offsets = [27, 0], sizes = [8, 32], strides = [1, 1]} : vector<38x32xbf16> to vector<8x32xbf16>
    %193 = arith.extf %192 : vector<8x32xbf16> to vector<8x32xf32>
    %c27 = arith.constant 27 : index
    %c0_30 = arith.constant 0 : index
    %194 = vector.load %arg3[%c27, %c0_30] : memref<31x32xbf16, #tpu.memory_space<vmem>>, vector<1x32xbf16>
    %195 = arith.extf %194 : vector<1x32xbf16> to vector<1x32xf32>
    %196 = vector.broadcast %195 : vector<1x32xf32> to vector<8x32xf32>
    %197 = arith.mulf %193, %196 : vector<8x32xf32>
    %198 = arith.addf %191, %197 : vector<8x32xf32>
    %199 = vector.extract_strided_slice %1 {offsets = [28, 0], sizes = [8, 32], strides = [1, 1]} : vector<38x32xbf16> to vector<8x32xbf16>
    %200 = arith.extf %199 : vector<8x32xbf16> to vector<8x32xf32>
    %c28 = arith.constant 28 : index
    %c0_31 = arith.constant 0 : index
    %201 = vector.load %arg3[%c28, %c0_31] : memref<31x32xbf16, #tpu.memory_space<vmem>>, vector<1x32xbf16>
    %202 = arith.extf %201 : vector<1x32xbf16> to vector<1x32xf32>
    %203 = vector.broadcast %202 : vector<1x32xf32> to vector<8x32xf32>
    %204 = arith.mulf %200, %203 : vector<8x32xf32>
    %205 = arith.addf %198, %204 : vector<8x32xf32>
    %206 = vector.extract_strided_slice %1 {offsets = [29, 0], sizes = [8, 32], strides = [1, 1]} : vector<38x32xbf16> to vector<8x32xbf16>
    %207 = arith.extf %206 : vector<8x32xbf16> to vector<8x32xf32>
    %c29 = arith.constant 29 : index
    %c0_32 = arith.constant 0 : index
    %208 = vector.load %arg3[%c29, %c0_32] : memref<31x32xbf16, #tpu.memory_space<vmem>>, vector<1x32xbf16>
    %209 = arith.extf %208 : vector<1x32xbf16> to vector<1x32xf32>
    %210 = vector.broadcast %209 : vector<1x32xf32> to vector<8x32xf32>
    %211 = arith.mulf %207, %210 : vector<8x32xf32>
    %212 = arith.addf %205, %211 : vector<8x32xf32>
    %213 = vector.extract_strided_slice %1 {offsets = [30, 0], sizes = [8, 32], strides = [1, 1]} : vector<38x32xbf16> to vector<8x32xbf16>
    %214 = arith.extf %213 : vector<8x32xbf16> to vector<8x32xf32>
    %c30 = arith.constant 30 : index
    %c0_33 = arith.constant 0 : index
    %215 = vector.load %arg3[%c30, %c0_33] : memref<31x32xbf16, #tpu.memory_space<vmem>>, vector<1x32xbf16>
    %216 = arith.extf %215 : vector<1x32xbf16> to vector<1x32xf32>
    %217 = vector.broadcast %216 : vector<1x32xf32> to vector<8x32xf32>
    %218 = arith.mulf %214, %217 : vector<8x32xf32>
    %219 = arith.addf %212, %218 : vector<8x32xf32>
    %c0_34 = arith.constant 0 : index
    %c0_35 = arith.constant 0 : index
    %220 = vector.load %arg4[%c0_34, %c0_35] : memref<1x32xbf16, #tpu.memory_space<vmem>>, vector<1x32xbf16>
    %221 = arith.extf %220 : vector<1x32xbf16> to vector<1x32xf32>
    %222 = vector.broadcast %221 : vector<1x32xf32> to vector<8x32xf32>
    %223 = arith.addf %219, %222 : vector<8x32xf32>
    %c0_36 = arith.constant 0 : index
    %c0_37 = arith.constant 0 : index
    %224 = vector.load %arg5[%c0_36, %c0_37] : memref<1x32xbf16, #tpu.memory_space<vmem>>, vector<1x32xbf16>
    %c0_38 = arith.constant 0 : index
    %c0_39 = arith.constant 0 : index
    %225 = vector.load %arg6[%c0_38, %c0_39] : memref<1x32xbf16, #tpu.memory_space<vmem>>, vector<1x32xbf16>
    %cst_40 = arith.constant dense<0.000000e+00> : vector<8xf32>
    %226 = vector.multi_reduction <add>, %223, %cst_40 [1] : vector<8x32xf32> to vector<8xf32>
    %227 = vector.shape_cast %226 : vector<8xf32> to vector<8x1xf32>
    %cst_41 = arith.constant 3.200000e+01 : f32
    %228 = vector.broadcast %cst_41 : f32 to vector<8x1xf32>
    %229 = arith.divf %227, %228 : vector<8x1xf32>
    %230 = vector.broadcast %229 : vector<8x1xf32> to vector<8x32xf32>
    %231 = arith.subf %223, %230 : vector<8x32xf32>
    %232 = arith.mulf %231, %231 : vector<8x32xf32>
    %cst_42 = arith.constant dense<0.000000e+00> : vector<8xf32>
    %233 = vector.multi_reduction <add>, %232, %cst_42 [1] : vector<8x32xf32> to vector<8xf32>
    %234 = vector.shape_cast %233 : vector<8xf32> to vector<8x1xf32>
    %cst_43 = arith.constant 3.200000e+01 : f32
    %235 = vector.broadcast %cst_43 : f32 to vector<8x1xf32>
    %236 = arith.divf %234, %235 : vector<8x1xf32>
    %cst_44 = arith.constant 9.99999974E-6 : f32
    %237 = vector.broadcast %cst_44 : f32 to vector<8x1xf32>
    %238 = arith.addf %236, %237 : vector<8x1xf32>
    %239 = math.rsqrt %238 : vector<8x1xf32>
    %240 = vector.broadcast %239 : vector<8x1xf32> to vector<8x32xf32>
    %241 = arith.mulf %231, %240 : vector<8x32xf32>
    %242 = arith.extf %224 : vector<1x32xbf16> to vector<1x32xf32>
    %243 = vector.broadcast %242 : vector<1x32xf32> to vector<8x32xf32>
    %244 = arith.mulf %241, %243 : vector<8x32xf32>
    %245 = arith.extf %225 : vector<1x32xbf16> to vector<1x32xf32>
    %246 = vector.broadcast %245 : vector<1x32xf32> to vector<8x32xf32>
    %247 = arith.addf %244, %246 : vector<8x32xf32>
    %248 = arith.negf %247 : vector<8x32xf32>
    %249 = math.exp %248 : vector<8x32xf32>
    %cst_45 = arith.constant 1.000000e+00 : f32
    %250 = vector.broadcast %cst_45 : f32 to vector<8x32xf32>
    %251 = arith.addf %250, %249 : vector<8x32xf32>
    %252 = arith.divf %250, %251 : vector<8x32xf32>
    %253 = arith.mulf %247, %252 : vector<8x32xf32>
    %c0_46 = arith.constant 0 : index
    %c0_47 = arith.constant 0 : index
    %254 = vector.load %arg7[%c0_46, %c0_47] : memref<32x32xbf16, #tpu.memory_space<vmem>>, vector<32x32xbf16>
    %255 = arith.truncf %253 : vector<8x32xf32> to vector<8x32xbf16>
    %cst_48 = arith.constant dense<0.000000e+00> : vector<8x32xf32>
    %256 = tpu.matmul %255, %254, %cst_48 {dimension_numbers = #tpu.dot_dimension_numbers<[1], [0], [0], [1], [0, 0, 1, 1], [], []>} : vector<8x32xbf16>, vector<32x32xbf16>, vector<8x32xf32> -> vector<8x32xf32>
    %c0_49 = arith.constant 0 : index
    %c0_50 = arith.constant 0 : index
    %257 = vector.load %arg8[%c0_49, %c0_50] : memref<1x32xbf16, #tpu.memory_space<vmem>>, vector<1x32xbf16>
    %258 = arith.extf %257 : vector<1x32xbf16> to vector<1x32xf32>
    %259 = vector.broadcast %258 : vector<1x32xf32> to vector<8x32xf32>
    %260 = arith.addf %256, %259 : vector<8x32xf32>
    %c0_51 = arith.constant 0 : index
    %c0_52 = arith.constant 0 : index
    %c0_53 = arith.constant 0 : index
    %261 = vector.load %arg2[%c0_51, %c0_52, %c0_53] : memref<1x8x32xbf16, #tpu.memory_space<vmem>>, vector<1x8x32xbf16>
    %262 = vector.shape_cast %261 : vector<1x8x32xbf16> to vector<8x32xbf16>
    %263 = arith.extf %262 : vector<8x32xbf16> to vector<8x32xf32>
    %264 = arith.addf %260, %263 : vector<8x32xf32>
    %265 = arith.truncf %264 : vector<8x32xf32> to vector<8x32xbf16>
    %c0_54 = arith.constant 0 : index
    %c0_55 = arith.constant 0 : index
    %c0_56 = arith.constant 0 : index
    %266 = vector.load %arg9[%c0_54, %c0_55, %c0_56] : memref<1x8x32xbf16, #tpu.memory_space<vmem>>, vector<1x8x32xbf16>
    %267 = vector.shape_cast %266 : vector<1x8x32xbf16> to vector<8x32xbf16>
    %268 = vector.shape_cast %265 : vector<8x32xbf16> to vector<1x8x32xbf16>
    tpu.vector_store %arg9[%c0_54, %c0_55, %c0_56], %268 {strides = array<i32>} : memref<1x8x32xbf16, #tpu.memory_space<vmem>>, vector<1x8x32xbf16>,
    return
  }
  func.func @transform_0(%arg0: i32) -> (i32, i32, i32) {
    %c0_i32 = arith.constant 0 : i32
    %c0_i32_0 = arith.constant 0 : i32
    %c0_i32_1 = arith.constant 0 : i32
    return %arg0, %c0_i32, %c0_i32_0 : i32, i32, i32
  }
  func.func @transform_1(%arg0: i32) -> (i32, i32, i32) {
    %c0_i32 = arith.constant 0 : i32
    %c0_i32_0 = arith.constant 0 : i32
    %c0_i32_1 = arith.constant 0 : i32
    return %arg0, %c0_i32, %c0_i32_0 : i32, i32, i32
  }
  func.func @transform_2(%arg0: i32) -> (i32, i32) {
    %c0_i32 = arith.constant 0 : i32
    %c0_i32_0 = arith.constant 0 : i32
    %c0_i32_1 = arith.constant 0 : i32
    return %c0_i32, %c0_i32_0 : i32, i32
  }
  func.func @transform_3(%arg0: i32) -> (i32, i32) {
    %c0_i32 = arith.constant 0 : i32
    %c0_i32_0 = arith.constant 0 : i32
    %c0_i32_1 = arith.constant 0 : i32
    return %c0_i32, %c0_i32_0 : i32, i32
  }
  func.func @transform_4(%arg0: i32) -> (i32, i32) {
    %c0_i32 = arith.constant 0 : i32
    %c0_i32_0 = arith.constant 0 : i32
    %c0_i32_1 = arith.constant 0 : i32
    return %c0_i32, %c0_i32_0 : i32, i32
  }
  func.func @transform_5(%arg0: i32) -> (i32, i32) {
    %c0_i32 = arith.constant 0 : i32
    %c0_i32_0 = arith.constant 0 : i32
    %c0_i32_1 = arith.constant 0 : i32
    return %c0_i32, %c0_i32_0 : i32, i32
  }
  func.func @transform_6(%arg0: i32) -> (i32, i32) {
    %c0_i32 = arith.constant 0 : i32
    %c0_i32_0 = arith.constant 0 : i32
    %c0_i32_1 = arith.constant 0 : i32
    return %c0_i32, %c0_i32_0 : i32, i32
  }
  func.func @transform_7(%arg0: i32) -> (i32, i32) {
    %c0_i32 = arith.constant 0 : i32
    %c0_i32_0 = arith.constant 0 : i32
    %c0_i32_1 = arith.constant 0 : i32
    return %c0_i32, %c0_i32_0 : i32, i32
  }
  func.func @transform_8(%arg0: i32) -> (i32, i32, i32) {
    %c0_i32 = arith.constant 0 : i32
    %c0_i32_0 = arith.constant 0 : i32
    %c0_i32_1 = arith.constant 0 : i32
    return %arg0, %c0_i32, %c0_i32_0 : i32, i32, i32
  }
}

module attributes {stable_mosaic.version = 11 : i64} {
  func.func @_ln_glu_kernel(%arg0: i32, %arg1: memref<16x32xbf16, #tpu.memory_space<vmem>>, %arg2: memref<1x32xbf16, #tpu.memory_space<vmem>>, %arg3: memref<1x32xbf16, #tpu.memory_space<vmem>>, %arg4: memref<32x32xbf16, #tpu.memory_space<vmem>>, %arg5: memref<1x32xbf16, #tpu.memory_space<vmem>>, %arg6: memref<32x32xbf16, #tpu.memory_space<vmem>>, %arg7: memref<1x32xbf16, #tpu.memory_space<vmem>>, %arg8: memref<16x32xbf16, #tpu.memory_space<vmem>>) attributes {dimension_semantics = [#tpu.dimension_semantics<parallel>], iteration_bounds = array<i64: 1>, scalar_prefetch = 0 : i64, scratch_operands = 0 : i64, tpu.core_type = #tpu.core_type<tc>, window_params = [{transform_indices = @transform_0, window_bounds = array<i64: 16, 32>}, {pipeline_mode = #tpu.pipeline_mode<synchronous>, transform_indices = @transform_1, window_bounds = array<i64: 1, 32>}, {pipeline_mode = #tpu.pipeline_mode<synchronous>, transform_indices = @transform_2, window_bounds = array<i64: 1, 32>}, {pipeline_mode = #tpu.pipeline_mode<synchronous>, transform_indices = @transform_3, window_bounds = array<i64: 32, 32>}, {pipeline_mode = #tpu.pipeline_mode<synchronous>, transform_indices = @transform_4, window_bounds = array<i64: 1, 32>}, {pipeline_mode = #tpu.pipeline_mode<synchronous>, transform_indices = @transform_5, window_bounds = array<i64: 32, 32>}, {pipeline_mode = #tpu.pipeline_mode<synchronous>, transform_indices = @transform_6, window_bounds = array<i64: 1, 32>}, {transform_indices = @transform_7, window_bounds = array<i64: 16, 32>}]} {
    %c0 = arith.constant 0 : index
    %c0_0 = arith.constant 0 : index
    %0 = vector.load %arg1[%c0, %c0_0] : memref<16x32xbf16, #tpu.memory_space<vmem>>, vector<16x32xbf16>
    %c0_1 = arith.constant 0 : index
    %c0_2 = arith.constant 0 : index
    %1 = vector.load %arg2[%c0_1, %c0_2] : memref<1x32xbf16, #tpu.memory_space<vmem>>, vector<1x32xbf16>
    %c0_3 = arith.constant 0 : index
    %c0_4 = arith.constant 0 : index
    %2 = vector.load %arg3[%c0_3, %c0_4] : memref<1x32xbf16, #tpu.memory_space<vmem>>, vector<1x32xbf16>
    %3 = arith.extf %0 : vector<16x32xbf16> to vector<16x32xf32>
    %cst = arith.constant dense<0.000000e+00> : vector<16xf32>
    %4 = vector.multi_reduction <add>, %3, %cst [1] : vector<16x32xf32> to vector<16xf32>
    %5 = vector.shape_cast %4 : vector<16xf32> to vector<16x1xf32>
    %cst_5 = arith.constant 3.200000e+01 : f32
    %6 = vector.broadcast %cst_5 : f32 to vector<16x1xf32>
    %7 = arith.divf %5, %6 : vector<16x1xf32>
    %8 = vector.broadcast %7 : vector<16x1xf32> to vector<16x32xf32>
    %9 = arith.subf %3, %8 : vector<16x32xf32>
    %10 = arith.mulf %9, %9 : vector<16x32xf32>
    %cst_6 = arith.constant dense<0.000000e+00> : vector<16xf32>
    %11 = vector.multi_reduction <add>, %10, %cst_6 [1] : vector<16x32xf32> to vector<16xf32>
    %12 = vector.shape_cast %11 : vector<16xf32> to vector<16x1xf32>
    %cst_7 = arith.constant 3.200000e+01 : f32
    %13 = vector.broadcast %cst_7 : f32 to vector<16x1xf32>
    %14 = arith.divf %12, %13 : vector<16x1xf32>
    %cst_8 = arith.constant 9.99999974E-6 : f32
    %15 = vector.broadcast %cst_8 : f32 to vector<16x1xf32>
    %16 = arith.addf %14, %15 : vector<16x1xf32>
    %17 = math.rsqrt %16 : vector<16x1xf32>
    %18 = vector.broadcast %17 : vector<16x1xf32> to vector<16x32xf32>
    %19 = arith.mulf %9, %18 : vector<16x32xf32>
    %20 = arith.extf %1 : vector<1x32xbf16> to vector<1x32xf32>
    %21 = vector.broadcast %20 : vector<1x32xf32> to vector<16x32xf32>
    %22 = arith.mulf %19, %21 : vector<16x32xf32>
    %23 = arith.extf %2 : vector<1x32xbf16> to vector<1x32xf32>
    %24 = vector.broadcast %23 : vector<1x32xf32> to vector<16x32xf32>
    %25 = arith.addf %22, %24 : vector<16x32xf32>
    %c0_9 = arith.constant 0 : index
    %c0_10 = arith.constant 0 : index
    %26 = vector.load %arg4[%c0_9, %c0_10] : memref<32x32xbf16, #tpu.memory_space<vmem>>, vector<32x32xbf16>
    %27 = arith.truncf %25 : vector<16x32xf32> to vector<16x32xbf16>
    %cst_11 = arith.constant dense<0.000000e+00> : vector<16x32xf32>
    %28 = tpu.matmul %27, %26, %cst_11 {dimension_numbers = #tpu.dot_dimension_numbers<[1], [0], [0], [1], [0, 0, 1, 1], [], []>} : vector<16x32xbf16>, vector<32x32xbf16>, vector<16x32xf32> -> vector<16x32xf32>
    %c0_12 = arith.constant 0 : index
    %c0_13 = arith.constant 0 : index
    %29 = vector.load %arg5[%c0_12, %c0_13] : memref<1x32xbf16, #tpu.memory_space<vmem>>, vector<1x32xbf16>
    %30 = arith.extf %29 : vector<1x32xbf16> to vector<1x32xf32>
    %31 = vector.broadcast %30 : vector<1x32xf32> to vector<16x32xf32>
    %32 = arith.addf %28, %31 : vector<16x32xf32>
    %c0_14 = arith.constant 0 : index
    %c0_15 = arith.constant 0 : index
    %33 = vector.load %arg6[%c0_14, %c0_15] : memref<32x32xbf16, #tpu.memory_space<vmem>>, vector<32x32xbf16>
    %34 = arith.truncf %25 : vector<16x32xf32> to vector<16x32xbf16>
    %cst_16 = arith.constant dense<0.000000e+00> : vector<16x32xf32>
    %35 = tpu.matmul %34, %33, %cst_16 {dimension_numbers = #tpu.dot_dimension_numbers<[1], [0], [0], [1], [0, 0, 1, 1], [], []>} : vector<16x32xbf16>, vector<32x32xbf16>, vector<16x32xf32> -> vector<16x32xf32>
    %c0_17 = arith.constant 0 : index
    %c0_18 = arith.constant 0 : index
    %36 = vector.load %arg7[%c0_17, %c0_18] : memref<1x32xbf16, #tpu.memory_space<vmem>>, vector<1x32xbf16>
    %37 = arith.extf %36 : vector<1x32xbf16> to vector<1x32xf32>
    %38 = vector.broadcast %37 : vector<1x32xf32> to vector<16x32xf32>
    %39 = arith.addf %35, %38 : vector<16x32xf32>
    %40 = arith.negf %39 : vector<16x32xf32>
    %41 = math.exp %40 : vector<16x32xf32>
    %cst_19 = arith.constant 1.000000e+00 : f32
    %42 = vector.broadcast %cst_19 : f32 to vector<16x32xf32>
    %43 = arith.addf %42, %41 : vector<16x32xf32>
    %44 = arith.divf %42, %43 : vector<16x32xf32>
    %45 = arith.mulf %32, %44 : vector<16x32xf32>
    %46 = arith.truncf %45 : vector<16x32xf32> to vector<16x32xbf16>
    %c0_20 = arith.constant 0 : index
    %c0_21 = arith.constant 0 : index
    %47 = vector.load %arg8[%c0_20, %c0_21] : memref<16x32xbf16, #tpu.memory_space<vmem>>, vector<16x32xbf16>
    tpu.vector_store %arg8[%c0_20, %c0_21], %46 {strides = array<i32>} : memref<16x32xbf16, #tpu.memory_space<vmem>>, vector<16x32xbf16>,
    return
  }
  func.func @transform_0(%arg0: i32) -> (i32, i32) {
    %c0_i32 = arith.constant 0 : i32
    %c0_i32_0 = arith.constant 0 : i32
    return %arg0, %c0_i32 : i32, i32
  }
  func.func @transform_1(%arg0: i32) -> (i32, i32) {
    %c0_i32 = arith.constant 0 : i32
    %c0_i32_0 = arith.constant 0 : i32
    %c0_i32_1 = arith.constant 0 : i32
    return %c0_i32, %c0_i32_0 : i32, i32
  }
  func.func @transform_2(%arg0: i32) -> (i32, i32) {
    %c0_i32 = arith.constant 0 : i32
    %c0_i32_0 = arith.constant 0 : i32
    %c0_i32_1 = arith.constant 0 : i32
    return %c0_i32, %c0_i32_0 : i32, i32
  }
  func.func @transform_3(%arg0: i32) -> (i32, i32) {
    %c0_i32 = arith.constant 0 : i32
    %c0_i32_0 = arith.constant 0 : i32
    %c0_i32_1 = arith.constant 0 : i32
    return %c0_i32, %c0_i32_0 : i32, i32
  }
  func.func @transform_4(%arg0: i32) -> (i32, i32) {
    %c0_i32 = arith.constant 0 : i32
    %c0_i32_0 = arith.constant 0 : i32
    %c0_i32_1 = arith.constant 0 : i32
    return %c0_i32, %c0_i32_0 : i32, i32
  }
  func.func @transform_5(%arg0: i32) -> (i32, i32) {
    %c0_i32 = arith.constant 0 : i32
    %c0_i32_0 = arith.constant 0 : i32
    %c0_i32_1 = arith.constant 0 : i32
    return %c0_i32, %c0_i32_0 : i32, i32
  }
  func.func @transform_6(%arg0: i32) -> (i32, i32) {
    %c0_i32 = arith.constant 0 : i32
    %c0_i32_0 = arith.constant 0 : i32
    %c0_i32_1 = arith.constant 0 : i32
    return %c0_i32, %c0_i32_0 : i32, i32
  }
  func.func @transform_7(%arg0: i32) -> (i32, i32) {
    %c0_i32 = arith.constant 0 : i32
    %c0_i32_0 = arith.constant 0 : i32
    return %arg0, %c0_i32 : i32, i32
  }
}

module attributes {stable_mosaic.version = 11 : i64} {
  func.func @_ffn_kernel(%arg0: i32, %arg1: memref<16x32xbf16, #tpu.memory_space<vmem>>, %arg2: memref<1x32xbf16, #tpu.memory_space<vmem>>, %arg3: memref<1x32xbf16, #tpu.memory_space<vmem>>, %arg4: memref<32x64xbf16, #tpu.memory_space<vmem>>, %arg5: memref<1x64xbf16, #tpu.memory_space<vmem>>, %arg6: memref<64x32xbf16, #tpu.memory_space<vmem>>, %arg7: memref<1x32xbf16, #tpu.memory_space<vmem>>, %arg8: memref<1x32xbf16, #tpu.memory_space<vmem>>, %arg9: memref<1x32xbf16, #tpu.memory_space<vmem>>, %arg10: memref<16x32xbf16, #tpu.memory_space<vmem>>) attributes {dimension_semantics = [#tpu.dimension_semantics<parallel>], iteration_bounds = array<i64: 1>, scalar_prefetch = 0 : i64, scratch_operands = 0 : i64, tpu.core_type = #tpu.core_type<tc>, window_params = [{transform_indices = @transform_0, window_bounds = array<i64: 16, 32>}, {pipeline_mode = #tpu.pipeline_mode<synchronous>, transform_indices = @transform_1, window_bounds = array<i64: 1, 32>}, {pipeline_mode = #tpu.pipeline_mode<synchronous>, transform_indices = @transform_2, window_bounds = array<i64: 1, 32>}, {pipeline_mode = #tpu.pipeline_mode<synchronous>, transform_indices = @transform_3, window_bounds = array<i64: 32, 64>}, {pipeline_mode = #tpu.pipeline_mode<synchronous>, transform_indices = @transform_4, window_bounds = array<i64: 1, 64>}, {pipeline_mode = #tpu.pipeline_mode<synchronous>, transform_indices = @transform_5, window_bounds = array<i64: 64, 32>}, {pipeline_mode = #tpu.pipeline_mode<synchronous>, transform_indices = @transform_6, window_bounds = array<i64: 1, 32>}, {pipeline_mode = #tpu.pipeline_mode<synchronous>, transform_indices = @transform_7, window_bounds = array<i64: 1, 32>}, {pipeline_mode = #tpu.pipeline_mode<synchronous>, transform_indices = @transform_8, window_bounds = array<i64: 1, 32>}, {transform_indices = @transform_9, window_bounds = array<i64: 16, 32>}]} {
    %c0 = arith.constant 0 : index
    %c0_0 = arith.constant 0 : index
    %0 = vector.load %arg1[%c0, %c0_0] : memref<16x32xbf16, #tpu.memory_space<vmem>>, vector<16x32xbf16>
    %1 = arith.extf %0 : vector<16x32xbf16> to vector<16x32xf32>
    %c0_1 = arith.constant 0 : index
    %c0_2 = arith.constant 0 : index
    %2 = vector.load %arg2[%c0_1, %c0_2] : memref<1x32xbf16, #tpu.memory_space<vmem>>, vector<1x32xbf16>
    %c0_3 = arith.constant 0 : index
    %c0_4 = arith.constant 0 : index
    %3 = vector.load %arg3[%c0_3, %c0_4] : memref<1x32xbf16, #tpu.memory_space<vmem>>, vector<1x32xbf16>
    %cst = arith.constant dense<0.000000e+00> : vector<16xf32>
    %4 = vector.multi_reduction <add>, %1, %cst [1] : vector<16x32xf32> to vector<16xf32>
    %5 = vector.shape_cast %4 : vector<16xf32> to vector<16x1xf32>
    %cst_5 = arith.constant 3.200000e+01 : f32
    %6 = vector.broadcast %cst_5 : f32 to vector<16x1xf32>
    %7 = arith.divf %5, %6 : vector<16x1xf32>
    %8 = vector.broadcast %7 : vector<16x1xf32> to vector<16x32xf32>
    %9 = arith.subf %1, %8 : vector<16x32xf32>
    %10 = arith.mulf %9, %9 : vector<16x32xf32>
    %cst_6 = arith.constant dense<0.000000e+00> : vector<16xf32>
    %11 = vector.multi_reduction <add>, %10, %cst_6 [1] : vector<16x32xf32> to vector<16xf32>
    %12 = vector.shape_cast %11 : vector<16xf32> to vector<16x1xf32>
    %cst_7 = arith.constant 3.200000e+01 : f32
    %13 = vector.broadcast %cst_7 : f32 to vector<16x1xf32>
    %14 = arith.divf %12, %13 : vector<16x1xf32>
    %cst_8 = arith.constant 9.99999974E-6 : f32
    %15 = vector.broadcast %cst_8 : f32 to vector<16x1xf32>
    %16 = arith.addf %14, %15 : vector<16x1xf32>
    %17 = math.rsqrt %16 : vector<16x1xf32>
    %18 = vector.broadcast %17 : vector<16x1xf32> to vector<16x32xf32>
    %19 = arith.mulf %9, %18 : vector<16x32xf32>
    %20 = arith.extf %2 : vector<1x32xbf16> to vector<1x32xf32>
    %21 = vector.broadcast %20 : vector<1x32xf32> to vector<16x32xf32>
    %22 = arith.mulf %19, %21 : vector<16x32xf32>
    %23 = arith.extf %3 : vector<1x32xbf16> to vector<1x32xf32>
    %24 = vector.broadcast %23 : vector<1x32xf32> to vector<16x32xf32>
    %25 = arith.addf %22, %24 : vector<16x32xf32>
    %c0_9 = arith.constant 0 : index
    %c0_10 = arith.constant 0 : index
    %26 = vector.load %arg4[%c0_9, %c0_10] : memref<32x64xbf16, #tpu.memory_space<vmem>>, vector<32x64xbf16>
    %27 = arith.truncf %25 : vector<16x32xf32> to vector<16x32xbf16>
    %cst_11 = arith.constant dense<0.000000e+00> : vector<16x64xf32>
    %28 = tpu.matmul %27, %26, %cst_11 {dimension_numbers = #tpu.dot_dimension_numbers<[1], [0], [0], [1], [0, 0, 1, 1], [], []>} : vector<16x32xbf16>, vector<32x64xbf16>, vector<16x64xf32> -> vector<16x64xf32>
    %c0_12 = arith.constant 0 : index
    %c0_13 = arith.constant 0 : index
    %29 = vector.load %arg5[%c0_12, %c0_13] : memref<1x64xbf16, #tpu.memory_space<vmem>>, vector<1x64xbf16>
    %30 = arith.extf %29 : vector<1x64xbf16> to vector<1x64xf32>
    %31 = vector.broadcast %30 : vector<1x64xf32> to vector<16x64xf32>
    %32 = arith.addf %28, %31 : vector<16x64xf32>
    %33 = arith.negf %32 : vector<16x64xf32>
    %34 = math.exp %33 : vector<16x64xf32>
    %cst_14 = arith.constant 1.000000e+00 : f32
    %35 = vector.broadcast %cst_14 : f32 to vector<16x64xf32>
    %36 = arith.addf %35, %34 : vector<16x64xf32>
    %37 = arith.divf %35, %36 : vector<16x64xf32>
    %38 = arith.mulf %32, %37 : vector<16x64xf32>
    %c0_15 = arith.constant 0 : index
    %c0_16 = arith.constant 0 : index
    %39 = vector.load %arg6[%c0_15, %c0_16] : memref<64x32xbf16, #tpu.memory_space<vmem>>, vector<64x32xbf16>
    %40 = arith.truncf %38 : vector<16x64xf32> to vector<16x64xbf16>
    %cst_17 = arith.constant dense<0.000000e+00> : vector<16x32xf32>
    %41 = tpu.matmul %40, %39, %cst_17 {dimension_numbers = #tpu.dot_dimension_numbers<[1], [0], [0], [1], [0, 0, 1, 1], [], []>} : vector<16x64xbf16>, vector<64x32xbf16>, vector<16x32xf32> -> vector<16x32xf32>
    %c0_18 = arith.constant 0 : index
    %c0_19 = arith.constant 0 : index
    %42 = vector.load %arg7[%c0_18, %c0_19] : memref<1x32xbf16, #tpu.memory_space<vmem>>, vector<1x32xbf16>
    %43 = arith.extf %42 : vector<1x32xbf16> to vector<1x32xf32>
    %44 = vector.broadcast %43 : vector<1x32xf32> to vector<16x32xf32>
    %45 = arith.addf %41, %44 : vector<16x32xf32>
    %cst_20 = arith.constant 5.000000e-01 : f32
    %46 = vector.broadcast %cst_20 : f32 to vector<16x32xf32>
    %47 = arith.mulf %46, %45 : vector<16x32xf32>
    %48 = arith.addf %1, %47 : vector<16x32xf32>
    %c0_21 = arith.constant 0 : index
    %c0_22 = arith.constant 0 : index
    %49 = vector.load %arg8[%c0_21, %c0_22] : memref<1x32xbf16, #tpu.memory_space<vmem>>, vector<1x32xbf16>
    %c0_23 = arith.constant 0 : index
    %c0_24 = arith.constant 0 : index
    %50 = vector.load %arg9[%c0_23, %c0_24] : memref<1x32xbf16, #tpu.memory_space<vmem>>, vector<1x32xbf16>
    %cst_25 = arith.constant dense<0.000000e+00> : vector<16xf32>
    %51 = vector.multi_reduction <add>, %48, %cst_25 [1] : vector<16x32xf32> to vector<16xf32>
    %52 = vector.shape_cast %51 : vector<16xf32> to vector<16x1xf32>
    %cst_26 = arith.constant 3.200000e+01 : f32
    %53 = vector.broadcast %cst_26 : f32 to vector<16x1xf32>
    %54 = arith.divf %52, %53 : vector<16x1xf32>
    %55 = vector.broadcast %54 : vector<16x1xf32> to vector<16x32xf32>
    %56 = arith.subf %48, %55 : vector<16x32xf32>
    %57 = arith.mulf %56, %56 : vector<16x32xf32>
    %cst_27 = arith.constant dense<0.000000e+00> : vector<16xf32>
    %58 = vector.multi_reduction <add>, %57, %cst_27 [1] : vector<16x32xf32> to vector<16xf32>
    %59 = vector.shape_cast %58 : vector<16xf32> to vector<16x1xf32>
    %cst_28 = arith.constant 3.200000e+01 : f32
    %60 = vector.broadcast %cst_28 : f32 to vector<16x1xf32>
    %61 = arith.divf %59, %60 : vector<16x1xf32>
    %cst_29 = arith.constant 9.99999974E-6 : f32
    %62 = vector.broadcast %cst_29 : f32 to vector<16x1xf32>
    %63 = arith.addf %61, %62 : vector<16x1xf32>
    %64 = math.rsqrt %63 : vector<16x1xf32>
    %65 = vector.broadcast %64 : vector<16x1xf32> to vector<16x32xf32>
    %66 = arith.mulf %56, %65 : vector<16x32xf32>
    %67 = arith.extf %49 : vector<1x32xbf16> to vector<1x32xf32>
    %68 = vector.broadcast %67 : vector<1x32xf32> to vector<16x32xf32>
    %69 = arith.mulf %66, %68 : vector<16x32xf32>
    %70 = arith.extf %50 : vector<1x32xbf16> to vector<1x32xf32>
    %71 = vector.broadcast %70 : vector<1x32xf32> to vector<16x32xf32>
    %72 = arith.addf %69, %71 : vector<16x32xf32>
    %73 = arith.truncf %72 : vector<16x32xf32> to vector<16x32xbf16>
    %c0_30 = arith.constant 0 : index
    %c0_31 = arith.constant 0 : index
    %74 = vector.load %arg10[%c0_30, %c0_31] : memref<16x32xbf16, #tpu.memory_space<vmem>>, vector<16x32xbf16>
    tpu.vector_store %arg10[%c0_30, %c0_31], %73 {strides = array<i32>} : memref<16x32xbf16, #tpu.memory_space<vmem>>, vector<16x32xbf16>,
    return
  }
  func.func @transform_0(%arg0: i32) -> (i32, i32) {
    %c0_i32 = arith.constant 0 : i32
    %c0_i32_0 = arith.constant 0 : i32
    return %arg0, %c0_i32 : i32, i32
  }
  func.func @transform_1(%arg0: i32) -> (i32, i32) {
    %c0_i32 = arith.constant 0 : i32
    %c0_i32_0 = arith.constant 0 : i32
    %c0_i32_1 = arith.constant 0 : i32
    return %c0_i32, %c0_i32_0 : i32, i32
  }
  func.func @transform_2(%arg0: i32) -> (i32, i32) {
    %c0_i32 = arith.constant 0 : i32
    %c0_i32_0 = arith.constant 0 : i32
    %c0_i32_1 = arith.constant 0 : i32
    return %c0_i32, %c0_i32_0 : i32, i32
  }
  func.func @transform_3(%arg0: i32) -> (i32, i32) {
    %c0_i32 = arith.constant 0 : i32
    %c0_i32_0 = arith.constant 0 : i32
    %c0_i32_1 = arith.constant 0 : i32
    return %c0_i32, %c0_i32_0 : i32, i32
  }
  func.func @transform_4(%arg0: i32) -> (i32, i32) {
    %c0_i32 = arith.constant 0 : i32
    %c0_i32_0 = arith.constant 0 : i32
    %c0_i32_1 = arith.constant 0 : i32
    return %c0_i32, %c0_i32_0 : i32, i32
  }
  func.func @transform_5(%arg0: i32) -> (i32, i32) {
    %c0_i32 = arith.constant 0 : i32
    %c0_i32_0 = arith.constant 0 : i32
    %c0_i32_1 = arith.constant 0 : i32
    return %c0_i32, %c0_i32_0 : i32, i32
  }
  func.func @transform_6(%arg0: i32) -> (i32, i32) {
    %c0_i32 = arith.constant 0 : i32
    %c0_i32_0 = arith.constant 0 : i32
    %c0_i32_1 = arith.constant 0 : i32
    return %c0_i32, %c0_i32_0 : i32, i32
  }
  func.func @transform_7(%arg0: i32) -> (i32, i32) {
    %c0_i32 = arith.constant 0 : i32
    %c0_i32_0 = arith.constant 0 : i32
    %c0_i32_1 = arith.constant 0 : i32
    return %c0_i32, %c0_i32_0 : i32, i32
  }
  func.func @transform_8(%arg0: i32) -> (i32, i32) {
    %c0_i32 = arith.constant 0 : i32
    %c0_i32_0 = arith.constant 0 : i32
    %c0_i32_1 = arith.constant 0 : i32
    return %c0_i32, %c0_i32_0 : i32, i32
  }
  func.func @transform_9(%arg0: i32) -> (i32, i32) {
    %c0_i32 = arith.constant 0 : i32
    %c0_i32_0 = arith.constant 0 : i32
    return %arg0, %c0_i32 : i32, i32
  }
}

module attributes {stable_mosaic.version = 11 : i64} {
  func.func @_ln_kernel(%arg0: i32, %arg1: memref<16x32xbf16, #tpu.memory_space<vmem>>, %arg2: memref<1x32xbf16, #tpu.memory_space<vmem>>, %arg3: memref<1x32xbf16, #tpu.memory_space<vmem>>, %arg4: memref<16x32xf32, #tpu.memory_space<vmem>>) attributes {dimension_semantics = [#tpu.dimension_semantics<parallel>], iteration_bounds = array<i64: 1>, scalar_prefetch = 0 : i64, scratch_operands = 0 : i64, tpu.core_type = #tpu.core_type<tc>, window_params = [{transform_indices = @transform_0, window_bounds = array<i64: 16, 32>}, {pipeline_mode = #tpu.pipeline_mode<synchronous>, transform_indices = @transform_1, window_bounds = array<i64: 1, 32>}, {pipeline_mode = #tpu.pipeline_mode<synchronous>, transform_indices = @transform_2, window_bounds = array<i64: 1, 32>}, {transform_indices = @transform_3, window_bounds = array<i64: 16, 32>}]} {
    %c0 = arith.constant 0 : index
    %c0_0 = arith.constant 0 : index
    %0 = vector.load %arg1[%c0, %c0_0] : memref<16x32xbf16, #tpu.memory_space<vmem>>, vector<16x32xbf16>
    %c0_1 = arith.constant 0 : index
    %c0_2 = arith.constant 0 : index
    %1 = vector.load %arg2[%c0_1, %c0_2] : memref<1x32xbf16, #tpu.memory_space<vmem>>, vector<1x32xbf16>
    %c0_3 = arith.constant 0 : index
    %c0_4 = arith.constant 0 : index
    %2 = vector.load %arg3[%c0_3, %c0_4] : memref<1x32xbf16, #tpu.memory_space<vmem>>, vector<1x32xbf16>
    %3 = arith.extf %0 : vector<16x32xbf16> to vector<16x32xf32>
    %cst = arith.constant dense<0.000000e+00> : vector<16xf32>
    %4 = vector.multi_reduction <add>, %3, %cst [1] : vector<16x32xf32> to vector<16xf32>
    %5 = vector.shape_cast %4 : vector<16xf32> to vector<16x1xf32>
    %cst_5 = arith.constant 3.200000e+01 : f32
    %6 = vector.broadcast %cst_5 : f32 to vector<16x1xf32>
    %7 = arith.divf %5, %6 : vector<16x1xf32>
    %8 = vector.broadcast %7 : vector<16x1xf32> to vector<16x32xf32>
    %9 = arith.subf %3, %8 : vector<16x32xf32>
    %10 = arith.mulf %9, %9 : vector<16x32xf32>
    %cst_6 = arith.constant dense<0.000000e+00> : vector<16xf32>
    %11 = vector.multi_reduction <add>, %10, %cst_6 [1] : vector<16x32xf32> to vector<16xf32>
    %12 = vector.shape_cast %11 : vector<16xf32> to vector<16x1xf32>
    %cst_7 = arith.constant 3.200000e+01 : f32
    %13 = vector.broadcast %cst_7 : f32 to vector<16x1xf32>
    %14 = arith.divf %12, %13 : vector<16x1xf32>
    %cst_8 = arith.constant 9.99999997E-7 : f32
    %15 = vector.broadcast %cst_8 : f32 to vector<16x1xf32>
    %16 = arith.addf %14, %15 : vector<16x1xf32>
    %17 = math.rsqrt %16 : vector<16x1xf32>
    %18 = vector.broadcast %17 : vector<16x1xf32> to vector<16x32xf32>
    %19 = arith.mulf %9, %18 : vector<16x32xf32>
    %20 = arith.extf %1 : vector<1x32xbf16> to vector<1x32xf32>
    %21 = vector.broadcast %20 : vector<1x32xf32> to vector<16x32xf32>
    %22 = arith.mulf %19, %21 : vector<16x32xf32>
    %23 = arith.extf %2 : vector<1x32xbf16> to vector<1x32xf32>
    %24 = vector.broadcast %23 : vector<1x32xf32> to vector<16x32xf32>
    %25 = arith.addf %22, %24 : vector<16x32xf32>
    %c0_9 = arith.constant 0 : index
    %c0_10 = arith.constant 0 : index
    %26 = vector.load %arg4[%c0_9, %c0_10] : memref<16x32xf32, #tpu.memory_space<vmem>>, vector<16x32xf32>
    tpu.vector_store %arg4[%c0_9, %c0_10], %25 {strides = array<i32>} : memref<16x32xf32, #tpu.memory_space<vmem>>, vector<16x32xf32>,
    return
  }
  func.func @transform_0(%arg0: i32) -> (i32, i32) {
    %c0_i32 = arith.constant 0 : i32
    %c0_i32_0 = arith.constant 0 : i32
    return %arg0, %c0_i32 : i32, i32
  }
  func.func @transform_1(%arg0: i32) -> (i32, i32) {
    %c0_i32 = arith.constant 0 : i32
    %c0_i32_0 = arith.constant 0 : i32
    %c0_i32_1 = arith.constant 0 : i32
    return %c0_i32, %c0_i32_0 : i32, i32
  }
  func.func @transform_2(%arg0: i32) -> (i32, i32) {
    %c0_i32 = arith.constant 0 : i32
    %c0_i32_0 = arith.constant 0 : i32
    %c0_i32_1 = arith.constant 0 : i32
    return %c0_i32, %c0_i32_0 : i32, i32
  }
  func.func @transform_3(%arg0: i32) -> (i32, i32) {
    %c0_i32 = arith.constant 0 : i32
    %c0_i32_0 = arith.constant 0 : i32
    return %arg0, %c0_i32 : i32, i32
  }
}

</mosaic_0001>

<llo_original>
// kernel: tpu_custom_call.1
$region0: #{tpu_custom_call.1}
  #allocation0 [shape = 'u32[]', space=smem, size = 0x4, offset = 0x4, fixed_abs, tag = 'smem constant byte address 0x4 - core index']
  #allocation1 [shape = 'u32[72,128]{1,0:T(1,128)}', space=vmem, size = 0x9000, scoped, tag = 'internal scratch']
  %s0 = inlined_call_operand.hbm [shape: f32[8,128], index: 0, kind: input, shape index: {}]
  %s1 = inlined_call_operand.hbm [shape: f32[1,128], index: 1, kind: input, shape index: {}]
  %s2 = inlined_call_operand.hbm [shape: f32[8,128], index: 2, kind: output, shape index: {}]
  %s3 = sld [smem:[#allocation0]]
  $region26: #{tpu_custom_call.1} parent=0
    _
  %s5 = ssub.s32 1, %s3
  %s6 = scalar_select 0, %s5, %s3
  $region1: #{tpu_custom_call.1} parent=0
    #allocation2 [shape = 'u8[4096]{0}', space=vmem, size = 0x1000, scoped, tag = 'input window, operand 0, single buffered']
    #allocation3 [shape = 's32[1]{0}', space=sflag, size = 0x4, scoped, tag = 'scoped memory for tpu_custom_call.1']
    #allocation4 [shape = 's32[1]{0}', space=sflag, size = 0x4, scoped, tag = 'scoped memory for tpu_custom_call.1']
    #allocation5 [shape = 'u8[512]{0}', space=vmem, size = 0x400, scoped, tag = 'input window, operand 1, single buffered']
    #allocation6 [shape = 's32[1]{0}', space=sflag, size = 0x4, scoped, tag = 'scoped memory for tpu_custom_call.1']
    #allocation7 [shape = 'u8[4096]{0}', space=vmem, size = 0x1000, scoped, tag = 'output window, operand 0, single buffered']
    %7 = vsyncpa [#allocation3], 0
    %8 = vsyncpa [#allocation6], 0
    %9 = vsyncpa [#allocation4], 0
    // Predicated region
    $region2: #{tpu_custom_call.1} parent=1 // pred_check
      _
    $region3: #{tpu_custom_call.1} parent=1 // pred_check_branch
      %11 = sbr.rel (0) target = $region5
    $region4: #{tpu_custom_call.1} parent=1 // pred_region
      %13 = vsyncadd [#allocation3], 0
      %s15 = sshll.u32 %s0, 4
      %s16 = int_to_ptr.hbm [resolvable:$true] %s15
      %s17 = sshll.u32 [#allocation2], 4
      %s18 = int_to_ptr.vmem [resolvable:$true] %s17
      %20 = dma.hbm_to_vmem [thread:$0]  %s16, 128, %s18, [#allocation3]
    $region5: #{tpu_custom_call.1} parent=1 // pred_fallthru
      _
    // Predicated region
    $region6: #{tpu_custom_call.1} parent=1 // pred_check
      _
    $region7: #{tpu_custom_call.1} parent=1 // pred_check_branch
      %22 = sbr.rel (0) target = $region9
    $region8: #{tpu_custom_call.1} parent=1 // pred_region
      %24 = vsyncadd [#allocation6], 0
      %s26 = sshll.u32 %s1, 4
      %s27 = int_to_ptr.hbm [resolvable:$true] %s26
      %s28 = sshll.u32 [#allocation5], 4
      %s29 = int_to_ptr.vmem [resolvable:$true] %s28
      %31 = dma.hbm_to_vmem [thread:$0]  %s27, 16, %s29, [#allocation6]
    $region9: #{tpu_custom_call.1} parent=1 // pred_fallthru
      _
    // Predicated region
    $region10: #{tpu_custom_call.1} parent=1 // pred_check
      _
    $region11: #{tpu_custom_call.1} parent=1 // pred_check_branch
      %33 = sbr.rel (0) target = $region13
    $region12: #{tpu_custom_call.1} parent=1 // pred_region
      %35 = dma.done [#allocation3], 128
    $region13: #{tpu_custom_call.1} parent=1 // pred_fallthru
      _
    // Predicated region
    $region14: #{tpu_custom_call.1} parent=1 // pred_check
      _
    $region15: #{tpu_custom_call.1} parent=1 // pred_check_branch
      %37 = sbr.rel (0) target = $region17
    $region16: #{tpu_custom_call.1} parent=1 // pred_region
      %39 = dma.done [#allocation6], 16
    $region17: #{tpu_custom_call.1} parent=1 // pred_fallthru
      _
    %v40 = vld [vmem:[#allocation2] sm:$0xff]
    %v41 = vld [vmem:[#allocation5] sm:$0x1]
    %v43 = vperm.slane %v41, 0
    %v45 = vadd.f32 %v40, %v43
    %46 = vst [vmem:[#allocation7] sm:$0xff] %v45
    // Predicated region
    $region18: #{tpu_custom_call.1} parent=1 // pred_check
      _
    $region19: #{tpu_custom_call.1} parent=1 // pred_check_branch
      %48 = sbr.rel (0) target = $region21
    $region20: #{tpu_custom_call.1} parent=1 // pred_region
      %50 = vsyncadd [#allocation4], 0
      %s52 = sshll.u32 [#allocation7], 4
      %s53 = int_to_ptr.vmem [resolvable:$true] %s52
      %s54 = sshll.u32 %s2, 4
      %s55 = int_to_ptr.hbm [resolvable:$true] %s54
      %57 = dma.vmem_to_hbm [thread:$0]  %s53, 128, %s55, [#allocation4]
    $region21: #{tpu_custom_call.1} parent=1 // pred_fallthru
      _
    // Predicated region
    $region22: #{tpu_custom_call.1} parent=1 // pred_check
      _
    $region23: #{tpu_custom_call.1} parent=1 // pred_check_branch
      %59 = sbr.rel (0) target = $region25
    $region24: #{tpu_custom_call.1} parent=1 // pred_region
      %61 = dma.done [#allocation4], 128
    $region25: #{tpu_custom_call.1} parent=1 // pred_fallthru
      _
    %62 = vsyncpa [#allocation3], 1
    %63 = vsyncpa [#allocation6], 1
    %64 = vsyncpa [#allocation4], 1

// kernel: tpu_custom_call.1
$region0: #{tpu_custom_call.1}
  #allocation0 [shape = 'u32[]', space=smem, size = 0x4, offset = 0x4, fixed_abs, tag = 'smem constant byte address 0x4 - core index']
  #allocation1 [shape = 'u32[72,128]{1,0:T(1,128)}', space=vmem, size = 0x9000, scoped, tag = 'internal scratch']
  %s0 = inlined_call_operand.hbm [shape: f32[8,128], index: 0, kind: input, shape index: {}]
  %s1 = inlined_call_operand.hbm [shape: f32[8,128], index: 1, kind: output, shape index: {}]
  %s2 = sld [smem:[#allocation0]]
  $region18: #{tpu_custom_call.1} parent=0
    _
  %s4 = ssub.s32 1, %s2
  %s5 = scalar_select 0, %s4, %s2
  $region1: #{tpu_custom_call.1} parent=0
    #allocation2 [shape = 'u8[4096]{0}', space=vmem, size = 0x1000, scoped, tag = 'input window, operand 0, single buffered']
    #allocation3 [shape = 's32[1]{0}', space=sflag, size = 0x4, scoped, tag = 'scoped memory for tpu_custom_call.1']
    #allocation4 [shape = 's32[1]{0}', space=sflag, size = 0x4, scoped, tag = 'scoped memory for tpu_custom_call.1']
    #allocation5 [shape = 'u8[4096]{0}', space=vmem, size = 0x1000, scoped, tag = 'output window, operand 0, single buffered']
    %6 = vsyncpa [#allocation3], 0
    %7 = vsyncpa [#allocation4], 0
    // Predicated region
    $region2: #{tpu_custom_call.1} parent=1 // pred_check
      _
    $region3: #{tpu_custom_call.1} parent=1 // pred_check_branch
      %9 = sbr.rel (0) target = $region5
    $region4: #{tpu_custom_call.1} parent=1 // pred_region
      %11 = vsyncadd [#allocation3], 0
      %s13 = sshll.u32 %s0, 4
      %s14 = int_to_ptr.hbm [resolvable:$true] %s13
      %s15 = sshll.u32 [#allocation2], 4
      %s16 = int_to_ptr.vmem [resolvable:$true] %s15
      %18 = dma.hbm_to_vmem [thread:$0]  %s14, 128, %s16, [#allocation3]
    $region5: #{tpu_custom_call.1} parent=1 // pred_fallthru
      _
    // Predicated region
    $region6: #{tpu_custom_call.1} parent=1 // pred_check
      _
    $region7: #{tpu_custom_call.1} parent=1 // pred_check_branch
      %20 = sbr.rel (0) target = $region9
    $region8: #{tpu_custom_call.1} parent=1 // pred_region
      %22 = dma.done [#allocation3], 128
    $region9: #{tpu_custom_call.1} parent=1 // pred_fallthru
      _
    %v23 = vld [vmem:[#allocation2] sm:$0xff]
    %s25 = sor.u32 256, 1
    %26 = vrot.lane.b32.xlu0 %v23, %s25
    %v27 = vpop.permute.xlu0 %26
    %28 = vst [vmem:[#allocation5] sm:$0xff] %v27
    // Predicated region
    $region10: #{tpu_custom_call.1} parent=1 // pred_check
      _
    $region11: #{tpu_custom_call.1} parent=1 // pred_check_branch
      %30 = sbr.rel (0) target = $region13
    $region12: #{tpu_custom_call.1} parent=1 // pred_region
      %32 = vsyncadd [#allocation4], 0
      %s34 = sshll.u32 [#allocation5], 4
      %s35 = int_to_ptr.vmem [resolvable:$true] %s34
      %s36 = sshll.u32 %s1, 4
      %s37 = int_to_ptr.hbm [resolvable:$true] %s36
      %39 = dma.vmem_to_hbm [thread:$0]  %s35, 128, %s37, [#allocation4]
    $region13: #{tpu_custom_call.1} parent=1 // pred_fallthru
      _
    // Predicated region
    $region14: #{tpu_custom_call.1} parent=1 // pred_check
      _
    $region15: #{tpu_custom_call.1} parent=1 // pred_check_branch
      %41 = sbr.rel (0) target = $region17
    $region16: #{tpu_custom_call.1} parent=1 // pred_region
      %43 = dma.done [#allocation4], 128
    $region17: #{tpu_custom_call.1} parent=1 // pred_fallthru
      _
    %44 = vsyncpa [#allocation3], 1
    %45 = vsyncpa [#allocation4], 1

// kernel: _lambda_.18
$region0: #{_lambda_.18}
  #allocation0 [shape = 'u32[]', space=smem, size = 0x4, offset = 0x4, fixed_abs, tag = 'smem constant byte address 0x4 - core index']
  #allocation1 [shape = 'u32[72,128]{1,0:T(1,128)}', space=vmem, size = 0x9000, scoped, tag = 'internal scratch']
  %s0 = inlined_call_operand.vmem [shape: bf16[16,32], index: 0, kind: input, shape index: {}]
  %s1 = inlined_call_operand.vmem [shape: bf16[1,32], index: 1, kind: input, shape index: {}]
  %s2 = inlined_call_operand.vmem [shape: bf16[1,32], index: 2, kind: input, shape index: {}]
  %s3 = inlined_call_operand.vmem [shape: bf16[32,96], index: 3, kind: input, shape index: {}]
  %s4 = inlined_call_operand.vmem [shape: bf16[1,96], index: 4, kind: input, shape index: {}]
  %s5 = inlined_call_operand.vmem [shape: bf16[16,96], index: 5, kind: output, shape index: {}]
  %s6 = sld [smem:[#allocation0]]
  $region30: #{_lambda_.18} parent=0
    _
  %s8 = ssub.s32 1, %s6
  %s9 = scalar_select 0, %s8, %s6
  // Predicated region
  $region2: #{_lambda_.18} parent=0 // pred_check
    _
  $region3: #{_lambda_.18} parent=0 // pred_check_branch
    %11 = sbr.rel (0) target = $region5
  $region4: #{_lambda_.18} parent=0 // pred_region
    _
  $region5: #{_lambda_.18} parent=0 // pred_fallthru
    _
  // Predicated region
  $region6: #{_lambda_.18} parent=0 // pred_check
    _
  $region7: #{_lambda_.18} parent=0 // pred_check_branch
    %13 = sbr.rel (0) target = $region9
  $region8: #{_lambda_.18} parent=0 // pred_region
    _
  $region9: #{_lambda_.18} parent=0 // pred_fallthru
    _
  // Predicated region
  $region10: #{_lambda_.18} parent=0 // pred_check
    _
  $region11: #{_lambda_.18} parent=0 // pred_check_branch
    %15 = sbr.rel (0) target = $region13
  $region12: #{_lambda_.18} parent=0 // pred_region
    _
  $region13: #{_lambda_.18} parent=0 // pred_fallthru
    _
  // Predicated region
  $region14: #{_lambda_.18} parent=0 // pred_check
    _
  $region15: #{_lambda_.18} parent=0 // pred_check_branch
    %17 = sbr.rel (0) target = $region17
  $region16: #{_lambda_.18} parent=0 // pred_region
    _
  $region17: #{_lambda_.18} parent=0 // pred_fallthru
    _
  // Predicated region
  $region18: #{_lambda_.18} parent=0 // pred_check
    _
  $region19: #{_lambda_.18} parent=0 // pred_check_branch
    %19 = sbr.rel (0) target = $region21
  $region20: #{_lambda_.18} parent=0 // pred_region
    _
  $region21: #{_lambda_.18} parent=0 // pred_fallthru
    _
  %v21 = vld [vmem:[%s0] sm:$0xf]
  %v22 = vld [vmem:[%s0 + $0x4] sm:$0xf]
  %v23 = vunpack.c.l.bf16 %v21
  %v24 = vunpack.c.l.bf16 %v22
  %v25 = vld [vmem:[%s1] sm:$0x1]
  %v26 = vld [vmem:[%s2] sm:$0x1]
  %vm27 = vcmask 261120
  %v28 = vsel %vm27, %v23, 0.0
  %29 = vadd.xlane.f32.xlu0 %v28
  %v30 = vpop.xlane.xlu0 %29
  %v31 = vsel %vm27, %v24, 0.0
  %32 = vadd.xlane.f32.xlu0 %v31
  %v33 = vpop.xlane.xlu0 %32
  %v34 = vrcp.pop 32.0
  %v35 = vmul.f32 32.0, %v34
  %v36 = vsub.f32 1.0, %v35
  %v37 = vmul.f32 %v34, %v36
  %v38 = vadd.f32 %v34, %v37
  %vm39 = vweird.f32 %v34
  %v40 = vsel %vm39, %v34, %v38
  %v41 = vmul.f32 %v30, %v40
  %v42 = vmul.f32 %v33, %v40
  %v43 = vsub.f32 %v23, %v41
  %v44 = vsub.f32 %v24, %v42
  %v45 = vmul.f32 %v43, %v43
  %v46 = vmul.f32 %v44, %v44
  %v47 = vsel %vm27, %v45, 0.0
  %48 = vadd.xlane.f32.xlu0 %v47
  %v49 = vpop.xlane.xlu0 %48
  %v50 = vsel %vm27, %v46, 0.0
  %51 = vadd.xlane.f32.xlu0 %v50
  %v52 = vpop.xlane.xlu0 %51
  %v53 = vmul.f32 %v49, %v40
  %v54 = vmul.f32 %v52, %v40
  %v55 = vadd.f32 %v53, 1e-05
  %v56 = vadd.f32 %v54, 1e-05
  %v57 = vrsqrt.pop %v55
  %v58 = vmul.f32 %v57, %v55
  %v59 = vmul.f32 %v58, %v57
  %v60 = vmul.f32 0.5, %v59
  %v61 = vsub.f32 1.5, %v60
  %v62 = vmul.f32 %v57, %v61
  %vm63 = vweird.f32 %v55
  %vm64 = vweird.f32 %v57
  %vm65 = vmor %vm63, %vm64
  %v66 = vsel %vm65, %v57, %v62
  %v67 = vrsqrt.pop %v56
  %v68 = vmul.f32 %v67, %v56
  %v69 = vmul.f32 %v68, %v67
  %v70 = vmul.f32 0.5, %v69
  %v71 = vsub.f32 1.5, %v70
  %v72 = vmul.f32 %v67, %v71
  %vm73 = vweird.f32 %v56
  %vm74 = vweird.f32 %v67
  %vm75 = vmor %vm73, %vm74
  %v76 = vsel %vm75, %v67, %v72
  %v77 = vmul.f32 %v43, %v66
  %v78 = vmul.f32 %v44, %v76
  %v79 = vunpack.c.l.bf16 %v25
  %v80 = vperm.slane %v79, 0
  %v81 = vmul.f32 %v77, %v80
  %v82 = vmul.f32 %v78, %v80
  %v83 = vunpack.c.l.bf16 %v26
  %v84 = vperm.slane %v83, 0
  %v85 = vadd.f32 %v81, %v84
  %v86 = vadd.f32 %v82, %v84
  %v87 = vld [vmem:[%s3] sm:$0xf]
  %v88 = vld [vmem:[%s3 + $0x4] sm:$0xf]
  %v89 = vld [vmem:[%s3 + $0x8] sm:$0xf]
  %v90 = vld [vmem:[%s3 + $0xc] sm:$0xf]
  %v91 = vpack.c.bf16 %v86, %v85
  %v92 = vld [vmem:[%s4] sm:$0x1]
  %v93 = vunpack.c.l.bf16 %v92
  %v94 = vperm.slane %v93, 0
  %v99 = vunpack.c.l.b16 %v87
  %v100 = vunpack.c.l.b16 %v88
  %v101 = vunpack.c.l.b16 %v89
  %v102 = vunpack.c.l.b16 %v90
  %v103 = vpack.c.b16 %v100, %v99
  %v104 = vpack.c.b16 %v102, %v101
  %v108 = vsel %vm27, %v91, 0
  %110 = vmatpush.bf16.msra.mxu0 0
  %111 = vmatpush.bf16.msra.mxu0 0
  %112 = vmatpush.bf16.msra.mxu0 0
  %113 = vmatpush.bf16.msra.mxu0 0
  %114 = vmatpush.bf16.msra.mxu0 0
  %115 = vmatpush.bf16.msra.mxu0 0
  %116 = vmatpush.bf16.msra.mxu0 %v104
  %117 = vmatpush.bf16.msra.mxu0 %v103
  %118 = vmatmul.bf16.gmra.mxu0 %v108
  %v119 = vpop.f32.mrf.mxu0
  %v120 = vadd.f32 %v94, %v119
  %v121 = vpop.f32.mrf.mxu0
  %v122 = vadd.f32 %v94, %v121
  %123 = vdwg.mxu0
  %v124 = vpack.c.bf16 %v120, %v120
  %v125 = vpack.c.bf16 %v122, %v122
  %vm126 = vcmask 781312
  %127 = vst.msk [vmem:[%s5] sm:$0xf] %vm126, %v124
  %128 = vst.msk [vmem:[%s5 + $0x4] sm:$0xf] %vm126, %v125
  // Predicated region
  $region22: #{_lambda_.18} parent=0 // pred_check
    _
  $region23: #{_lambda_.18} parent=0 // pred_check_branch
    %130 = sbr.rel (0) target = $region25
  $region24: #{_lambda_.18} parent=0 // pred_region
    _
  $region25: #{_lambda_.18} parent=0 // pred_fallthru
    _
  // Predicated region
  $region26: #{_lambda_.18} parent=0 // pred_check
    _
  $region27: #{_lambda_.18} parent=0 // pred_check_branch
    %132 = sbr.rel (0) target = $region29
  $region28: #{_lambda_.18} parent=0 // pred_region
    _
  $region29: #{_lambda_.18} parent=0 // pred_fallthru
    _

// kernel: _lambda_.17
$region0: #{_lambda_.17}
  #allocation0 [shape = 'u32[]', space=smem, size = 0x4, offset = 0x4, fixed_abs, tag = 'smem constant byte address 0x4 - core index']
  #allocation1 [shape = 'u32[72,128]{1,0:T(1,128)}', space=vmem, size = 0x9000, scoped, tag = 'internal scratch']
  %s0 = inlined_call_operand.vmem [shape: bf16[16,32], index: 0, kind: input, shape index: {}]
  %s1 = inlined_call_operand.vmem [shape: bf16[1,32], index: 1, kind: input, shape index: {}]
  %s2 = inlined_call_operand.vmem [shape: bf16[1,32], index: 2, kind: input, shape index: {}]
  %s3 = inlined_call_operand.vmem [shape: bf16[32,64], index: 3, kind: input, shape index: {}]
  %s4 = inlined_call_operand.vmem [shape: bf16[1,64], index: 4, kind: input, shape index: {}]
  %s5 = inlined_call_operand.vmem [shape: bf16[64,32], index: 5, kind: input, shape index: {}]
  %s6 = inlined_call_operand.vmem [shape: bf16[1,32], index: 6, kind: input, shape index: {}]
  %s7 = inlined_call_operand.vmem [shape: bf16[16,32], index: 7, kind: output, shape index: {}]
  %s8 = sld [smem:[#allocation0]]
  $region38: #{_lambda_.17} parent=0
    _
  %s10 = ssub.s32 1, %s8
  %s11 = scalar_select 0, %s10, %s8
  // Predicated region
  $region2: #{_lambda_.17} parent=0 // pred_check
    _
  $region3: #{_lambda_.17} parent=0 // pred_check_branch
    %13 = sbr.rel (0) target = $region5
  $region4: #{_lambda_.17} parent=0 // pred_region
    _
  $region5: #{_lambda_.17} parent=0 // pred_fallthru
    _
  // Predicated region
  $region6: #{_lambda_.17} parent=0 // pred_check
    _
  $region7: #{_lambda_.17} parent=0 // pred_check_branch
    %15 = sbr.rel (0) target = $region9
  $region8: #{_lambda_.17} parent=0 // pred_region
    _
  $region9: #{_lambda_.17} parent=0 // pred_fallthru
    _
  // Predicated region
  $region10: #{_lambda_.17} parent=0 // pred_check
    _
  $region11: #{_lambda_.17} parent=0 // pred_check_branch
    %17 = sbr.rel (0) target = $region13
  $region12: #{_lambda_.17} parent=0 // pred_region
    _
  $region13: #{_lambda_.17} parent=0 // pred_fallthru
    _
  // Predicated region
  $region14: #{_lambda_.17} parent=0 // pred_check
    _
  $region15: #{_lambda_.17} parent=0 // pred_check_branch
    %19 = sbr.rel (0) target = $region17
  $region16: #{_lambda_.17} parent=0 // pred_region
    _
  $region17: #{_lambda_.17} parent=0 // pred_fallthru
    _
  // Predicated region
  $region18: #{_lambda_.17} parent=0 // pred_check
    _
  $region19: #{_lambda_.17} parent=0 // pred_check_branch
    %21 = sbr.rel (0) target = $region21
  $region20: #{_lambda_.17} parent=0 // pred_region
    _
  $region21: #{_lambda_.17} parent=0 // pred_fallthru
    _
  // Predicated region
  $region22: #{_lambda_.17} parent=0 // pred_check
    _
  $region23: #{_lambda_.17} parent=0 // pred_check_branch
    %23 = sbr.rel (0) target = $region25
  $region24: #{_lambda_.17} parent=0 // pred_region
    _
  $region25: #{_lambda_.17} parent=0 // pred_fallthru
    _
  // Predicated region
  $region26: #{_lambda_.17} parent=0 // pred_check
    _
  $region27: #{_lambda_.17} parent=0 // pred_check_branch
    %25 = sbr.rel (0) target = $region29
  $region28: #{_lambda_.17} parent=0 // pred_region
    _
  $region29: #{_lambda_.17} parent=0 // pred_fallthru
    _
  %v27 = vld [vmem:[%s0] sm:$0xf]
  %v28 = vld [vmem:[%s0 + $0x4] sm:$0xf]
  %v29 = vunpack.c.l.bf16 %v27
  %v30 = vunpack.c.l.bf16 %v28
  %v31 = vld [vmem:[%s1] sm:$0x1]
  %v32 = vld [vmem:[%s2] sm:$0x1]
  %vm33 = vcmask 261120
  %v34 = vsel %vm33, %v29, 0.0
  %35 = vadd.xlane.f32.xlu0 %v34
  %v36 = vpop.xlane.xlu0 %35
  %v37 = vsel %vm33, %v30, 0.0
  %38 = vadd.xlane.f32.xlu0 %v37
  %v39 = vpop.xlane.xlu0 %38
  %v40 = vrcp.pop 32.0
  %v41 = vmul.f32 32.0, %v40
  %v42 = vsub.f32 1.0, %v41
  %v43 = vmul.f32 %v40, %v42
  %v44 = vadd.f32 %v40, %v43
  %vm45 = vweird.f32 %v40
  %v46 = vsel %vm45, %v40, %v44
  %v47 = vmul.f32 %v36, %v46
  %v48 = vmul.f32 %v39, %v46
  %v49 = vsub.f32 %v29, %v47
  %v50 = vsub.f32 %v30, %v48
  %v51 = vmul.f32 %v49, %v49
  %v52 = vmul.f32 %v50, %v50
  %v53 = vsel %vm33, %v51, 0.0
  %54 = vadd.xlane.f32.xlu0 %v53
  %v55 = vpop.xlane.xlu0 %54
  %v56 = vsel %vm33, %v52, 0.0
  %57 = vadd.xlane.f32.xlu0 %v56
  %v58 = vpop.xlane.xlu0 %57
  %v59 = vmul.f32 %v55, %v46
  %v60 = vmul.f32 %v58, %v46
  %v61 = vadd.f32 %v59, 1e-05
  %v62 = vadd.f32 %v60, 1e-05
  %v63 = vrsqrt.pop %v61
  %v64 = vmul.f32 %v63, %v61
  %v65 = vmul.f32 %v64, %v63
  %v66 = vmul.f32 0.5, %v65
  %v67 = vsub.f32 1.5, %v66
  %v68 = vmul.f32 %v63, %v67
  %vm69 = vweird.f32 %v61
  %vm70 = vweird.f32 %v63
  %vm71 = vmor %vm69, %vm70
  %v72 = vsel %vm71, %v63, %v68
  %v73 = vrsqrt.pop %v62
  %v74 = vmul.f32 %v73, %v62
  %v75 = vmul.f32 %v74, %v73
  %v76 = vmul.f32 0.5, %v75
  %v77 = vsub.f32 1.5, %v76
  %v78 = vmul.f32 %v73, %v77
  %vm79 = vweird.f32 %v62
  %vm80 = vweird.f32 %v73
  %vm81 = vmor %vm79, %vm80
  %v82 = vsel %vm81, %v73, %v78
  %v83 = vmul.f32 %v49, %v72
  %v84 = vmul.f32 %v50, %v82
  %v85 = vunpack.c.l.bf16 %v31
  %v86 = vperm.slane %v85, 0
  %v87 = vmul.f32 %v83, %v86
  %v88 = vmul.f32 %v84, %v86
  %v89 = vunpack.c.l.bf16 %v32
  %v90 = vperm.slane %v89, 0
  %v91 = vadd.f32 %v87, %v90
  %v92 = vadd.f32 %v88, %v90
  %v93 = vld [vmem:[%s3] sm:$0xf]
  %v94 = vld [vmem:[%s3 + $0x4] sm:$0xf]
  %v95 = vld [vmem:[%s3 + $0x8] sm:$0xf]
  %v96 = vld [vmem:[%s3 + $0xc] sm:$0xf]
  %v97 = vpack.c.bf16 %v92, %v91
  %v98 = vld [vmem:[%s4] sm:$0x1]
  %v99 = vunpack.c.l.bf16 %v98
  %v100 = vperm.slane %v99, 0
  %v105 = vunpack.c.l.b16 %v93
  %v106 = vunpack.c.l.b16 %v94
  %v107 = vunpack.c.l.b16 %v95
  %v108 = vunpack.c.l.b16 %v96
  %v109 = vpack.c.b16 %v106, %v105
  %v110 = vpack.c.b16 %v108, %v107
  %v114 = vsel %vm33, %v97, 0
  %116 = vmatpush.bf16.msra.mxu0 0
  %117 = vmatpush.bf16.msra.mxu0 0
  %118 = vmatpush.bf16.msra.mxu0 0
  %119 = vmatpush.bf16.msra.mxu0 0
  %120 = vmatpush.bf16.msra.mxu0 0
  %121 = vmatpush.bf16.msra.mxu0 0
  %122 = vmatpush.bf16.msra.mxu0 %v110
  %123 = vmatpush.bf16.msra.mxu0 %v109
  %124 = vmatmul.bf16.gmra.mxu0 %v114
  %v125 = vpop.f32.mrf.mxu0
  %v126 = vadd.f32 %v100, %v125
  %v127 = vpop.f32.mrf.mxu0
  %v128 = vadd.f32 %v100, %v127
  %129 = vdwg.mxu0
  %v130 = vxor.u32 %v126, 2147483648
  %v131 = vxor.u32 %v128, 2147483648
  %v132 = vmul.f32 %v130, 1.442695
  %v133 = vpow.pop %v132
  %v134 = vmul.f32 %v131, 1.442695
  %v135 = vpow.pop %v134
  %v136 = vadd.f32 %v133, 1.0
  %v137 = vadd.f32 %v135, 1.0
  %v138 = vrcp.pop %v136
  %v139 = vmul.f32 %v136, %v138
  %v140 = vsub.f32 1.0, %v139
  %v141 = vmul.f32 %v138, %v140
  %v142 = vadd.f32 %v138, %v141
  %vm143 = vweird.f32 %v136
  %vm144 = vweird.f32 %v138
  %vm145 = vmor %vm143, %vm144
  %v146 = vsel %vm145, %v138, %v142
  %v147 = vand.u32 2147483647, %v136
  %vm148 = vcmp.eq.f32.partialorder %v147, 8.507059e+37
  %v149 = vand.u32 %v136, 2147483648
  %v150 = vor.u32 1.1754944e-38, %v149
  %v151 = vsel %vm148, %v150, %v146
  %v152 = vmul.f32 1.0, %v151
  %v153 = vrcp.pop %v137
  %v154 = vmul.f32 %v137, %v153
  %v155 = vsub.f32 1.0, %v154
  %v156 = vmul.f32 %v153, %v155
  %v157 = vadd.f32 %v153, %v156
  %vm158 = vweird.f32 %v137
  %vm159 = vweird.f32 %v153
  %vm160 = vmor %vm158, %vm159
  %v161 = vsel %vm160, %v153, %v157
  %v162 = vand.u32 2147483647, %v137
  %vm163 = vcmp.eq.f32.partialorder %v162, 8.507059e+37
  %v164 = vand.u32 %v137, 2147483648
  %v165 = vor.u32 1.1754944e-38, %v164
  %v166 = vsel %vm163, %v165, %v161
  %v167 = vmul.f32 1.0, %v166
  %v168 = vmul.f32 %v126, %v152
  %v169 = vmul.f32 %v128, %v167
  %v170 = vld [vmem:[%s5] sm:$0xf]
  %v171 = vld [vmem:[%s5 + $0x4] sm:$0xf]
  %v172 = vld [vmem:[%s5 + $0x8] sm:$0xf]
  %v173 = vld [vmem:[%s5 + $0xc] sm:$0xf]
  %v174 = vld [vmem:[%s5 + $0x10] sm:$0xf]
  %v175 = vld [vmem:[%s5 + $0x14] sm:$0xf]
  %v176 = vld [vmem:[%s5 + $0x18] sm:$0xf]
  %v177 = vld [vmem:[%s5 + $0x1c] sm:$0xf]
  %v178 = vpack.c.bf16 %v169, %v168
  %v179 = vld [vmem:[%s6] sm:$0x1]
  %v180 = vunpack.c.l.bf16 %v179
  %v181 = vperm.slane %v180, 0
  %v190 = vunpack.c.l.b16 %v170
  %v191 = vunpack.c.l.b16 %v171
  %v192 = vunpack.c.l.b16 %v172
  %v193 = vunpack.c.l.b16 %v173
  %v194 = vunpack.c.l.b16 %v174
  %v195 = vunpack.c.l.b16 %v175
  %v196 = vunpack.c.l.b16 %v176
  %v197 = vunpack.c.l.b16 %v177
  %v198 = vpack.c.b16 %v191, %v190
  %v199 = vpack.c.b16 %v193, %v192
  %v200 = vpack.c.b16 %v195, %v194
  %v201 = vpack.c.b16 %v197, %v196
  %vm206 = vcmask 523264
  %v208 = vsel %vm206, %v178, 0
  %210 = vmatpush.bf16.msra.mxu0 0
  %211 = vmatpush.bf16.msra.mxu0 0
  %212 = vmatpush.bf16.msra.mxu0 0
  %213 = vmatpush.bf16.msra.mxu0 0
  %214 = vmatpush.bf16.msra.mxu0 %v201
  %215 = vmatpush.bf16.msra.mxu0 %v200
  %216 = vmatpush.bf16.msra.mxu0 %v199
  %217 = vmatpush.bf16.msra.mxu0 %v198
  %218 = vmatmul.bf16.gmra.mxu0 %v208
  %v219 = vpop.f32.mrf.mxu0
  %v220 = vadd.f32 %v181, %v219
  %v221 = vpop.f32.mrf.mxu0
  %v222 = vadd.f32 %v181, %v221
  %223 = vdwg.mxu0
  %v224 = vmul.f32 %v220, 0.5
  %v225 = vmul.f32 %v222, 0.5
  %v226 = vadd.f32 %v29, %v224
  %v227 = vadd.f32 %v30, %v225
  %v228 = vpack.c.bf16 %v226, %v226
  %v229 = vpack.c.bf16 %v227, %v227
  %vm230 = vcmask 257024
  %231 = vst.msk [vmem:[%s7] sm:$0xf] %vm230, %v228
  %232 = vst.msk [vmem:[%s7 + $0x4] sm:$0xf] %vm230, %v229
  // Predicated region
  $region30: #{_lambda_.17} parent=0 // pred_check
    _
  $region31: #{_lambda_.17} parent=0 // pred_check_branch
    %234 = sbr.rel (0) target = $region33
  $region32: #{_lambda_.17} parent=0 // pred_region
    _
  $region33: #{_lambda_.17} parent=0 // pred_fallthru
    _
  // Predicated region
  $region34: #{_lambda_.17} parent=0 // pred_check
    _
  $region35: #{_lambda_.17} parent=0 // pred_check_branch
    %236 = sbr.rel (0) target = $region37
  $region36: #{_lambda_.17} parent=0 // pred_region
    _
  $region37: #{_lambda_.17} parent=0 // pred_fallthru
    _

// kernel: _lambda_.19
$region0: #{_lambda_.19}
  #allocation0 [shape = 'u32[]', space=smem, size = 0x4, offset = 0x4, fixed_abs, tag = 'smem constant byte address 0x4 - core index']
  #allocation1 [shape = 'u32[72,128]{1,0:T(1,128)}', space=vmem, size = 0x9000, scoped, tag = 'internal scratch']
  %s0 = inlined_call_operand.vmem [shape: bf16[128,32], index: 0, kind: input, shape index: {}]
  %s1 = inlined_call_operand.vmem [shape: bf16[32,32], index: 1, kind: input, shape index: {}]
  %s2 = inlined_call_operand.vmem [shape: bf16[1,32], index: 2, kind: input, shape index: {}]
  %s3 = inlined_call_operand.vmem [shape: bf16[128,32], index: 3, kind: output, shape index: {}]
  %s4 = sld [smem:[#allocation0]]
  $region22: #{_lambda_.19} parent=0
    _
  %s6 = ssub.s32 1, %s4
  %s7 = scalar_select 0, %s6, %s4
  // Predicated region
  $region2: #{_lambda_.19} parent=0 // pred_check
    _
  $region3: #{_lambda_.19} parent=0 // pred_check_branch
    %9 = sbr.rel (0) target = $region5
  $region4: #{_lambda_.19} parent=0 // pred_region
    _
  $region5: #{_lambda_.19} parent=0 // pred_fallthru
    _
  // Predicated region
  $region6: #{_lambda_.19} parent=0 // pred_check
    _
  $region7: #{_lambda_.19} parent=0 // pred_check_branch
    %11 = sbr.rel (0) target = $region9
  $region8: #{_lambda_.19} parent=0 // pred_region
    _
  $region9: #{_lambda_.19} parent=0 // pred_fallthru
    _
  // Predicated region
  $region10: #{_lambda_.19} parent=0 // pred_check
    _
  $region11: #{_lambda_.19} parent=0 // pred_check_branch
    %13 = sbr.rel (0) target = $region13
  $region12: #{_lambda_.19} parent=0 // pred_region
    _
  $region13: #{_lambda_.19} parent=0 // pred_fallthru
    _
  %v15 = vld [vmem:[%s0] sm:$0xf]
  %v16 = vld [vmem:[%s0 + $0x4] sm:$0xf]
  %v17 = vld [vmem:[%s0 + $0x8] sm:$0xf]
  %v18 = vld [vmem:[%s0 + $0xc] sm:$0xf]
  %v19 = vld [vmem:[%s0 + $0x10] sm:$0xf]
  %v20 = vld [vmem:[%s0 + $0x14] sm:$0xf]
  %v21 = vld [vmem:[%s0 + $0x18] sm:$0xf]
  %v22 = vld [vmem:[%s0 + $0x1c] sm:$0xf]
  %v23 = vld [vmem:[%s0 + $0x20] sm:$0xf]
  %v24 = vld [vmem:[%s0 + $0x24] sm:$0xf]
  %v25 = vld [vmem:[%s0 + $0x28] sm:$0xf]
  %v26 = vld [vmem:[%s0 + $0x2c] sm:$0xf]
  %v27 = vld [vmem:[%s0 + $0x30] sm:$0xf]
  %v28 = vld [vmem:[%s0 + $0x34] sm:$0xf]
  %v29 = vld [vmem:[%s0 + $0x38] sm:$0xf]
  %v30 = vld [vmem:[%s0 + $0x3c] sm:$0xf]
  %v31 = vld [vmem:[%s1] sm:$0xf]
  %v32 = vld [vmem:[%s1 + $0x4] sm:$0xf]
  %v33 = vld [vmem:[%s1 + $0x8] sm:$0xf]
  %v34 = vld [vmem:[%s1 + $0xc] sm:$0xf]
  %v35 = vld [vmem:[%s2] sm:$0x1]
  %v36 = vunpack.c.l.bf16 %v35
  %v37 = vperm.slane %v36, 0
  %v54 = vunpack.c.l.b16 %v15
  %v55 = vunpack.c.l.b16 %v16
  %v56 = vunpack.c.l.b16 %v17
  %v57 = vunpack.c.l.b16 %v18
  %v58 = vunpack.c.l.b16 %v19
  %v59 = vunpack.c.l.b16 %v20
  %v60 = vunpack.c.l.b16 %v21
  %v61 = vunpack.c.l.b16 %v22
  %v62 = vunpack.c.l.b16 %v23
  %v63 = vunpack.c.l.b16 %v24
  %v64 = vunpack.c.l.b16 %v25
  %v65 = vunpack.c.l.b16 %v26
  %v66 = vunpack.c.l.b16 %v27
  %v67 = vunpack.c.l.b16 %v28
  %v68 = vunpack.c.l.b16 %v29
  %v69 = vunpack.c.l.b16 %v30
  %v70 = vpack.c.b16 %v55, %v54
  %v71 = vpack.c.b16 %v57, %v56
  %v72 = vpack.c.b16 %v59, %v58
  %v73 = vpack.c.b16 %v61, %v60
  %v74 = vpack.c.b16 %v63, %v62
  %v75 = vpack.c.b16 %v65, %v64
  %v76 = vpack.c.b16 %v67, %v66
  %v77 = vpack.c.b16 %v69, %v68
  %v82 = vunpack.c.l.b16 %v31
  %v83 = vunpack.c.l.b16 %v32
  %v84 = vunpack.c.l.b16 %v33
  %v85 = vunpack.c.l.b16 %v34
  %v86 = vpack.c.b16 %v83, %v82
  %v87 = vpack.c.b16 %v85, %v84
  %vm90 = vcmask 261120
  %v92 = vsel %vm90, %v70, 0
  %v95 = vsel %vm90, %v71, 0
  %v98 = vsel %vm90, %v72, 0
  %v101 = vsel %vm90, %v73, 0
  %v104 = vsel %vm90, %v74, 0
  %v107 = vsel %vm90, %v75, 0
  %v110 = vsel %vm90, %v76, 0
  %v113 = vsel %vm90, %v77, 0
  %115 = vmatpush.bf16.msra.mxu0 0
  %116 = vmatpush.bf16.msra.mxu0 0
  %117 = vmatpush.bf16.msra.mxu0 0
  %118 = vmatpush.bf16.msra.mxu0 0
  %119 = vmatpush.bf16.msra.mxu0 0
  %120 = vmatpush.bf16.msra.mxu0 0
  %121 = vmatpush.bf16.msra.mxu0 %v87
  %122 = vmatpush.bf16.msra.mxu0 %v86
  %123 = vmatmul.bf16.gmra.mxu0 %v92
  %v124 = vpop.f32.mrf.mxu0
  %v125 = vadd.f32 %v37, %v124
  %v126 = vpop.f32.mrf.mxu0
  %v127 = vadd.f32 %v37, %v126
  %128 = vmatmul.bf16.gmra.mxu0 %v95
  %v129 = vpop.f32.mrf.mxu0
  %v130 = vadd.f32 %v37, %v129
  %v131 = vpop.f32.mrf.mxu0
  %v132 = vadd.f32 %v37, %v131
  %133 = vmatmul.bf16.gmra.mxu0 %v98
  %v134 = vpop.f32.mrf.mxu0
  %v135 = vadd.f32 %v37, %v134
  %v136 = vpop.f32.mrf.mxu0
  %v137 = vadd.f32 %v37, %v136
  %138 = vmatmul.bf16.gmra.mxu0 %v101
  %v139 = vpop.f32.mrf.mxu0
  %v140 = vadd.f32 %v37, %v139
  %v141 = vpop.f32.mrf.mxu0
  %v142 = vadd.f32 %v37, %v141
  %143 = vmatmul.bf16.gmra.mxu0 %v104
  %v144 = vpop.f32.mrf.mxu0
  %v145 = vadd.f32 %v37, %v144
  %v146 = vpop.f32.mrf.mxu0
  %v147 = vadd.f32 %v37, %v146
  %148 = vmatmul.bf16.gmra.mxu0 %v107
  %v149 = vpop.f32.mrf.mxu0
  %v150 = vadd.f32 %v37, %v149
  %v151 = vpop.f32.mrf.mxu0
  %v152 = vadd.f32 %v37, %v151
  %153 = vmatmul.bf16.gmra.mxu0 %v110
  %v154 = vpop.f32.mrf.mxu0
  %v155 = vadd.f32 %v37, %v154
  %v156 = vpop.f32.mrf.mxu0
  %v157 = vadd.f32 %v37, %v156
  %158 = vmatmul.bf16.gmra.mxu0 %v113
  %v159 = vpop.f32.mrf.mxu0
  %v160 = vadd.f32 %v37, %v159
  %v161 = vpop.f32.mrf.mxu0
  %v162 = vadd.f32 %v37, %v161
  %163 = vdwg.mxu0
  %v164 = vpack.c.bf16 %v125, %v125
  %v165 = vpack.c.bf16 %v127, %v127
  %v166 = vpack.c.bf16 %v130, %v130
  %v167 = vpack.c.bf16 %v132, %v132
  %v168 = vpack.c.bf16 %v135, %v135
  %v169 = vpack.c.bf16 %v137, %v137
  %v170 = vpack.c.bf16 %v140, %v140
  %v171 = vpack.c.bf16 %v142, %v142
  %v172 = vpack.c.bf16 %v145, %v145
  %v173 = vpack.c.bf16 %v147, %v147
  %v174 = vpack.c.bf16 %v150, %v150
  %v175 = vpack.c.bf16 %v152, %v152
  %v176 = vpack.c.bf16 %v155, %v155
  %v177 = vpack.c.bf16 %v157, %v157
  %v178 = vpack.c.bf16 %v160, %v160
  %v179 = vpack.c.bf16 %v162, %v162
  %vm180 = vcmask 257024
  %181 = vst.msk [vmem:[%s3] sm:$0xf] %vm180, %v164
  %182 = vst.msk [vmem:[%s3 + $0x4] sm:$0xf] %vm180, %v165
  %183 = vst.msk [vmem:[%s3 + $0x8] sm:$0xf] %vm180, %v166
  %184 = vst.msk [vmem:[%s3 + $0xc] sm:$0xf] %vm180, %v167
  %185 = vst.msk [vmem:[%s3 + $0x10] sm:$0xf] %vm180, %v168
  %186 = vst.msk [vmem:[%s3 + $0x14] sm:$0xf] %vm180, %v169
  %187 = vst.msk [vmem:[%s3 + $0x18] sm:$0xf] %vm180, %v170
  %188 = vst.msk [vmem:[%s3 + $0x1c] sm:$0xf] %vm180, %v171
  %189 = vst.msk [vmem:[%s3 + $0x20] sm:$0xf] %vm180, %v172
  %190 = vst.msk [vmem:[%s3 + $0x24] sm:$0xf] %vm180, %v173
  %191 = vst.msk [vmem:[%s3 + $0x28] sm:$0xf] %vm180, %v174
  %192 = vst.msk [vmem:[%s3 + $0x2c] sm:$0xf] %vm180, %v175
  %193 = vst.msk [vmem:[%s3 + $0x30] sm:$0xf] %vm180, %v176
  %194 = vst.msk [vmem:[%s3 + $0x34] sm:$0xf] %vm180, %v177
  %195 = vst.msk [vmem:[%s3 + $0x38] sm:$0xf] %vm180, %v178
  %196 = vst.msk [vmem:[%s3 + $0x3c] sm:$0xf] %vm180, %v179
  // Predicated region
  $region14: #{_lambda_.19} parent=0 // pred_check
    _
  $region15: #{_lambda_.19} parent=0 // pred_check_branch
    %198 = sbr.rel (0) target = $region17
  $region16: #{_lambda_.19} parent=0 // pred_region
    _
  $region17: #{_lambda_.19} parent=0 // pred_fallthru
    _
  // Predicated region
  $region18: #{_lambda_.19} parent=0 // pred_check
    _
  $region19: #{_lambda_.19} parent=0 // pred_check_branch
    %200 = sbr.rel (0) target = $region21
  $region20: #{_lambda_.19} parent=0 // pred_region
    _
  $region21: #{_lambda_.19} parent=0 // pred_fallthru
    _

// kernel: _lambda_.21
$region0: #{_lambda_.21}
  #allocation0 [shape = 'u32[]', space=smem, size = 0x4, offset = 0x4, fixed_abs, tag = 'smem constant byte address 0x4 - core index']
  #allocation1 [shape = 'u32[72,128]{1,0:T(1,128)}', space=vmem, size = 0x9000, scoped, tag = 'internal scratch']
  %s0 = inlined_call_operand.vmem [shape: bf16[16,32], index: 0, kind: input, shape index: {}]
  %s1 = inlined_call_operand.vmem [shape: bf16[32,32], index: 1, kind: input, shape index: {}]
  %s2 = inlined_call_operand.vmem [shape: bf16[1,32], index: 2, kind: input, shape index: {}]
  %s3 = inlined_call_operand.vmem [shape: bf16[16,32], index: 3, kind: input, shape index: {}]
  %s4 = inlined_call_operand.vmem [shape: bf16[16,32], index: 4, kind: output, shape index: {}]
  %s5 = sld [smem:[#allocation0]]
  $region26: #{_lambda_.21} parent=0
    _
  %s7 = ssub.s32 1, %s5
  %s8 = scalar_select 0, %s7, %s5
  // Predicated region
  $region2: #{_lambda_.21} parent=0 // pred_check
    _
  $region3: #{_lambda_.21} parent=0 // pred_check_branch
    %10 = sbr.rel (0) target = $region5
  $region4: #{_lambda_.21} parent=0 // pred_region
    _
  $region5: #{_lambda_.21} parent=0 // pred_fallthru
    _
  // Predicated region
  $region6: #{_lambda_.21} parent=0 // pred_check
    _
  $region7: #{_lambda_.21} parent=0 // pred_check_branch
    %12 = sbr.rel (0) target = $region9
  $region8: #{_lambda_.21} parent=0 // pred_region
    _
  $region9: #{_lambda_.21} parent=0 // pred_fallthru
    _
  // Predicated region
  $region10: #{_lambda_.21} parent=0 // pred_check
    _
  $region11: #{_lambda_.21} parent=0 // pred_check_branch
    %14 = sbr.rel (0) target = $region13
  $region12: #{_lambda_.21} parent=0 // pred_region
    _
  $region13: #{_lambda_.21} parent=0 // pred_fallthru
    _
  // Predicated region
  $region14: #{_lambda_.21} parent=0 // pred_check
    _
  $region15: #{_lambda_.21} parent=0 // pred_check_branch
    %16 = sbr.rel (0) target = $region17
  $region16: #{_lambda_.21} parent=0 // pred_region
    _
  $region17: #{_lambda_.21} parent=0 // pred_fallthru
    _
  %v18 = vld [vmem:[%s0] sm:$0xf]
  %v19 = vld [vmem:[%s0 + $0x4] sm:$0xf]
  %v20 = vld [vmem:[%s1] sm:$0xf]
  %v21 = vld [vmem:[%s1 + $0x4] sm:$0xf]
  %v22 = vld [vmem:[%s1 + $0x8] sm:$0xf]
  %v23 = vld [vmem:[%s1 + $0xc] sm:$0xf]
  %v24 = vld [vmem:[%s2] sm:$0x1]
  %v25 = vunpack.c.l.bf16 %v24
  %v26 = vperm.slane %v25, 0
  %v29 = vunpack.c.l.b16 %v18
  %v30 = vunpack.c.l.b16 %v19
  %v31 = vpack.c.b16 %v30, %v29
  %v36 = vunpack.c.l.b16 %v20
  %v37 = vunpack.c.l.b16 %v21
  %v38 = vunpack.c.l.b16 %v22
  %v39 = vunpack.c.l.b16 %v23
  %v40 = vpack.c.b16 %v37, %v36
  %v41 = vpack.c.b16 %v39, %v38
  %vm44 = vcmask 261120
  %v46 = vsel %vm44, %v31, 0
  %48 = vmatpush.bf16.msra.mxu0 0
  %49 = vmatpush.bf16.msra.mxu0 0
  %50 = vmatpush.bf16.msra.mxu0 0
  %51 = vmatpush.bf16.msra.mxu0 0
  %52 = vmatpush.bf16.msra.mxu0 0
  %53 = vmatpush.bf16.msra.mxu0 0
  %54 = vmatpush.bf16.msra.mxu0 %v41
  %55 = vmatpush.bf16.msra.mxu0 %v40
  %56 = vmatmul.bf16.gmra.mxu0 %v46
  %v57 = vpop.f32.mrf.mxu0
  %v58 = vadd.f32 %v26, %v57
  %v59 = vpop.f32.mrf.mxu0
  %v60 = vadd.f32 %v26, %v59
  %61 = vdwg.mxu0
  %v62 = vld [vmem:[%s3] sm:$0xf]
  %v63 = vld [vmem:[%s3 + $0x4] sm:$0xf]
  %v64 = vunpack.c.l.bf16 %v62
  %v65 = vunpack.c.l.bf16 %v63
  %v66 = vadd.f32 %v58, %v64
  %v67 = vadd.f32 %v60, %v65
  %v68 = vpack.c.bf16 %v66, %v66
  %v69 = vpack.c.bf16 %v67, %v67
  %vm70 = vcmask 257024
  %71 = vst.msk [vmem:[%s4] sm:$0xf] %vm70, %v68
  %72 = vst.msk [vmem:[%s4 + $0x4] sm:$0xf] %vm70, %v69
  // Predicated region
  $region18: #{_lambda_.21} parent=0 // pred_check
    _
  $region19: #{_lambda_.21} parent=0 // pred_check_branch
    %74 = sbr.rel (0) target = $region21
  $region20: #{_lambda_.21} parent=0 // pred_region
    _
  $region21: #{_lambda_.21} parent=0 // pred_fallthru
    _
  // Predicated region
  $region22: #{_lambda_.21} parent=0 // pred_check
    _
  $region23: #{_lambda_.21} parent=0 // pred_check_branch
    %76 = sbr.rel (0) target = $region25
  $region24: #{_lambda_.21} parent=0 // pred_region
    _
  $region25: #{_lambda_.21} parent=0 // pred_fallthru
    _

// kernel: _lambda_.20
$region0: #{_lambda_.20}
  #allocation0 [shape = 'u32[]', space=smem, size = 0x4, offset = 0x4, fixed_abs, tag = 'smem constant byte address 0x4 - core index']
  #allocation1 [shape = 'u32[72,128]{1,0:T(1,128)}', space=vmem, size = 0x9000, scoped, tag = 'internal scratch']
  %s0 = inlined_call_operand.vmem [shape: bf16[2,8,96], index: 0, kind: input, shape index: {}]
  %s1 = inlined_call_operand.vmem [shape: f32[2,4,8,8], index: 1, kind: input, shape index: {}]
  %s2 = inlined_call_operand.vmem [shape: bf16[4,1,8], index: 2, kind: input, shape index: {}]
  %s3 = inlined_call_operand.vmem [shape: bf16[2,8,32], index: 3, kind: output, shape index: {}]
  %s4 = sld [smem:[#allocation0]]
  $region45: #{_lambda_.20} parent=0
    _
  %s6 = ssub.s32 1, %s4
  %s7 = scalar_select 0, %s6, %s4
  loop: start=0, step=1, limit=4
  $region2: #{_lambda_.20} parent=0 // loop_pre_header
    _
  $region3: #{_lambda_.20} parent=0 // loop_header
    %s9 = sphi 0, %s13
    %p10 = scmp.ge.s32.totalorder %s9, 4
    %s19 = sphi 0, %s21
    %s22 = sphi 0, %s19
    %s23 = sphi 0, %s22
    %s39 = sphi 0, %s23
    %s45 = sphi 0, %s47
    %s48 = sphi 0, %s45
    %s49 = sphi 0, %s48
    %s65 = sphi 0, %s49
    %s69 = sphi 0, %s69
    %s71 = sphi 0, %s69
    %s72 = sphi 0, %s71
    %s86 = sphi 0, %s72
    %s92 = sphi 0, %s94
    %s95 = sphi 0, %s92
    %s96 = sphi 0, %s95
    %s112 = sphi 0, %s96
  $region4: #{_lambda_.20} parent=0 // loop_header_branch
    %12 = sbr.rel (%p10) target = $region8
  $region5: #{_lambda_.20} parent=0 // loop_body
    %s14 = ssub.s32 %s9, 1
    %s15 = ssub.s32 %s9, 2
    %s16 = sadd.s32 %s9, 1
    %s17 = ssub.s32 %s9, %s16
    %p18 = scmp.eq.s32.totalorder %s17, 0
    %s20 = sadd.s32 %s19, 1
    %s21 = scalar_select %p18, %s19, %s20
    %p24 = pneg %p18
    %p25 = scmp.eq.s32.totalorder %s9, 1
    %p26 = por %p24, %p25
    %p27 = scmp.ne.s32.totalorder %s19, %s22
    %p28 = scmp.eq.s32.totalorder %s9, 0
    %p29 = por %p27, %p28
    %p30 = scmp.ne.s32.totalorder %s19, %s22
    %p31 = scmp.eq.s32.totalorder %s14, 1
    %p32 = por %p30, %p31
    %p33 = scmp.ne.s32.totalorder %s22, %s23
    %p34 = scmp.eq.s32.totalorder %s14, 0
    %p35 = por %p33, %p34
    %p36 = scmp.ne.s32.totalorder %s22, %s23
    %p37 = scmp.eq.s32.totalorder %s15, 1
    %p38 = por %p36, %p37
    %p40 = scmp.ne.s32.totalorder %s23, %s39
    %p41 = scmp.eq.s32.totalorder %s15, 0
    %p42 = por %p40, %p41
    %s43 = ssub.s32 %s9, %s16
    %p44 = scmp.eq.s32.totalorder %s43, 0
    %s46 = sadd.s32 %s45, 1
    %s47 = scalar_select %p44, %s45, %s46
    %p50 = pneg %p44
    %p51 = scmp.eq.s32.totalorder %s9, 1
    %p52 = por %p50, %p51
    %p53 = scmp.ne.s32.totalorder %s45, %s48
    %p54 = scmp.eq.s32.totalorder %s9, 0
    %p55 = por %p53, %p54
    %p56 = scmp.ne.s32.totalorder %s45, %s48
    %p57 = scmp.eq.s32.totalorder %s14, 1
    %p58 = por %p56, %p57
    %p59 = scmp.ne.s32.totalorder %s48, %s49
    %p60 = scmp.eq.s32.totalorder %s14, 0
    %p61 = por %p59, %p60
    %p62 = scmp.ne.s32.totalorder %s48, %s49
    %p63 = scmp.eq.s32.totalorder %s15, 1
    %p64 = por %p62, %p63
    %p66 = scmp.ne.s32.totalorder %s49, %s65
    %p67 = scmp.eq.s32.totalorder %s15, 0
    %p68 = por %p66, %p67
    %s70 = sadd.s32 %s69, 1
    %p73 = scmp.eq.s32.totalorder %s9, 1
    %p74 = scmp.ne.s32.totalorder %s69, %s71
    %p75 = scmp.eq.s32.totalorder %s9, 0
    %p76 = por %p74, %p75
    %p77 = scmp.ne.s32.totalorder %s69, %s71
    %p78 = scmp.eq.s32.totalorder %s14, 1
    %p79 = por %p77, %p78
    %p80 = scmp.ne.s32.totalorder %s71, %s72
    %p81 = scmp.eq.s32.totalorder %s14, 0
    %p82 = por %p80, %p81
    %p83 = scmp.ne.s32.totalorder %s71, %s72
    %p84 = scmp.eq.s32.totalorder %s15, 1
    %p85 = por %p83, %p84
    %p87 = scmp.ne.s32.totalorder %s72, %s86
    %p88 = scmp.eq.s32.totalorder %s15, 0
    %p89 = por %p87, %p88
    %s90 = ssub.s32 %s9, %s16
    %p91 = scmp.eq.s32.totalorder %s90, 0
    %s93 = sadd.s32 %s92, 1
    %s94 = scalar_select %p91, %s92, %s93
    %p97 = pneg %p91
    %p98 = scmp.eq.s32.totalorder %s9, 1
    %p99 = por %p97, %p98
    %p100 = scmp.ne.s32.totalorder %s92, %s95
    %p101 = scmp.eq.s32.totalorder %s9, 0
    %p102 = por %p100, %p101
    %p103 = scmp.ne.s32.totalorder %s92, %s95
    %p104 = scmp.eq.s32.totalorder %s14, 1
    %p105 = por %p103, %p104
    %p106 = scmp.ne.s32.totalorder %s95, %s96
    %p107 = scmp.eq.s32.totalorder %s14, 0
    %p108 = por %p106, %p107
    %p109 = scmp.ne.s32.totalorder %s95, %s96
    %p110 = scmp.eq.s32.totalorder %s15, 1
    %p111 = por %p109, %p110
    %p113 = scmp.ne.s32.totalorder %s96, %s112
    %p114 = scmp.eq.s32.totalorder %s15, 0
    %p115 = por %p113, %p114
    %p116 = scmp.le.s32.totalorder 1, %s9
    %p117 = scmp.lt.s32.totalorder %s9, 3
    %p118 = pnand %p116, %p117
    %p119 = pneg %p118
    // Predicated region
    $region9: #{_lambda_.20} parent=5 // pred_check
      _
    $region10: #{_lambda_.20} parent=5 // pred_check_branch
      %121 = sbr.rel (%p118) target = $region12
    $region11: #{_lambda_.20} parent=5 // pred_region
      %s122 = ssub.s32 %s9, 1
      // Predicated region
      $region13: #{_lambda_.20} parent=11 // pred_check
        %p123 = pneg %p82
      $region14: #{_lambda_.20} parent=11 // pred_check_branch
        %125 = sbr.rel (%p123) target = $region16
      $region15: #{_lambda_.20} parent=11 // pred_region
        _
      $region16: #{_lambda_.20} parent=11 // pred_fallthru
        _
    $region12: #{_lambda_.20} parent=5 // pred_fallthru
      _
    %p126 = scmp.lt.s32.totalorder %s9, 2
    // Predicated region
    $region17: #{_lambda_.20} parent=5 // pred_check
      %p127 = pneg %p126
    $region18: #{_lambda_.20} parent=5 // pred_check_branch
      %129 = sbr.rel (%p127) target = $region20
    $region19: #{_lambda_.20} parent=5 // pred_region
      // Predicated region
      $region21: #{_lambda_.20} parent=19 // pred_check
        %p130 = pneg %p29
      $region22: #{_lambda_.20} parent=19 // pred_check_branch
        %132 = sbr.rel (%p130) target = $region24
      $region23: #{_lambda_.20} parent=19 // pred_region
        %p133 = scmp.lt.s32.totalorder %s9, 1
        %s134 = scalar_select %p133, %s9, 1
        %s135 = smul.addr %s134, 4
        %s136 = scalar_lea.vmem %s0, %s135
      $region24: #{_lambda_.20} parent=19 // pred_fallthru
        _
      // Predicated region
      $region25: #{_lambda_.20} parent=19 // pred_check
        %p137 = pneg %p55
      $region26: #{_lambda_.20} parent=19 // pred_check_branch
        %139 = sbr.rel (%p137) target = $region28
      $region27: #{_lambda_.20} parent=19 // pred_region
        %p140 = scmp.lt.s32.totalorder %s9, 1
        %s141 = scalar_select %p140, %s9, 1
        %s142 = smul.addr %s141, 4
        %s143 = smul.addr %s142, 8
        %s144 = scalar_lea.vmem %s1, %s143
      $region28: #{_lambda_.20} parent=19 // pred_fallthru
        _
    $region20: #{_lambda_.20} parent=5 // pred_fallthru
      _
    %p145 = scmp.le.s32.totalorder 1, %s9
    %p146 = scmp.lt.s32.totalorder %s9, 3
    %p147 = pnand %p145, %p146
    %p148 = pneg %p147
    // Predicated region
    $region29: #{_lambda_.20} parent=5 // pred_check
      _
    $region30: #{_lambda_.20} parent=5 // pred_check_branch
      %150 = sbr.rel (%p147) target = $region32
    $region31: #{_lambda_.20} parent=5 // pred_region
      %s151 = ssub.s32 %s9, 1
      %p152 = scmp.lt.s32.totalorder %s14, 1
      %s153 = scalar_select %p152, %s14, 1
      %s154 = smul.addr %s153, 4
      %s155 = scalar_lea.vmem %s0, %s154
      %p156 = pneg %p35
      %p157 = pneg %p32
      %p158 = scmp.lt.s32.totalorder %s14, 1
      %s159 = scalar_select %p158, %s14, 1
      %s160 = smul.addr %s159, 4
      %s161 = smul.addr %s160, 8
      %s162 = scalar_lea.vmem %s1, %s161
      %p163 = pneg %p61
      %p164 = pneg %p58
      %p165 = pneg %p82
      %p166 = pneg %p79
      %p167 = pneg %p108
      %p168 = pneg %p105
      %p169 = scmp.lt.s32.totalorder %s14, 1
      %s170 = scalar_select %p169, %s14, 1
      %s171 = smul.addr %s170, 4
      %s172 = scalar_lea.vmem %s3, %s171
      %p173 = scmp.lt.s32.totalorder %s14, 1
      %s174 = scalar_select %p173, %s14, 1
      %s175 = smul.addr %s174, 4
      %s176 = scalar_lea.vmem %s0, %s175
      %p177 = scmp.lt.s32.totalorder %s14, 1
      %s178 = scalar_select %p177, %s14, 1
      %s179 = smul.addr %s178, 4
      %s180 = smul.addr %s179, 8
      %s181 = scalar_lea.vmem %s1, %s180
      %p182 = scmp.lt.s32.totalorder %s14, 1
      %s183 = scalar_select %p182, %s14, 1
      %s184 = smul.addr %s183, 4
      %s185 = scalar_lea.vmem %s3, %s184
      %v187 = vld [vmem:[%s176] sm:$0xf]
      %v188 = vunpack.c.l.bf16 %v187
      %v189 = vld [vmem:[%s2] sm:$0x1]
      %v190 = vunpack.c.l.bf16 %v189
      %v191 = vperm.slane %v190, 0
      %v192 = vadd.f32 %v188, %v191
      %v193 = vpack.c.bf16 %v192, %v192
      %v194 = vld [vmem:[%s181] sm:$0xff]
      %v196 = vunpack.c.l.b16 %v187
      %v197 = vpack.c.b16 %v196, %v196
      %198 = vrot.lane.b32.xlu0 %v197, 96
      %v199 = vpop.permute.xlu0 %198
      %vm200 = vcmask 64512
      %v202 = vsel %vm200, %v193, 0
      %v205 = vsel %vm200, %v199, 0
      %207 = vmatpush.bf16.xpose.msra.mxu0 0
      %208 = vmatpush.bf16.xpose.msra.mxu0 0
      %209 = vmatpush.bf16.xpose.msra.mxu0 0
      %210 = vmatpush.bf16.xpose.msra.mxu0 0
      %211 = vmatpush.bf16.xpose.msra.mxu0 0
      %212 = vmatpush.bf16.xpose.msra.mxu0 0
      %213 = vmatpush.bf16.xpose.msra.mxu0 0
      %214 = vmatpush.bf16.xpose.msra.mxu0 %v205
      %215 = vmatmul.bf16.gmra.mxu0 %v202
      %v216 = vpop.f32.mrf.mxu0
      %v217 = vadd.f32 %v194, %v216
      %v218 = vpop.f32.mrf.mxu0
      %219 = vdwg.mxu0
      %v220 = vmul.f32 %v217, 0.35355338
      %v221 = vsel %vm200, %v220, -inf
      %222 = vmax.xlane.f32.xlu0 %v221
      %v223 = vpop.xlane.xlu0 %222
      %v224 = vsub.f32 %v220, %v223
      %v225 = vmul.f32 %v224, 1.442695
      %v226 = vpow.pop %v225
      %v227 = vsel %vm200, %v226, 0.0
      %228 = vadd.xlane.f32.xlu0 %v227
      %v229 = vpop.xlane.xlu0 %228
      %v230 = vrcp.pop %v229
      %v231 = vmul.f32 %v226, %v230
      %v232 = vpack.c.bf16 %v231, %v231
      %233 = vrot.lane.b32.xlu0 %v197, 64
      %v234 = vpop.permute.xlu0 %233
      %v236 = vsel %vm200, %v232, 0
      %vm238 = vcmask 1043456
      %v240 = vsel %vm238, %v234, 0
      %242 = vmatpush.bf16.msra.mxu0 0
      %243 = vmatpush.bf16.msra.mxu0 0
      %244 = vmatpush.bf16.msra.mxu0 0
      %245 = vmatpush.bf16.msra.mxu0 0
      %246 = vmatpush.bf16.msra.mxu0 0
      %247 = vmatpush.bf16.msra.mxu0 0
      %248 = vmatpush.bf16.msra.mxu0 0
      %249 = vmatpush.bf16.msra.mxu0 %v240
      %250 = vmatmul.bf16.gmra.mxu0 %v236
      %v251 = vpop.f32.mrf.mxu0
      %v252 = vadd.f32 0.0, %v251
      %v253 = vpop.f32.mrf.mxu0
      %254 = vdwg.mxu0
      %s255 = scalar_lea.vmem %s2, 1
      %v256 = vld [vmem:[%s255] sm:$0x1]
      %v257 = vunpack.c.l.bf16 %v256
      %v258 = vperm.slane %v257, 0
      %260 = vrot.lane.b32.xlu0 %v258, 8
      %v261 = vpop.permute.xlu0 %260
      %v263 = vadd.f32 %v188, %v261
      %v264 = vpack.c.bf16 %v263, %v263
      %s265 = scalar_lea.vmem %s181, 8
      %v266 = vld [vmem:[%s265] sm:$0xff]
      %268 = vrot.lane.b32.xlu0 %v264, 120
      %v269 = vpop.permute.xlu0 %268
      %270 = vrot.lane.b32.xlu0 %v197, 88
      %v271 = vpop.permute.xlu0 %270
      %v273 = vsel %vm200, %v269, 0
      %v276 = vsel %vm200, %v271, 0
      %278 = vmatpush.bf16.xpose.msra.mxu0 0
      %279 = vmatpush.bf16.xpose.msra.mxu0 0
      %280 = vmatpush.bf16.xpose.msra.mxu0 0
      %281 = vmatpush.bf16.xpose.msra.mxu0 0
      %282 = vmatpush.bf16.xpose.msra.mxu0 0
      %283 = vmatpush.bf16.xpose.msra.mxu0 0
      %284 = vmatpush.bf16.xpose.msra.mxu0 0
      %285 = vmatpush.bf16.xpose.msra.mxu0 %v276
      %286 = vmatmul.bf16.gmra.mxu0 %v273
      %v287 = vpop.f32.mrf.mxu0
      %v288 = vadd.f32 %v266, %v287
      %v289 = vpop.f32.mrf.mxu0
      %290 = vdwg.mxu0
      %v291 = vmul.f32 %v288, 0.35355338
      %v292 = vsel %vm200, %v291, -inf
      %293 = vmax.xlane.f32.xlu0 %v292
      %v294 = vpop.xlane.xlu0 %293
      %v295 = vsub.f32 %v291, %v294
      %v296 = vmul.f32 %v295, 1.442695
      %v297 = vpow.pop %v296
      %v298 = vsel %vm200, %v297, 0.0
      %299 = vadd.xlane.f32.xlu0 %v298
      %v300 = vpop.xlane.xlu0 %299
      %v301 = vrcp.pop %v300
      %v302 = vmul.f32 %v297, %v301
      %v303 = vpack.c.bf16 %v302, %v302
      %304 = vrot.lane.b32.xlu0 %v197, 56
      %v305 = vpop.permute.xlu0 %304
      %v307 = vsel %vm200, %v303, 0
      %v310 = vsel %vm238, %v305, 0
      %312 = vmatpush.bf16.msra.mxu0 0
      %313 = vmatpush.bf16.msra.mxu0 0
      %314 = vmatpush.bf16.msra.mxu0 0
      %315 = vmatpush.bf16.msra.mxu0 0
      %316 = vmatpush.bf16.msra.mxu0 0
      %317 = vmatpush.bf16.msra.mxu0 0
      %318 = vmatpush.bf16.msra.mxu0 0
      %319 = vmatpush.bf16.msra.mxu0 %v310
      %320 = vmatmul.bf16.gmra.mxu0 %v307
      %v321 = vpop.f32.mrf.mxu0
      %v322 = vadd.f32 0.0, %v321
      %v323 = vpop.f32.mrf.mxu0
      %324 = vdwg.mxu0
      %s325 = scalar_lea.vmem %s2, 2
      %v326 = vld [vmem:[%s325] sm:$0x1]
      %v327 = vunpack.c.l.bf16 %v326
      %v328 = vperm.slane %v327, 0
      %330 = vrot.lane.b32.xlu0 %v328, 16
      %v331 = vpop.permute.xlu0 %330
      %v333 = vadd.f32 %v188, %v331
      %v334 = vpack.c.bf16 %v333, %v333
      %s335 = scalar_lea.vmem %s181, 16
      %v336 = vld [vmem:[%s335] sm:$0xff]
      %338 = vrot.lane.b32.xlu0 %v334, 112
      %v339 = vpop.permute.xlu0 %338
      %340 = vrot.lane.b32.xlu0 %v197, 80
      %v341 = vpop.permute.xlu0 %340
      %v343 = vsel %vm200, %v339, 0
      %v346 = vsel %vm200, %v341, 0
      %348 = vmatpush.bf16.xpose.msra.mxu0 0
      %349 = vmatpush.bf16.xpose.msra.mxu0 0
      %350 = vmatpush.bf16.xpose.msra.mxu0 0
      %351 = vmatpush.bf16.xpose.msra.mxu0 0
      %352 = vmatpush.bf16.xpose.msra.mxu0 0
      %353 = vmatpush.bf16.xpose.msra.mxu0 0
      %354 = vmatpush.bf16.xpose.msra.mxu0 0
      %355 = vmatpush.bf16.xpose.msra.mxu0 %v346
      %356 = vmatmul.bf16.gmra.mxu0 %v343
      %v357 = vpop.f32.mrf.mxu0
      %v358 = vadd.f32 %v336, %v357
      %v359 = vpop.f32.mrf.mxu0
      %360 = vdwg.mxu0
      %v361 = vmul.f32 %v358, 0.35355338
      %v362 = vsel %vm200, %v361, -inf
      %363 = vmax.xlane.f32.xlu0 %v362
      %v364 = vpop.xlane.xlu0 %363
      %v365 = vsub.f32 %v361, %v364
      %v366 = vmul.f32 %v365, 1.442695
      %v367 = vpow.pop %v366
      %v368 = vsel %vm200, %v367, 0.0
      %369 = vadd.xlane.f32.xlu0 %v368
      %v370 = vpop.xlane.xlu0 %369
      %v371 = vrcp.pop %v370
      %v372 = vmul.f32 %v367, %v371
      %v373 = vpack.c.bf16 %v372, %v372
      %374 = vrot.lane.b32.xlu0 %v197, 48
      %v375 = vpop.permute.xlu0 %374
      %v377 = vsel %vm200, %v373, 0
      %v380 = vsel %vm238, %v375, 0
      %382 = vmatpush.bf16.msra.mxu0 0
      %383 = vmatpush.bf16.msra.mxu0 0
      %384 = vmatpush.bf16.msra.mxu0 0
      %385 = vmatpush.bf16.msra.mxu0 0
      %386 = vmatpush.bf16.msra.mxu0 0
      %387 = vmatpush.bf16.msra.mxu0 0
      %388 = vmatpush.bf16.msra.mxu0 0
      %389 = vmatpush.bf16.msra.mxu0 %v380
      %390 = vmatmul.bf16.gmra.mxu0 %v377
      %v391 = vpop.f32.mrf.mxu0
      %v392 = vadd.f32 0.0, %v391
      %v393 = vpop.f32.mrf.mxu0
      %394 = vdwg.mxu0
      %s395 = scalar_lea.vmem %s2, 3
      %v396 = vld [vmem:[%s395] sm:$0x1]
      %v397 = vunpack.c.l.bf16 %v396
      %v398 = vperm.slane %v397, 0
      %400 = vrot.lane.b32.xlu0 %v398, 24
      %v401 = vpop.permute.xlu0 %400
      %v403 = vadd.f32 %v188, %v401
      %v404 = vpack.c.bf16 %v403, %v403
      %s405 = scalar_lea.vmem %s181, 24
      %v406 = vld [vmem:[%s405] sm:$0xff]
      %408 = vrot.lane.b32.xlu0 %v404, 104
      %v409 = vpop.permute.xlu0 %408
      %410 = vrot.lane.b32.xlu0 %v197, 72
      %v411 = vpop.permute.xlu0 %410
      %v413 = vsel %vm200, %v409, 0
      %v416 = vsel %vm200, %v411, 0
      %418 = vmatpush.bf16.xpose.msra.mxu0 0
      %419 = vmatpush.bf16.xpose.msra.mxu0 0
      %420 = vmatpush.bf16.xpose.msra.mxu0 0
      %421 = vmatpush.bf16.xpose.msra.mxu0 0
      %422 = vmatpush.bf16.xpose.msra.mxu0 0
      %423 = vmatpush.bf16.xpose.msra.mxu0 0
      %424 = vmatpush.bf16.xpose.msra.mxu0 0
      %425 = vmatpush.bf16.xpose.msra.mxu0 %v416
      %426 = vmatmul.bf16.gmra.mxu0 %v413
      %v427 = vpop.f32.mrf.mxu0
      %v428 = vadd.f32 %v406, %v427
      %v429 = vpop.f32.mrf.mxu0
      %430 = vdwg.mxu0
      %v431 = vmul.f32 %v428, 0.35355338
      %v432 = vsel %vm200, %v431, -inf
      %433 = vmax.xlane.f32.xlu0 %v432
      %v434 = vpop.xlane.xlu0 %433
      %v435 = vsub.f32 %v431, %v434
      %v436 = vmul.f32 %v435, 1.442695
      %v437 = vpow.pop %v436
      %v438 = vsel %vm200, %v437, 0.0
      %439 = vadd.xlane.f32.xlu0 %v438
      %v440 = vpop.xlane.xlu0 %439
      %v441 = vrcp.pop %v440
      %v442 = vmul.f32 %v437, %v441
      %v443 = vpack.c.bf16 %v442, %v442
      %444 = vrot.lane.b32.xlu0 %v197, 40
      %v445 = vpop.permute.xlu0 %444
      %v447 = vsel %vm200, %v443, 0
      %v450 = vsel %vm238, %v445, 0
      %452 = vmatpush.bf16.msra.mxu0 0
      %453 = vmatpush.bf16.msra.mxu0 0
      %454 = vmatpush.bf16.msra.mxu0 0
      %455 = vmatpush.bf16.msra.mxu0 0
      %456 = vmatpush.bf16.msra.mxu0 0
      %457 = vmatpush.bf16.msra.mxu0 0
      %458 = vmatpush.bf16.msra.mxu0 0
      %459 = vmatpush.bf16.msra.mxu0 %v450
      %460 = vmatmul.bf16.gmra.mxu0 %v447
      %v461 = vpop.f32.mrf.mxu0
      %v462 = vadd.f32 0.0, %v461
      %v463 = vpop.f32.mrf.mxu0
      %464 = vdwg.mxu0
      %466 = vrot.lane.b32.xlu0 %v322, 8
      %v467 = vpop.permute.xlu0 %466
      %470 = vrot.lane.b32.xlu0 %v392, 16
      %v471 = vpop.permute.xlu0 %470
      %474 = vrot.lane.b32.xlu0 %v462, 24
      %v475 = vpop.permute.xlu0 %474
      %v477 = vsel %vm200, %v252, %v467
      %vm478 = vcmask 130048
      %v479 = vsel %vm478, %v477, %v471
      %vm480 = vcmask 195584
      %v481 = vsel %vm480, %v479, %v475
      %v482 = vpack.c.bf16 %v481, %v481
      %vm483 = vcmask 257024
      %484 = vst.msk [vmem:[%s185] sm:$0xf] %vm483, %v482
      %p485 = scmp.lt.s32.totalorder %s14, 1
      %s486 = scalar_select %p485, %s14, 1
      %s487 = smul.addr %s486, 4
      %s488 = scalar_lea.vmem %s3, %s487
      // Predicated region
      $region33: #{_lambda_.20} parent=31 // pred_check
        %p489 = pneg %p105
      $region34: #{_lambda_.20} parent=31 // pred_check_branch
        %491 = sbr.rel (%p489) target = $region36
      $region35: #{_lambda_.20} parent=31 // pred_region
        _
      $region36: #{_lambda_.20} parent=31 // pred_fallthru
        _
    $region32: #{_lambda_.20} parent=5 // pred_fallthru
      _
    %p492 = scmp.le.s32.totalorder 2, %s9
    // Predicated region
    $region37: #{_lambda_.20} parent=5 // pred_check
      %p493 = pneg %p492
    $region38: #{_lambda_.20} parent=5 // pred_check_branch
      %495 = sbr.rel (%p493) target = $region40
    $region39: #{_lambda_.20} parent=5 // pred_region
      %s496 = ssub.s32 %s9, 2
      // Predicated region
      $region41: #{_lambda_.20} parent=39 // pred_check
        %p497 = pneg %p111
      $region42: #{_lambda_.20} parent=39 // pred_check_branch
        %499 = sbr.rel (%p497) target = $region44
      $region43: #{_lambda_.20} parent=39 // pred_region
        %p500 = scmp.lt.s32.totalorder %s15, 1
        %s501 = scalar_select %p500, %s15, 1
        %s502 = smul.addr %s501, 4
        %s503 = scalar_lea.vmem %s3, %s502
      $region44: #{_lambda_.20} parent=39 // pred_fallthru
        _
    $region40: #{_lambda_.20} parent=5 // pred_fallthru
      _
  $region6: #{_lambda_.20} parent=0 // loop_footer
    %s13 = sadd.s32 1, %s9
  $region7: #{_lambda_.20} parent=0 // loop_footer_branch
    %8 = sbr.rel target = $region3
  $region8: #{_lambda_.20} parent=0 // loop_exit
    _

// kernel: _lambda_.22
$region0: #{_lambda_.22}
  #allocation0 [shape = 'u32[]', space=smem, size = 0x4, offset = 0x4, fixed_abs, tag = 'smem constant byte address 0x4 - core index']
  #allocation1 [shape = 'u32[72,128]{1,0:T(1,128)}', space=vmem, size = 0x9000, scoped, tag = 'internal scratch']
  %s0 = inlined_call_operand.vmem [shape: bf16[16,32], index: 0, kind: input, shape index: {}]
  %s1 = inlined_call_operand.vmem [shape: bf16[1,32], index: 1, kind: input, shape index: {}]
  %s2 = inlined_call_operand.vmem [shape: bf16[1,32], index: 2, kind: input, shape index: {}]
  %s3 = inlined_call_operand.vmem [shape: bf16[32,32], index: 3, kind: input, shape index: {}]
  %s4 = inlined_call_operand.vmem [shape: bf16[1,32], index: 4, kind: input, shape index: {}]
  %s5 = inlined_call_operand.vmem [shape: bf16[32,32], index: 5, kind: input, shape index: {}]
  %s6 = inlined_call_operand.vmem [shape: bf16[1,32], index: 6, kind: input, shape index: {}]
  %s7 = inlined_call_operand.vmem [shape: bf16[16,32], index: 7, kind: output, shape index: {}]
  %s8 = sld [smem:[#allocation0]]
  $region38: #{_lambda_.22} parent=0
    _
  %s10 = ssub.s32 1, %s8
  %s11 = scalar_select 0, %s10, %s8
  // Predicated region
  $region2: #{_lambda_.22} parent=0 // pred_check
    _
  $region3: #{_lambda_.22} parent=0 // pred_check_branch
    %13 = sbr.rel (0) target = $region5
  $region4: #{_lambda_.22} parent=0 // pred_region
    _
  $region5: #{_lambda_.22} parent=0 // pred_fallthru
    _
  // Predicated region
  $region6: #{_lambda_.22} parent=0 // pred_check
    _
  $region7: #{_lambda_.22} parent=0 // pred_check_branch
    %15 = sbr.rel (0) target = $region9
  $region8: #{_lambda_.22} parent=0 // pred_region
    _
  $region9: #{_lambda_.22} parent=0 // pred_fallthru
    _
  // Predicated region
  $region10: #{_lambda_.22} parent=0 // pred_check
    _
  $region11: #{_lambda_.22} parent=0 // pred_check_branch
    %17 = sbr.rel (0) target = $region13
  $region12: #{_lambda_.22} parent=0 // pred_region
    _
  $region13: #{_lambda_.22} parent=0 // pred_fallthru
    _
  // Predicated region
  $region14: #{_lambda_.22} parent=0 // pred_check
    _
  $region15: #{_lambda_.22} parent=0 // pred_check_branch
    %19 = sbr.rel (0) target = $region17
  $region16: #{_lambda_.22} parent=0 // pred_region
    _
  $region17: #{_lambda_.22} parent=0 // pred_fallthru
    _
  // Predicated region
  $region18: #{_lambda_.22} parent=0 // pred_check
    _
  $region19: #{_lambda_.22} parent=0 // pred_check_branch
    %21 = sbr.rel (0) target = $region21
  $region20: #{_lambda_.22} parent=0 // pred_region
    _
  $region21: #{_lambda_.22} parent=0 // pred_fallthru
    _
  // Predicated region
  $region22: #{_lambda_.22} parent=0 // pred_check
    _
  $region23: #{_lambda_.22} parent=0 // pred_check_branch
    %23 = sbr.rel (0) target = $region25
  $region24: #{_lambda_.22} parent=0 // pred_region
    _
  $region25: #{_lambda_.22} parent=0 // pred_fallthru
    _
  // Predicated region
  $region26: #{_lambda_.22} parent=0 // pred_check
    _
  $region27: #{_lambda_.22} parent=0 // pred_check_branch
    %25 = sbr.rel (0) target = $region29
  $region28: #{_lambda_.22} parent=0 // pred_region
    _
  $region29: #{_lambda_.22} parent=0 // pred_fallthru
    _
  %v27 = vld [vmem:[%s0] sm:$0xf]
  %v28 = vld [vmem:[%s0 + $0x4] sm:$0xf]
  %v29 = vld [vmem:[%s1] sm:$0x1]
  %v30 = vld [vmem:[%s2] sm:$0x1]
  %v31 = vunpack.c.l.bf16 %v27
  %v32 = vunpack.c.l.bf16 %v28
  %vm33 = vcmask 261120
  %v34 = vsel %vm33, %v31, 0.0
  %35 = vadd.xlane.f32.xlu0 %v34
  %v36 = vpop.xlane.xlu0 %35
  %v37 = vsel %vm33, %v32, 0.0
  %38 = vadd.xlane.f32.xlu0 %v37
  %v39 = vpop.xlane.xlu0 %38
  %v40 = vrcp.pop 32.0
  %v41 = vmul.f32 32.0, %v40
  %v42 = vsub.f32 1.0, %v41
  %v43 = vmul.f32 %v40, %v42
  %v44 = vadd.f32 %v40, %v43
  %vm45 = vweird.f32 %v40
  %v46 = vsel %vm45, %v40, %v44
  %v47 = vmul.f32 %v36, %v46
  %v48 = vmul.f32 %v39, %v46
  %v49 = vsub.f32 %v31, %v47
  %v50 = vsub.f32 %v32, %v48
  %v51 = vmul.f32 %v49, %v49
  %v52 = vmul.f32 %v50, %v50
  %v53 = vsel %vm33, %v51, 0.0
  %54 = vadd.xlane.f32.xlu0 %v53
  %v55 = vpop.xlane.xlu0 %54
  %v56 = vsel %vm33, %v52, 0.0
  %57 = vadd.xlane.f32.xlu0 %v56
  %v58 = vpop.xlane.xlu0 %57
  %v59 = vmul.f32 %v55, %v46
  %v60 = vmul.f32 %v58, %v46
  %v61 = vadd.f32 %v59, 1e-05
  %v62 = vadd.f32 %v60, 1e-05
  %v63 = vrsqrt.pop %v61
  %v64 = vmul.f32 %v63, %v61
  %v65 = vmul.f32 %v64, %v63
  %v66 = vmul.f32 0.5, %v65
  %v67 = vsub.f32 1.5, %v66
  %v68 = vmul.f32 %v63, %v67
  %vm69 = vweird.f32 %v61
  %vm70 = vweird.f32 %v63
  %vm71 = vmor %vm69, %vm70
  %v72 = vsel %vm71, %v63, %v68
  %v73 = vrsqrt.pop %v62
  %v74 = vmul.f32 %v73, %v62
  %v75 = vmul.f32 %v74, %v73
  %v76 = vmul.f32 0.5, %v75
  %v77 = vsub.f32 1.5, %v76
  %v78 = vmul.f32 %v73, %v77
  %vm79 = vweird.f32 %v62
  %vm80 = vweird.f32 %v73
  %vm81 = vmor %vm79, %vm80
  %v82 = vsel %vm81, %v73, %v78
  %v83 = vmul.f32 %v49, %v72
  %v84 = vmul.f32 %v50, %v82
  %v85 = vunpack.c.l.bf16 %v29
  %v86 = vperm.slane %v85, 0
  %v87 = vmul.f32 %v83, %v86
  %v88 = vmul.f32 %v84, %v86
  %v89 = vunpack.c.l.bf16 %v30
  %v90 = vperm.slane %v89, 0
  %v91 = vadd.f32 %v87, %v90
  %v92 = vadd.f32 %v88, %v90
  %v93 = vld [vmem:[%s3] sm:$0xf]
  %v94 = vld [vmem:[%s3 + $0x4] sm:$0xf]
  %v95 = vld [vmem:[%s3 + $0x8] sm:$0xf]
  %v96 = vld [vmem:[%s3 + $0xc] sm:$0xf]
  %v97 = vpack.c.bf16 %v92, %v91
  %v98 = vld [vmem:[%s4] sm:$0x1]
  %v99 = vunpack.c.l.bf16 %v98
  %v100 = vperm.slane %v99, 0
  %v105 = vunpack.c.l.b16 %v93
  %v106 = vunpack.c.l.b16 %v94
  %v107 = vunpack.c.l.b16 %v95
  %v108 = vunpack.c.l.b16 %v96
  %v109 = vpack.c.b16 %v106, %v105
  %v110 = vpack.c.b16 %v108, %v107
  %v114 = vsel %vm33, %v97, 0
  %116 = vmatpush.bf16.msra.mxu0 0
  %117 = vmatpush.bf16.msra.mxu0 0
  %118 = vmatpush.bf16.msra.mxu0 0
  %119 = vmatpush.bf16.msra.mxu0 0
  %120 = vmatpush.bf16.msra.mxu0 0
  %121 = vmatpush.bf16.msra.mxu0 0
  %122 = vmatpush.bf16.msra.mxu0 %v110
  %123 = vmatpush.bf16.msra.mxu0 %v109
  %124 = vmatmul.bf16.gmra.mxu0 %v114
  %v125 = vpop.f32.mrf.mxu0
  %v126 = vadd.f32 %v100, %v125
  %v127 = vpop.f32.mrf.mxu0
  %v128 = vadd.f32 %v100, %v127
  %129 = vdwg.mxu0
  %v130 = vld [vmem:[%s5] sm:$0xf]
  %v131 = vld [vmem:[%s5 + $0x4] sm:$0xf]
  %v132 = vld [vmem:[%s5 + $0x8] sm:$0xf]
  %v133 = vld [vmem:[%s5 + $0xc] sm:$0xf]
  %v134 = vld [vmem:[%s6] sm:$0x1]
  %v135 = vunpack.c.l.bf16 %v134
  %v136 = vperm.slane %v135, 0
  %v141 = vunpack.c.l.b16 %v130
  %v142 = vunpack.c.l.b16 %v131
  %v143 = vunpack.c.l.b16 %v132
  %v144 = vunpack.c.l.b16 %v133
  %v145 = vpack.c.b16 %v142, %v141
  %v146 = vpack.c.b16 %v144, %v143
  %149 = vmatpush.bf16.msra.mxu0 0
  %150 = vmatpush.bf16.msra.mxu0 0
  %151 = vmatpush.bf16.msra.mxu0 0
  %152 = vmatpush.bf16.msra.mxu0 0
  %153 = vmatpush.bf16.msra.mxu0 0
  %154 = vmatpush.bf16.msra.mxu0 0
  %155 = vmatpush.bf16.msra.mxu0 %v146
  %156 = vmatpush.bf16.msra.mxu0 %v145
  %157 = vmatmul.bf16.gmra.mxu0 %v114
  %v158 = vpop.f32.mrf.mxu0
  %v159 = vadd.f32 %v136, %v158
  %v160 = vpop.f32.mrf.mxu0
  %v161 = vadd.f32 %v136, %v160
  %162 = vdwg.mxu0
  %v163 = vxor.u32 %v159, 2147483648
  %v164 = vxor.u32 %v161, 2147483648
  %v165 = vmul.f32 %v163, 1.442695
  %v166 = vpow.pop %v165
  %v167 = vmul.f32 %v164, 1.442695
  %v168 = vpow.pop %v167
  %v169 = vadd.f32 %v166, 1.0
  %v170 = vadd.f32 %v168, 1.0
  %v171 = vrcp.pop %v169
  %v172 = vmul.f32 %v169, %v171
  %v173 = vsub.f32 1.0, %v172
  %v174 = vmul.f32 %v171, %v173
  %v175 = vadd.f32 %v171, %v174
  %vm176 = vweird.f32 %v169
  %vm177 = vweird.f32 %v171
  %vm178 = vmor %vm176, %vm177
  %v179 = vsel %vm178, %v171, %v175
  %v180 = vand.u32 2147483647, %v169
  %vm181 = vcmp.eq.f32.partialorder %v180, 8.507059e+37
  %v182 = vand.u32 %v169, 2147483648
  %v183 = vor.u32 1.1754944e-38, %v182
  %v184 = vsel %vm181, %v183, %v179
  %v185 = vmul.f32 1.0, %v184
  %v186 = vrcp.pop %v170
  %v187 = vmul.f32 %v170, %v186
  %v188 = vsub.f32 1.0, %v187
  %v189 = vmul.f32 %v186, %v188
  %v190 = vadd.f32 %v186, %v189
  %vm191 = vweird.f32 %v170
  %vm192 = vweird.f32 %v186
  %vm193 = vmor %vm191, %vm192
  %v194 = vsel %vm193, %v186, %v190
  %v195 = vand.u32 2147483647, %v170
  %vm196 = vcmp.eq.f32.partialorder %v195, 8.507059e+37
  %v197 = vand.u32 %v170, 2147483648
  %v198 = vor.u32 1.1754944e-38, %v197
  %v199 = vsel %vm196, %v198, %v194
  %v200 = vmul.f32 1.0, %v199
  %v201 = vmul.f32 %v126, %v185
  %v202 = vmul.f32 %v128, %v200
  %v203 = vpack.c.bf16 %v201, %v201
  %v204 = vpack.c.bf16 %v202, %v202
  %vm205 = vcmask 257024
  %206 = vst.msk [vmem:[%s7] sm:$0xf] %vm205, %v203
  %207 = vst.msk [vmem:[%s7 + $0x4] sm:$0xf] %vm205, %v204
  // Predicated region
  $region30: #{_lambda_.22} parent=0 // pred_check
    _
  $region31: #{_lambda_.22} parent=0 // pred_check_branch
    %209 = sbr.rel (0) target = $region33
  $region32: #{_lambda_.22} parent=0 // pred_region
    _
  $region33: #{_lambda_.22} parent=0 // pred_fallthru
    _
  // Predicated region
  $region34: #{_lambda_.22} parent=0 // pred_check
    _
  $region35: #{_lambda_.22} parent=0 // pred_check_branch
    %211 = sbr.rel (0) target = $region37
  $region36: #{_lambda_.22} parent=0 // pred_region
    _
  $region37: #{_lambda_.22} parent=0 // pred_fallthru
    _

// kernel: _lambda_.23
$region0: #{_lambda_.23}
  #allocation0 [shape = 'u32[]', space=smem, size = 0x4, offset = 0x4, fixed_abs, tag = 'smem constant byte address 0x4 - core index']
  #allocation1 [shape = 'u32[72,128]{1,0:T(1,128)}', space=vmem, size = 0x9000, scoped, tag = 'internal scratch']
  %s0 = inlined_call_operand.vmem [shape: bf16[2,38,32], index: 0, kind: input, shape index: {}]
  %s1 = inlined_call_operand.vmem [shape: bf16[2,8,32], index: 1, kind: input, shape index: {}]
  %s2 = inlined_call_operand.vmem [shape: bf16[31,32], index: 2, kind: input, shape index: {}]
  %s3 = inlined_call_operand.vmem [shape: bf16[1,32], index: 3, kind: input, shape index: {}, may-alias: {3,5,7}]
  %s4 = inlined_call_operand.vmem [shape: bf16[1,32], index: 4, kind: input, shape index: {}]
  %s5 = inlined_call_operand.vmem [shape: bf16[1,32], index: 5, kind: input, shape index: {}, may-alias: {3,5,7}]
  %s6 = inlined_call_operand.vmem [shape: bf16[32,32], index: 6, kind: input, shape index: {}]
  %s7 = inlined_call_operand.vmem [shape: bf16[1,32], index: 7, kind: input, shape index: {}, may-alias: {3,5,7}]
  %s8 = inlined_call_operand.vmem [shape: bf16[2,8,32], index: 8, kind: output, shape index: {}]
  %s9 = sld [smem:[#allocation0]]
  $region65: #{_lambda_.23} parent=0
    _
  %s11 = ssub.s32 1, %s9
  %s12 = scalar_select 0, %s11, %s9
  loop: start=0, step=1, limit=4
  $region2: #{_lambda_.23} parent=0 // loop_pre_header
    _
  $region3: #{_lambda_.23} parent=0 // loop_header
    %s14 = sphi 0, %s18
    %p15 = scmp.ge.s32.totalorder %s14, 4
    %s24 = sphi 0, %s26
    %s27 = sphi 0, %s24
    %s28 = sphi 0, %s27
    %s44 = sphi 0, %s28
    %s50 = sphi 0, %s52
    %s53 = sphi 0, %s50
    %s54 = sphi 0, %s53
    %s70 = sphi 0, %s54
    %s74 = sphi 0, %s74
    %s76 = sphi 0, %s74
    %s77 = sphi 0, %s76
    %s91 = sphi 0, %s77
    %s95 = sphi 0, %s95
    %s97 = sphi 0, %s95
    %s98 = sphi 0, %s97
    %s112 = sphi 0, %s98
    %s116 = sphi 0, %s116
    %s118 = sphi 0, %s116
    %s119 = sphi 0, %s118
    %s133 = sphi 0, %s119
    %s137 = sphi 0, %s137
    %s139 = sphi 0, %s137
    %s140 = sphi 0, %s139
    %s154 = sphi 0, %s140
    %s158 = sphi 0, %s158
    %s160 = sphi 0, %s158
    %s161 = sphi 0, %s160
    %s175 = sphi 0, %s161
    %s179 = sphi 0, %s179
    %s181 = sphi 0, %s179
    %s182 = sphi 0, %s181
    %s196 = sphi 0, %s182
    %s202 = sphi 0, %s204
    %s205 = sphi 0, %s202
    %s206 = sphi 0, %s205
    %s222 = sphi 0, %s206
  $region4: #{_lambda_.23} parent=0 // loop_header_branch
    %17 = sbr.rel (%p15) target = $region8
  $region5: #{_lambda_.23} parent=0 // loop_body
    %s19 = ssub.s32 %s14, 1
    %s20 = ssub.s32 %s14, 2
    %s21 = sadd.s32 %s14, 1
    %s22 = ssub.s32 %s14, %s21
    %p23 = scmp.eq.s32.totalorder %s22, 0
    %s25 = sadd.s32 %s24, 1
    %s26 = scalar_select %p23, %s24, %s25
    %p29 = pneg %p23
    %p30 = scmp.eq.s32.totalorder %s14, 1
    %p31 = por %p29, %p30
    %p32 = scmp.ne.s32.totalorder %s24, %s27
    %p33 = scmp.eq.s32.totalorder %s14, 0
    %p34 = por %p32, %p33
    %p35 = scmp.ne.s32.totalorder %s24, %s27
    %p36 = scmp.eq.s32.totalorder %s19, 1
    %p37 = por %p35, %p36
    %p38 = scmp.ne.s32.totalorder %s27, %s28
    %p39 = scmp.eq.s32.totalorder %s19, 0
    %p40 = por %p38, %p39
    %p41 = scmp.ne.s32.totalorder %s27, %s28
    %p42 = scmp.eq.s32.totalorder %s20, 1
    %p43 = por %p41, %p42
    %p45 = scmp.ne.s32.totalorder %s28, %s44
    %p46 = scmp.eq.s32.totalorder %s20, 0
    %p47 = por %p45, %p46
    %s48 = ssub.s32 %s14, %s21
    %p49 = scmp.eq.s32.totalorder %s48, 0
    %s51 = sadd.s32 %s50, 1
    %s52 = scalar_select %p49, %s50, %s51
    %p55 = pneg %p49
    %p56 = scmp.eq.s32.totalorder %s14, 1
    %p57 = por %p55, %p56
    %p58 = scmp.ne.s32.totalorder %s50, %s53
    %p59 = scmp.eq.s32.totalorder %s14, 0
    %p60 = por %p58, %p59
    %p61 = scmp.ne.s32.totalorder %s50, %s53
    %p62 = scmp.eq.s32.totalorder %s19, 1
    %p63 = por %p61, %p62
    %p64 = scmp.ne.s32.totalorder %s53, %s54
    %p65 = scmp.eq.s32.totalorder %s19, 0
    %p66 = por %p64, %p65
    %p67 = scmp.ne.s32.totalorder %s53, %s54
    %p68 = scmp.eq.s32.totalorder %s20, 1
    %p69 = por %p67, %p68
    %p71 = scmp.ne.s32.totalorder %s54, %s70
    %p72 = scmp.eq.s32.totalorder %s20, 0
    %p73 = por %p71, %p72
    %s75 = sadd.s32 %s74, 1
    %p78 = scmp.eq.s32.totalorder %s14, 1
    %p79 = scmp.ne.s32.totalorder %s74, %s76
    %p80 = scmp.eq.s32.totalorder %s14, 0
    %p81 = por %p79, %p80
    %p82 = scmp.ne.s32.totalorder %s74, %s76
    %p83 = scmp.eq.s32.totalorder %s19, 1
    %p84 = por %p82, %p83
    %p85 = scmp.ne.s32.totalorder %s76, %s77
    %p86 = scmp.eq.s32.totalorder %s19, 0
    %p87 = por %p85, %p86
    %p88 = scmp.ne.s32.totalorder %s76, %s77
    %p89 = scmp.eq.s32.totalorder %s20, 1
    %p90 = por %p88, %p89
    %p92 = scmp.ne.s32.totalorder %s77, %s91
    %p93 = scmp.eq.s32.totalorder %s20, 0
    %p94 = por %p92, %p93
    %s96 = sadd.s32 %s95, 1
    %p99 = scmp.eq.s32.totalorder %s14, 1
    %p100 = scmp.ne.s32.totalorder %s95, %s97
    %p101 = scmp.eq.s32.totalorder %s14, 0
    %p102 = por %p100, %p101
    %p103 = scmp.ne.s32.totalorder %s95, %s97
    %p104 = scmp.eq.s32.totalorder %s19, 1
    %p105 = por %p103, %p104
    %p106 = scmp.ne.s32.totalorder %s97, %s98
    %p107 = scmp.eq.s32.totalorder %s19, 0
    %p108 = por %p106, %p107
    %p109 = scmp.ne.s32.totalorder %s97, %s98
    %p110 = scmp.eq.s32.totalorder %s20, 1
    %p111 = por %p109, %p110
    %p113 = scmp.ne.s32.totalorder %s98, %s112
    %p114 = scmp.eq.s32.totalorder %s20, 0
    %p115 = por %p113, %p114
    %s117 = sadd.s32 %s116, 1
    %p120 = scmp.eq.s32.totalorder %s14, 1
    %p121 = scmp.ne.s32.totalorder %s116, %s118
    %p122 = scmp.eq.s32.totalorder %s14, 0
    %p123 = por %p121, %p122
    %p124 = scmp.ne.s32.totalorder %s116, %s118
    %p125 = scmp.eq.s32.totalorder %s19, 1
    %p126 = por %p124, %p125
    %p127 = scmp.ne.s32.totalorder %s118, %s119
    %p128 = scmp.eq.s32.totalorder %s19, 0
    %p129 = por %p127, %p128
    %p130 = scmp.ne.s32.totalorder %s118, %s119
    %p131 = scmp.eq.s32.totalorder %s20, 1
    %p132 = por %p130, %p131
    %p134 = scmp.ne.s32.totalorder %s119, %s133
    %p135 = scmp.eq.s32.totalorder %s20, 0
    %p136 = por %p134, %p135
    %s138 = sadd.s32 %s137, 1
    %p141 = scmp.eq.s32.totalorder %s14, 1
    %p142 = scmp.ne.s32.totalorder %s137, %s139
    %p143 = scmp.eq.s32.totalorder %s14, 0
    %p144 = por %p142, %p143
    %p145 = scmp.ne.s32.totalorder %s137, %s139
    %p146 = scmp.eq.s32.totalorder %s19, 1
    %p147 = por %p145, %p146
    %p148 = scmp.ne.s32.totalorder %s139, %s140
    %p149 = scmp.eq.s32.totalorder %s19, 0
    %p150 = por %p148, %p149
    %p151 = scmp.ne.s32.totalorder %s139, %s140
    %p152 = scmp.eq.s32.totalorder %s20, 1
    %p153 = por %p151, %p152
    %p155 = scmp.ne.s32.totalorder %s140, %s154
    %p156 = scmp.eq.s32.totalorder %s20, 0
    %p157 = por %p155, %p156
    %s159 = sadd.s32 %s158, 1
    %p162 = scmp.eq.s32.totalorder %s14, 1
    %p163 = scmp.ne.s32.totalorder %s158, %s160
    %p164 = scmp.eq.s32.totalorder %s14, 0
    %p165 = por %p163, %p164
    %p166 = scmp.ne.s32.totalorder %s158, %s160
    %p167 = scmp.eq.s32.totalorder %s19, 1
    %p168 = por %p166, %p167
    %p169 = scmp.ne.s32.totalorder %s160, %s161
    %p170 = scmp.eq.s32.totalorder %s19, 0
    %p171 = por %p169, %p170
    %p172 = scmp.ne.s32.totalorder %s160, %s161
    %p173 = scmp.eq.s32.totalorder %s20, 1
    %p174 = por %p172, %p173
    %p176 = scmp.ne.s32.totalorder %s161, %s175
    %p177 = scmp.eq.s32.totalorder %s20, 0
    %p178 = por %p176, %p177
    %s180 = sadd.s32 %s179, 1
    %p183 = scmp.eq.s32.totalorder %s14, 1
    %p184 = scmp.ne.s32.totalorder %s179, %s181
    %p185 = scmp.eq.s32.totalorder %s14, 0
    %p186 = por %p184, %p185
    %p187 = scmp.ne.s32.totalorder %s179, %s181
    %p188 = scmp.eq.s32.totalorder %s19, 1
    %p189 = por %p187, %p188
    %p190 = scmp.ne.s32.totalorder %s181, %s182
    %p191 = scmp.eq.s32.totalorder %s19, 0
    %p192 = por %p190, %p191
    %p193 = scmp.ne.s32.totalorder %s181, %s182
    %p194 = scmp.eq.s32.totalorder %s20, 1
    %p195 = por %p193, %p194
    %p197 = scmp.ne.s32.totalorder %s182, %s196
    %p198 = scmp.eq.s32.totalorder %s20, 0
    %p199 = por %p197, %p198
    %s200 = ssub.s32 %s14, %s21
    %p201 = scmp.eq.s32.totalorder %s200, 0
    %s203 = sadd.s32 %s202, 1
    %s204 = scalar_select %p201, %s202, %s203
    %p207 = pneg %p201
    %p208 = scmp.eq.s32.totalorder %s14, 1
    %p209 = por %p207, %p208
    %p210 = scmp.ne.s32.totalorder %s202, %s205
    %p211 = scmp.eq.s32.totalorder %s14, 0
    %p212 = por %p210, %p211
    %p213 = scmp.ne.s32.totalorder %s202, %s205
    %p214 = scmp.eq.s32.totalorder %s19, 1
    %p215 = por %p213, %p214
    %p216 = scmp.ne.s32.totalorder %s205, %s206
    %p217 = scmp.eq.s32.totalorder %s19, 0
    %p218 = por %p216, %p217
    %p219 = scmp.ne.s32.totalorder %s205, %s206
    %p220 = scmp.eq.s32.totalorder %s20, 1
    %p221 = por %p219, %p220
    %p223 = scmp.ne.s32.totalorder %s206, %s222
    %p224 = scmp.eq.s32.totalorder %s20, 0
    %p225 = por %p223, %p224
    %p226 = scmp.le.s32.totalorder 1, %s14
    %p227 = scmp.lt.s32.totalorder %s14, 3
    %p228 = pnand %p226, %p227
    %p229 = pneg %p228
    // Predicated region
    $region9: #{_lambda_.23} parent=5 // pred_check
      _
    $region10: #{_lambda_.23} parent=5 // pred_check_branch
      %231 = sbr.rel (%p228) target = $region12
    $region11: #{_lambda_.23} parent=5 // pred_region
      %s232 = ssub.s32 %s14, 1
      // Predicated region
      $region13: #{_lambda_.23} parent=11 // pred_check
        %p233 = pneg %p87
      $region14: #{_lambda_.23} parent=11 // pred_check_branch
        %235 = sbr.rel (%p233) target = $region16
      $region15: #{_lambda_.23} parent=11 // pred_region
        _
      $region16: #{_lambda_.23} parent=11 // pred_fallthru
        _
      // Predicated region
      $region17: #{_lambda_.23} parent=11 // pred_check
        %p236 = pneg %p108
      $region18: #{_lambda_.23} parent=11 // pred_check_branch
        %238 = sbr.rel (%p236) target = $region20
      $region19: #{_lambda_.23} parent=11 // pred_region
        _
      $region20: #{_lambda_.23} parent=11 // pred_fallthru
        _
      // Predicated region
      $region21: #{_lambda_.23} parent=11 // pred_check
        %p239 = pneg %p129
      $region22: #{_lambda_.23} parent=11 // pred_check_branch
        %241 = sbr.rel (%p239) target = $region24
      $region23: #{_lambda_.23} parent=11 // pred_region
        _
      $region24: #{_lambda_.23} parent=11 // pred_fallthru
        _
      // Predicated region
      $region25: #{_lambda_.23} parent=11 // pred_check
        %p242 = pneg %p150
      $region26: #{_lambda_.23} parent=11 // pred_check_branch
        %244 = sbr.rel (%p242) target = $region28
      $region27: #{_lambda_.23} parent=11 // pred_region
        _
      $region28: #{_lambda_.23} parent=11 // pred_fallthru
        _
      // Predicated region
      $region29: #{_lambda_.23} parent=11 // pred_check
        %p245 = pneg %p171
      $region30: #{_lambda_.23} parent=11 // pred_check_branch
        %247 = sbr.rel (%p245) target = $region32
      $region31: #{_lambda_.23} parent=11 // pred_region
        _
      $region32: #{_lambda_.23} parent=11 // pred_fallthru
        _
      // Predicated region
      $region33: #{_lambda_.23} parent=11 // pred_check
        %p248 = pneg %p192
      $region34: #{_lambda_.23} parent=11 // pred_check_branch
        %250 = sbr.rel (%p248) target = $region36
      $region35: #{_lambda_.23} parent=11 // pred_region
        _
      $region36: #{_lambda_.23} parent=11 // pred_fallthru
        _
    $region12: #{_lambda_.23} parent=5 // pred_fallthru
      _
    %p251 = scmp.lt.s32.totalorder %s14, 2
    // Predicated region
    $region37: #{_lambda_.23} parent=5 // pred_check
      %p252 = pneg %p251
    $region38: #{_lambda_.23} parent=5 // pred_check_branch
      %254 = sbr.rel (%p252) target = $region40
    $region39: #{_lambda_.23} parent=5 // pred_region
      // Predicated region
      $region41: #{_lambda_.23} parent=39 // pred_check
        %p255 = pneg %p34
      $region42: #{_lambda_.23} parent=39 // pred_check_branch
        %257 = sbr.rel (%p255) target = $region44
      $region43: #{_lambda_.23} parent=39 // pred_region
        %p258 = scmp.lt.s32.totalorder %s14, 1
        %s259 = scalar_select %p258, %s14, 1
        %s260 = smul.addr %s259, 5
        %s261 = smul.addr %s260, 4
        %s262 = scalar_lea.vmem %s0, %s261
      $region44: #{_lambda_.23} parent=39 // pred_fallthru
        _
      // Predicated region
      $region45: #{_lambda_.23} parent=39 // pred_check
        %p263 = pneg %p60
      $region46: #{_lambda_.23} parent=39 // pred_check_branch
        %265 = sbr.rel (%p263) target = $region48
      $region47: #{_lambda_.23} parent=39 // pred_region
        %p266 = scmp.lt.s32.totalorder %s14, 1
        %s267 = scalar_select %p266, %s14, 1
        %s268 = smul.addr %s267, 4
        %s269 = scalar_lea.vmem %s1, %s268
      $region48: #{_lambda_.23} parent=39 // pred_fallthru
        _
    $region40: #{_lambda_.23} parent=5 // pred_fallthru
      _
    %p270 = scmp.le.s32.totalorder 1, %s14
    %p271 = scmp.lt.s32.totalorder %s14, 3
    %p272 = pnand %p270, %p271
    %p273 = pneg %p272
    // Predicated region
    $region49: #{_lambda_.23} parent=5 // pred_check
      _
    $region50: #{_lambda_.23} parent=5 // pred_check_branch
      %275 = sbr.rel (%p272) target = $region52
    $region51: #{_lambda_.23} parent=5 // pred_region
      %s276 = ssub.s32 %s14, 1
      %p277 = scmp.lt.s32.totalorder %s19, 1
      %s278 = scalar_select %p277, %s19, 1
      %s279 = smul.addr %s278, 5
      %s280 = smul.addr %s279, 4
      %s281 = scalar_lea.vmem %s0, %s280
      %p282 = pneg %p40
      %p283 = pneg %p37
      %p284 = scmp.lt.s32.totalorder %s19, 1
      %s285 = scalar_select %p284, %s19, 1
      %s286 = smul.addr %s285, 4
      %s287 = scalar_lea.vmem %s1, %s286
      %p288 = pneg %p66
      %p289 = pneg %p63
      %p290 = pneg %p87
      %p291 = pneg %p84
      %p292 = pneg %p108
      %p293 = pneg %p105
      %p294 = pneg %p129
      %p295 = pneg %p126
      %p296 = pneg %p150
      %p297 = pneg %p147
      %p298 = pneg %p171
      %p299 = pneg %p168
      %p300 = pneg %p192
      %p301 = pneg %p189
      %p302 = pneg %p218
      %p303 = pneg %p215
      %p304 = scmp.lt.s32.totalorder %s19, 1
      %s305 = scalar_select %p304, %s19, 1
      %s306 = smul.addr %s305, 4
      %s307 = scalar_lea.vmem %s8, %s306
      %p308 = scmp.lt.s32.totalorder %s19, 1
      %s309 = scalar_select %p308, %s19, 1
      %s310 = smul.addr %s309, 5
      %s311 = smul.addr %s310, 4
      %s312 = scalar_lea.vmem %s0, %s311
      %p313 = scmp.lt.s32.totalorder %s19, 1
      %s314 = scalar_select %p313, %s19, 1
      %s315 = smul.addr %s314, 4
      %s316 = scalar_lea.vmem %s1, %s315
      %p317 = scmp.lt.s32.totalorder %s19, 1
      %s318 = scalar_select %p317, %s19, 1
      %s319 = smul.addr %s318, 4
      %s320 = scalar_lea.vmem %s8, %s319
      %v322 = vld [vmem:[%s312] sm:$0xf]
      %v323 = vld [vmem:[%s312 + $0x4] sm:$0xf]
      %v324 = vld [vmem:[%s312 + $0x8] sm:$0xf]
      %v325 = vld [vmem:[%s312 + $0xc] sm:$0xf]
      %v326 = vld [vmem:[%s312 + $0x10] sm:$0x7]
      %v327 = vunpack.c.l.bf16 %v322
      %v328 = vld [vmem:[%s2] sm:$0x1]
      %v329 = vunpack.c.l.bf16 %v328
      %v330 = vperm.slane %v329, 0
      %v331 = vmul.f32 %v327, %v330
      %v332 = vadd.f32 %v331, 0.0
      %v333 = vunpack.c.l.bf16 %v323
      %v334 = vperm.slane %v329, 1
      %v335 = vmul.f32 %v327, %v334
      %v336 = vmul.f32 %v333, %v334
      %vm339 = vcmask 1046528
      %v340 = vrot.slane %v335, 1
      %v341 = vrot.slane %v336, 1
      %v342 = vsel %vm339, %v340, %v341
      %v344 = vadd.f32 %v332, %v342
      %v345 = vld [vmem:[%s2] sm:$0x2]
      %v346 = vunpack.c.l.bf16 %v345
      %v347 = vperm.slane %v346, 2
      %v348 = vmul.f32 %v327, %v347
      %v349 = vmul.f32 %v333, %v347
      %vm352 = vcmask 1045504
      %v353 = vrot.slane %v348, 2
      %v354 = vrot.slane %v349, 2
      %v355 = vsel %vm352, %v353, %v354
      %v357 = vadd.f32 %v344, %v355
      %v358 = vperm.slane %v346, 3
      %v359 = vmul.f32 %v327, %v358
      %v360 = vmul.f32 %v333, %v358
      %vm363 = vcmask 1044480
      %v364 = vrot.slane %v359, 3
      %v365 = vrot.slane %v360, 3
      %v366 = vsel %vm363, %v364, %v365
      %v368 = vadd.f32 %v357, %v366
      %v369 = vld [vmem:[%s2] sm:$0x4]
      %v370 = vunpack.c.l.bf16 %v369
      %v371 = vperm.slane %v370, 4
      %v372 = vmul.f32 %v327, %v371
      %v373 = vmul.f32 %v333, %v371
      %vm376 = vcmask 1043456
      %v377 = vrot.slane %v372, 4
      %v378 = vrot.slane %v373, 4
      %v379 = vsel %vm376, %v377, %v378
      %v381 = vadd.f32 %v368, %v379
      %v382 = vperm.slane %v370, 5
      %v383 = vmul.f32 %v327, %v382
      %v384 = vmul.f32 %v333, %v382
      %vm387 = vcmask 1042432
      %v388 = vrot.slane %v383, 5
      %v389 = vrot.slane %v384, 5
      %v390 = vsel %vm387, %v388, %v389
      %v392 = vadd.f32 %v381, %v390
      %v393 = vld [vmem:[%s2] sm:$0x8]
      %v394 = vunpack.c.l.bf16 %v393
      %v395 = vperm.slane %v394, 6
      %v396 = vmul.f32 %v327, %v395
      %v397 = vmul.f32 %v333, %v395
      %vm400 = vcmask 1041408
      %v401 = vrot.slane %v396, 6
      %v402 = vrot.slane %v397, 6
      %v403 = vsel %vm400, %v401, %v402
      %v405 = vadd.f32 %v392, %v403
      %v406 = vperm.slane %v394, 7
      %v407 = vmul.f32 %v327, %v406
      %v408 = vmul.f32 %v333, %v406
      %vm411 = vcmask 1040384
      %v412 = vrot.slane %v407, 7
      %v413 = vrot.slane %v408, 7
      %v414 = vsel %vm411, %v412, %v413
      %v416 = vadd.f32 %v405, %v414
      %v417 = vld [vmem:[%s2 + $0x4] sm:$0x1]
      %v418 = vunpack.c.l.bf16 %v417
      %v419 = vperm.slane %v418, 0
      %v420 = vmul.f32 %v333, %v419
      %v421 = vadd.f32 %v416, %v420
      %v422 = vunpack.c.l.bf16 %v324
      %v423 = vperm.slane %v418, 1
      %v424 = vmul.f32 %v333, %v423
      %v425 = vmul.f32 %v422, %v423
      %v428 = vrot.slane %v424, 1
      %v429 = vrot.slane %v425, 1
      %v430 = vsel %vm339, %v428, %v429
      %v432 = vadd.f32 %v421, %v430
      %v433 = vld [vmem:[%s2 + $0x4] sm:$0x2]
      %v434 = vunpack.c.l.bf16 %v433
      %v435 = vperm.slane %v434, 2
      %v436 = vmul.f32 %v333, %v435
      %v437 = vmul.f32 %v422, %v435
      %v440 = vrot.slane %v436, 2
      %v441 = vrot.slane %v437, 2
      %v442 = vsel %vm352, %v440, %v441
      %v444 = vadd.f32 %v432, %v442
      %v445 = vperm.slane %v434, 3
      %v446 = vmul.f32 %v333, %v445
      %v447 = vmul.f32 %v422, %v445
      %v450 = vrot.slane %v446, 3
      %v451 = vrot.slane %v447, 3
      %v452 = vsel %vm363, %v450, %v451
      %v454 = vadd.f32 %v444, %v452
      %v455 = vld [vmem:[%s2 + $0x4] sm:$0x4]
      %v456 = vunpack.c.l.bf16 %v455
      %v457 = vperm.slane %v456, 4
      %v458 = vmul.f32 %v333, %v457
      %v459 = vmul.f32 %v422, %v457
      %v462 = vrot.slane %v458, 4
      %v463 = vrot.slane %v459, 4
      %v464 = vsel %vm376, %v462, %v463
      %v466 = vadd.f32 %v454, %v464
      %v467 = vperm.slane %v456, 5
      %v468 = vmul.f32 %v333, %v467
      %v469 = vmul.f32 %v422, %v467
      %v472 = vrot.slane %v468, 5
      %v473 = vrot.slane %v469, 5
      %v474 = vsel %vm387, %v472, %v473
      %v476 = vadd.f32 %v466, %v474
      %v477 = vld [vmem:[%s2 + $0x4] sm:$0x8]
      %v478 = vunpack.c.l.bf16 %v477
      %v479 = vperm.slane %v478, 6
      %v480 = vmul.f32 %v333, %v479
      %v481 = vmul.f32 %v422, %v479
      %v484 = vrot.slane %v480, 6
      %v485 = vrot.slane %v481, 6
      %v486 = vsel %vm400, %v484, %v485
      %v488 = vadd.f32 %v476, %v486
      %v489 = vperm.slane %v478, 7
      %v490 = vmul.f32 %v333, %v489
      %v491 = vmul.f32 %v422, %v489
      %v494 = vrot.slane %v490, 7
      %v495 = vrot.slane %v491, 7
      %v496 = vsel %vm411, %v494, %v495
      %v498 = vadd.f32 %v488, %v496
      %v499 = vld [vmem:[%s2 + $0x8] sm:$0x1]
      %v500 = vunpack.c.l.bf16 %v499
      %v501 = vperm.slane %v500, 0
      %v502 = vmul.f32 %v422, %v501
      %v503 = vadd.f32 %v498, %v502
      %v504 = vunpack.c.l.bf16 %v325
      %v505 = vperm.slane %v500, 1
      %v506 = vmul.f32 %v422, %v505
      %v507 = vmul.f32 %v504, %v505
      %v510 = vrot.slane %v506, 1
      %v511 = vrot.slane %v507, 1
      %v512 = vsel %vm339, %v510, %v511
      %v514 = vadd.f32 %v503, %v512
      %v515 = vld [vmem:[%s2 + $0x8] sm:$0x2]
      %v516 = vunpack.c.l.bf16 %v515
      %v517 = vperm.slane %v516, 2
      %v518 = vmul.f32 %v422, %v517
      %v519 = vmul.f32 %v504, %v517
      %v522 = vrot.slane %v518, 2
      %v523 = vrot.slane %v519, 2
      %v524 = vsel %vm352, %v522, %v523
      %v526 = vadd.f32 %v514, %v524
      %v527 = vperm.slane %v516, 3
      %v528 = vmul.f32 %v422, %v527
      %v529 = vmul.f32 %v504, %v527
      %v532 = vrot.slane %v528, 3
      %v533 = vrot.slane %v529, 3
      %v534 = vsel %vm363, %v532, %v533
      %v536 = vadd.f32 %v526, %v534
      %v537 = vld [vmem:[%s2 + $0x8] sm:$0x4]
      %v538 = vunpack.c.l.bf16 %v537
      %v539 = vperm.slane %v538, 4
      %v540 = vmul.f32 %v422, %v539
      %v541 = vmul.f32 %v504, %v539
      %v544 = vrot.slane %v540, 4
      %v545 = vrot.slane %v541, 4
      %v546 = vsel %vm376, %v544, %v545
      %v548 = vadd.f32 %v536, %v546
      %v549 = vperm.slane %v538, 5
      %v550 = vmul.f32 %v422, %v549
      %v551 = vmul.f32 %v504, %v549
      %v554 = vrot.slane %v550, 5
      %v555 = vrot.slane %v551, 5
      %v556 = vsel %vm387, %v554, %v555
      %v558 = vadd.f32 %v548, %v556
      %v559 = vld [vmem:[%s2 + $0x8] sm:$0x8]
      %v560 = vunpack.c.l.bf16 %v559
      %v561 = vperm.slane %v560, 6
      %v562 = vmul.f32 %v422, %v561
      %v563 = vmul.f32 %v504, %v561
      %v566 = vrot.slane %v562, 6
      %v567 = vrot.slane %v563, 6
      %v568 = vsel %vm400, %v566, %v567
      %v570 = vadd.f32 %v558, %v568
      %v571 = vperm.slane %v560, 7
      %v572 = vmul.f32 %v422, %v571
      %v573 = vmul.f32 %v504, %v571
      %v576 = vrot.slane %v572, 7
      %v577 = vrot.slane %v573, 7
      %v578 = vsel %vm411, %v576, %v577
      %v580 = vadd.f32 %v570, %v578
      %v581 = vld [vmem:[%s2 + $0xc] sm:$0x1]
      %v582 = vunpack.c.l.bf16 %v581
      %v583 = vperm.slane %v582, 0
      %v584 = vmul.f32 %v504, %v583
      %v585 = vadd.f32 %v580, %v584
      %v586 = vunpack.c.l.bf16 %v326
      %v587 = vperm.slane %v582, 1
      %v588 = vmul.f32 %v504, %v587
      %v589 = vmul.f32 %v586, %v587
      %v592 = vrot.slane %v588, 1
      %v593 = vrot.slane %v589, 1
      %v594 = vsel %vm339, %v592, %v593
      %v596 = vadd.f32 %v585, %v594
      %v597 = vld [vmem:[%s2 + $0xc] sm:$0x2]
      %v598 = vunpack.c.l.bf16 %v597
      %v599 = vperm.slane %v598, 2
      %v600 = vmul.f32 %v504, %v599
      %v601 = vmul.f32 %v586, %v599
      %v604 = vrot.slane %v600, 2
      %v605 = vrot.slane %v601, 2
      %v606 = vsel %vm352, %v604, %v605
      %v608 = vadd.f32 %v596, %v606
      %v609 = vperm.slane %v598, 3
      %v610 = vmul.f32 %v504, %v609
      %v611 = vmul.f32 %v586, %v609
      %v614 = vrot.slane %v610, 3
      %v615 = vrot.slane %v611, 3
      %v616 = vsel %vm363, %v614, %v615
      %v618 = vadd.f32 %v608, %v616
      %v619 = vld [vmem:[%s2 + $0xc] sm:$0x4]
      %v620 = vunpack.c.l.bf16 %v619
      %v621 = vperm.slane %v620, 4
      %v622 = vmul.f32 %v504, %v621
      %v623 = vmul.f32 %v586, %v621
      %v626 = vrot.slane %v622, 4
      %v627 = vrot.slane %v623, 4
      %v628 = vsel %vm376, %v626, %v627
      %v630 = vadd.f32 %v618, %v628
      %v631 = vperm.slane %v620, 5
      %v632 = vmul.f32 %v504, %v631
      %v633 = vmul.f32 %v586, %v631
      %v636 = vrot.slane %v632, 5
      %v637 = vrot.slane %v633, 5
      %v638 = vsel %vm387, %v636, %v637
      %v640 = vadd.f32 %v630, %v638
      %v641 = vld [vmem:[%s2 + $0xc] sm:$0x8]
      %v642 = vunpack.c.l.bf16 %v641
      %v643 = vperm.slane %v642, 6
      %v644 = vmul.f32 %v504, %v643
      %v645 = vmul.f32 %v586, %v643
      %v648 = vrot.slane %v644, 6
      %v649 = vrot.slane %v645, 6
      %v650 = vsel %vm400, %v648, %v649
      %v652 = vadd.f32 %v640, %v650
      %v653 = vld [vmem:[%s3] sm:$0x1]
      %v654 = vunpack.c.l.bf16 %v653
      %v655 = vperm.slane %v654, 0
      %v656 = vadd.f32 %v652, %v655
      %v657 = vld [vmem:[%s4] sm:$0x1]
      %v658 = vld [vmem:[%s5] sm:$0x1]
      %vm659 = vcmask 261120
      %v660 = vsel %vm659, %v656, 0.0
      %661 = vadd.xlane.f32.xlu0 %v660
      %v662 = vpop.xlane.xlu0 %661
      %v663 = vrcp.pop 32.0
      %v664 = vmul.f32 32.0, %v663
      %v665 = vsub.f32 1.0, %v664
      %v666 = vmul.f32 %v663, %v665
      %v667 = vadd.f32 %v663, %v666
      %vm668 = vweird.f32 %v663
      %v669 = vsel %vm668, %v663, %v667
      %v670 = vmul.f32 %v662, %v669
      %v671 = vsub.f32 %v656, %v670
      %v672 = vmul.f32 %v671, %v671
      %v673 = vsel %vm659, %v672, 0.0
      %674 = vadd.xlane.f32.xlu0 %v673
      %v675 = vpop.xlane.xlu0 %674
      %v676 = vmul.f32 %v675, %v669
      %v677 = vadd.f32 %v676, 1e-05
      %v678 = vrsqrt.pop %v677
      %v679 = vmul.f32 %v678, %v677
      %v680 = vmul.f32 %v679, %v678
      %v681 = vmul.f32 0.5, %v680
      %v682 = vsub.f32 1.5, %v681
      %v683 = vmul.f32 %v678, %v682
      %vm684 = vweird.f32 %v677
      %vm685 = vweird.f32 %v678
      %vm686 = vmor %vm684, %vm685
      %v687 = vsel %vm686, %v678, %v683
      %v688 = vmul.f32 %v671, %v687
      %v689 = vunpack.c.l.bf16 %v657
      %v690 = vperm.slane %v689, 0
      %v691 = vmul.f32 %v688, %v690
      %v692 = vunpack.c.l.bf16 %v658
      %v693 = vperm.slane %v692, 0
      %v694 = vadd.f32 %v691, %v693
      %v695 = vxor.u32 %v694, 2147483648
      %v696 = vmul.f32 %v695, 1.442695
      %v697 = vpow.pop %v696
      %v698 = vadd.f32 %v697, 1.0
      %v699 = vrcp.pop %v698
      %v700 = vmul.f32 %v698, %v699
      %v701 = vsub.f32 1.0, %v700
      %v702 = vmul.f32 %v699, %v701
      %v703 = vadd.f32 %v699, %v702
      %vm704 = vweird.f32 %v698
      %vm705 = vweird.f32 %v699
      %vm706 = vmor %vm704, %vm705
      %v707 = vsel %vm706, %v699, %v703
      %v708 = vand.u32 2147483647, %v698
      %vm709 = vcmp.eq.f32.partialorder %v708, 8.507059e+37
      %v710 = vand.u32 %v698, 2147483648
      %v711 = vor.u32 1.1754944e-38, %v710
      %v712 = vsel %vm709, %v711, %v707
      %v713 = vmul.f32 1.0, %v712
      %v714 = vmul.f32 %v694, %v713
      %v715 = vld [vmem:[%s6] sm:$0xf]
      %v716 = vld [vmem:[%s6 + $0x4] sm:$0xf]
      %v717 = vld [vmem:[%s6 + $0x8] sm:$0xf]
      %v718 = vld [vmem:[%s6 + $0xc] sm:$0xf]
      %v719 = vpack.c.bf16 %v714, %v714
      %v720 = vld [vmem:[%s7] sm:$0x1]
      %v721 = vunpack.c.l.bf16 %v720
      %v722 = vperm.slane %v721, 0
      %v727 = vunpack.c.l.b16 %v715
      %v728 = vunpack.c.l.b16 %v716
      %v729 = vunpack.c.l.b16 %v717
      %v730 = vunpack.c.l.b16 %v718
      %v731 = vpack.c.b16 %v728, %v727
      %v732 = vpack.c.b16 %v730, %v729
      %v736 = vsel %vm659, %v719, 0
      %738 = vmatpush.bf16.msra.mxu0 0
      %739 = vmatpush.bf16.msra.mxu0 0
      %740 = vmatpush.bf16.msra.mxu0 0
      %741 = vmatpush.bf16.msra.mxu0 0
      %742 = vmatpush.bf16.msra.mxu0 0
      %743 = vmatpush.bf16.msra.mxu0 0
      %744 = vmatpush.bf16.msra.mxu0 %v732
      %745 = vmatpush.bf16.msra.mxu0 %v731
      %746 = vmatmul.bf16.gmra.mxu0 %v736
      %v747 = vpop.f32.mrf.mxu0
      %v748 = vadd.f32 %v722, %v747
      %v749 = vpop.f32.mrf.mxu0
      %750 = vdwg.mxu0
      %v751 = vld [vmem:[%s316] sm:$0xf]
      %v752 = vunpack.c.l.bf16 %v751
      %v753 = vadd.f32 %v748, %v752
      %v754 = vpack.c.bf16 %v753, %v753
      %vm755 = vcmask 257024
      %756 = vst.msk [vmem:[%s320] sm:$0xf] %vm755, %v754
      %p757 = scmp.lt.s32.totalorder %s19, 1
      %s758 = scalar_select %p757, %s19, 1
      %s759 = smul.addr %s758, 4
      %s760 = scalar_lea.vmem %s8, %s759
      // Predicated region
      $region53: #{_lambda_.23} parent=51 // pred_check
        %p761 = pneg %p215
      $region54: #{_lambda_.23} parent=51 // pred_check_branch
        %763 = sbr.rel (%p761) target = $region56
      $region55: #{_lambda_.23} parent=51 // pred_region
        _
      $region56: #{_lambda_.23} parent=51 // pred_fallthru
        _
    $region52: #{_lambda_.23} parent=5 // pred_fallthru
      _
    %p764 = scmp.le.s32.totalorder 2, %s14
    // Predicated region
    $region57: #{_lambda_.23} parent=5 // pred_check
      %p765 = pneg %p764
    $region58: #{_lambda_.23} parent=5 // pred_check_branch
      %767 = sbr.rel (%p765) target = $region60
    $region59: #{_lambda_.23} parent=5 // pred_region
      %s768 = ssub.s32 %s14, 2
      // Predicated region
      $region61: #{_lambda_.23} parent=59 // pred_check
        %p769 = pneg %p221
      $region62: #{_lambda_.23} parent=59 // pred_check_branch
        %771 = sbr.rel (%p769) target = $region64
      $region63: #{_lambda_.23} parent=59 // pred_region
        %p772 = scmp.lt.s32.totalorder %s20, 1
        %s773 = scalar_select %p772, %s20, 1
        %s774 = smul.addr %s773, 4
        %s775 = scalar_lea.vmem %s8, %s774
      $region64: #{_lambda_.23} parent=59 // pred_fallthru
        _
    $region60: #{_lambda_.23} parent=5 // pred_fallthru
      _
  $region6: #{_lambda_.23} parent=0 // loop_footer
    %s18 = sadd.s32 1, %s14
  $region7: #{_lambda_.23} parent=0 // loop_footer_branch
    %13 = sbr.rel target = $region3
  $region8: #{_lambda_.23} parent=0 // loop_exit
    _

// kernel: _lambda_.24
$region0: #{_lambda_.24}
  #allocation0 [shape = 'u32[]', space=smem, size = 0x4, offset = 0x4, fixed_abs, tag = 'smem constant byte address 0x4 - core index']
  #allocation1 [shape = 'u32[72,128]{1,0:T(1,128)}', space=vmem, size = 0x9000, scoped, tag = 'internal scratch']
  %s0 = inlined_call_operand.vmem [shape: bf16[16,32], index: 0, kind: input, shape index: {}]
  %s1 = inlined_call_operand.vmem [shape: bf16[1,32], index: 1, kind: input, shape index: {}, may-alias: {1,7}]
  %s2 = inlined_call_operand.vmem [shape: bf16[1,32], index: 2, kind: input, shape index: {}, may-alias: {2,6,8}]
  %s3 = inlined_call_operand.vmem [shape: bf16[32,64], index: 3, kind: input, shape index: {}]
  %s4 = inlined_call_operand.vmem [shape: bf16[1,64], index: 4, kind: input, shape index: {}]
  %s5 = inlined_call_operand.vmem [shape: bf16[64,32], index: 5, kind: input, shape index: {}]
  %s6 = inlined_call_operand.vmem [shape: bf16[1,32], index: 6, kind: input, shape index: {}, may-alias: {2,6,8}]
  %s7 = inlined_call_operand.vmem [shape: bf16[1,32], index: 7, kind: input, shape index: {}, may-alias: {1,7}]
  %s8 = inlined_call_operand.vmem [shape: bf16[1,32], index: 8, kind: input, shape index: {}, may-alias: {2,6,8}]
  %s9 = inlined_call_operand.vmem [shape: bf16[16,32], index: 9, kind: output, shape index: {}]
  %s10 = sld [smem:[#allocation0]]
  $region46: #{_lambda_.24} parent=0
    _
  %s12 = ssub.s32 1, %s10
  %s13 = scalar_select 0, %s12, %s10
  // Predicated region
  $region2: #{_lambda_.24} parent=0 // pred_check
    _
  $region3: #{_lambda_.24} parent=0 // pred_check_branch
    %15 = sbr.rel (0) target = $region5
  $region4: #{_lambda_.24} parent=0 // pred_region
    _
  $region5: #{_lambda_.24} parent=0 // pred_fallthru
    _
  // Predicated region
  $region6: #{_lambda_.24} parent=0 // pred_check
    _
  $region7: #{_lambda_.24} parent=0 // pred_check_branch
    %17 = sbr.rel (0) target = $region9
  $region8: #{_lambda_.24} parent=0 // pred_region
    _
  $region9: #{_lambda_.24} parent=0 // pred_fallthru
    _
  // Predicated region
  $region10: #{_lambda_.24} parent=0 // pred_check
    _
  $region11: #{_lambda_.24} parent=0 // pred_check_branch
    %19 = sbr.rel (0) target = $region13
  $region12: #{_lambda_.24} parent=0 // pred_region
    _
  $region13: #{_lambda_.24} parent=0 // pred_fallthru
    _
  // Predicated region
  $region14: #{_lambda_.24} parent=0 // pred_check
    _
  $region15: #{_lambda_.24} parent=0 // pred_check_branch
    %21 = sbr.rel (0) target = $region17
  $region16: #{_lambda_.24} parent=0 // pred_region
    _
  $region17: #{_lambda_.24} parent=0 // pred_fallthru
    _
  // Predicated region
  $region18: #{_lambda_.24} parent=0 // pred_check
    _
  $region19: #{_lambda_.24} parent=0 // pred_check_branch
    %23 = sbr.rel (0) target = $region21
  $region20: #{_lambda_.24} parent=0 // pred_region
    _
  $region21: #{_lambda_.24} parent=0 // pred_fallthru
    _
  // Predicated region
  $region22: #{_lambda_.24} parent=0 // pred_check
    _
  $region23: #{_lambda_.24} parent=0 // pred_check_branch
    %25 = sbr.rel (0) target = $region25
  $region24: #{_lambda_.24} parent=0 // pred_region
    _
  $region25: #{_lambda_.24} parent=0 // pred_fallthru
    _
  // Predicated region
  $region26: #{_lambda_.24} parent=0 // pred_check
    _
  $region27: #{_lambda_.24} parent=0 // pred_check_branch
    %27 = sbr.rel (0) target = $region29
  $region28: #{_lambda_.24} parent=0 // pred_region
    _
  $region29: #{_lambda_.24} parent=0 // pred_fallthru
    _
  // Predicated region
  $region30: #{_lambda_.24} parent=0 // pred_check
    _
  $region31: #{_lambda_.24} parent=0 // pred_check_branch
    %29 = sbr.rel (0) target = $region33
  $region32: #{_lambda_.24} parent=0 // pred_region
    _
  $region33: #{_lambda_.24} parent=0 // pred_fallthru
    _
  // Predicated region
  $region34: #{_lambda_.24} parent=0 // pred_check
    _
  $region35: #{_lambda_.24} parent=0 // pred_check_branch
    %31 = sbr.rel (0) target = $region37
  $region36: #{_lambda_.24} parent=0 // pred_region
    _
  $region37: #{_lambda_.24} parent=0 // pred_fallthru
    _
  %v33 = vld [vmem:[%s0] sm:$0xf]
  %v34 = vld [vmem:[%s0 + $0x4] sm:$0xf]
  %v35 = vunpack.c.l.bf16 %v33
  %v36 = vunpack.c.l.bf16 %v34
  %v37 = vld [vmem:[%s1] sm:$0x1]
  %v38 = vld [vmem:[%s2] sm:$0x1]
  %vm39 = vcmask 261120
  %v40 = vsel %vm39, %v35, 0.0
  %41 = vadd.xlane.f32.xlu0 %v40
  %v42 = vpop.xlane.xlu0 %41
  %v43 = vsel %vm39, %v36, 0.0
  %44 = vadd.xlane.f32.xlu0 %v43
  %v45 = vpop.xlane.xlu0 %44
  %v46 = vrcp.pop 32.0
  %v47 = vmul.f32 32.0, %v46
  %v48 = vsub.f32 1.0, %v47
  %v49 = vmul.f32 %v46, %v48
  %v50 = vadd.f32 %v46, %v49
  %vm51 = vweird.f32 %v46
  %v52 = vsel %vm51, %v46, %v50
  %v53 = vmul.f32 %v42, %v52
  %v54 = vmul.f32 %v45, %v52
  %v55 = vsub.f32 %v35, %v53
  %v56 = vsub.f32 %v36, %v54
  %v57 = vmul.f32 %v55, %v55
  %v58 = vmul.f32 %v56, %v56
  %v59 = vsel %vm39, %v57, 0.0
  %60 = vadd.xlane.f32.xlu0 %v59
  %v61 = vpop.xlane.xlu0 %60
  %v62 = vsel %vm39, %v58, 0.0
  %63 = vadd.xlane.f32.xlu0 %v62
  %v64 = vpop.xlane.xlu0 %63
  %v65 = vmul.f32 %v61, %v52
  %v66 = vmul.f32 %v64, %v52
  %v67 = vadd.f32 %v65, 1e-05
  %v68 = vadd.f32 %v66, 1e-05
  %v69 = vrsqrt.pop %v67
  %v70 = vmul.f32 %v69, %v67
  %v71 = vmul.f32 %v70, %v69
  %v72 = vmul.f32 0.5, %v71
  %v73 = vsub.f32 1.5, %v72
  %v74 = vmul.f32 %v69, %v73
  %vm75 = vweird.f32 %v67
  %vm76 = vweird.f32 %v69
  %vm77 = vmor %vm75, %vm76
  %v78 = vsel %vm77, %v69, %v74
  %v79 = vrsqrt.pop %v68
  %v80 = vmul.f32 %v79, %v68
  %v81 = vmul.f32 %v80, %v79
  %v82 = vmul.f32 0.5, %v81
  %v83 = vsub.f32 1.5, %v82
  %v84 = vmul.f32 %v79, %v83
  %vm85 = vweird.f32 %v68
  %vm86 = vweird.f32 %v79
  %vm87 = vmor %vm85, %vm86
  %v88 = vsel %vm87, %v79, %v84
  %v89 = vmul.f32 %v55, %v78
  %v90 = vmul.f32 %v56, %v88
  %v91 = vunpack.c.l.bf16 %v37
  %v92 = vperm.slane %v91, 0
  %v93 = vmul.f32 %v89, %v92
  %v94 = vmul.f32 %v90, %v92
  %v95 = vunpack.c.l.bf16 %v38
  %v96 = vperm.slane %v95, 0
  %v97 = vadd.f32 %v93, %v96
  %v98 = vadd.f32 %v94, %v96
  %v99 = vld [vmem:[%s3] sm:$0xf]
  %v100 = vld [vmem:[%s3 + $0x4] sm:$0xf]
  %v101 = vld [vmem:[%s3 + $0x8] sm:$0xf]
  %v102 = vld [vmem:[%s3 + $0xc] sm:$0xf]
  %v103 = vpack.c.bf16 %v98, %v97
  %v104 = vld [vmem:[%s4] sm:$0x1]
  %v105 = vunpack.c.l.bf16 %v104
  %v106 = vperm.slane %v105, 0
  %v111 = vunpack.c.l.b16 %v99
  %v112 = vunpack.c.l.b16 %v100
  %v113 = vunpack.c.l.b16 %v101
  %v114 = vunpack.c.l.b16 %v102
  %v115 = vpack.c.b16 %v112, %v111
  %v116 = vpack.c.b16 %v114, %v113
  %v120 = vsel %vm39, %v103, 0
  %122 = vmatpush.bf16.msra.mxu0 0
  %123 = vmatpush.bf16.msra.mxu0 0
  %124 = vmatpush.bf16.msra.mxu0 0
  %125 = vmatpush.bf16.msra.mxu0 0
  %126 = vmatpush.bf16.msra.mxu0 0
  %127 = vmatpush.bf16.msra.mxu0 0
  %128 = vmatpush.bf16.msra.mxu0 %v116
  %129 = vmatpush.bf16.msra.mxu0 %v115
  %130 = vmatmul.bf16.gmra.mxu0 %v120
  %v131 = vpop.f32.mrf.mxu0
  %v132 = vadd.f32 %v106, %v131
  %v133 = vpop.f32.mrf.mxu0
  %v134 = vadd.f32 %v106, %v133
  %135 = vdwg.mxu0
  %v136 = vxor.u32 %v132, 2147483648
  %v137 = vxor.u32 %v134, 2147483648
  %v138 = vmul.f32 %v136, 1.442695
  %v139 = vpow.pop %v138
  %v140 = vmul.f32 %v137, 1.442695
  %v141 = vpow.pop %v140
  %v142 = vadd.f32 %v139, 1.0
  %v143 = vadd.f32 %v141, 1.0
  %v144 = vrcp.pop %v142
  %v145 = vmul.f32 %v142, %v144
  %v146 = vsub.f32 1.0, %v145
  %v147 = vmul.f32 %v144, %v146
  %v148 = vadd.f32 %v144, %v147
  %vm149 = vweird.f32 %v142
  %vm150 = vweird.f32 %v144
  %vm151 = vmor %vm149, %vm150
  %v152 = vsel %vm151, %v144, %v148
  %v153 = vand.u32 2147483647, %v142
  %vm154 = vcmp.eq.f32.partialorder %v153, 8.507059e+37
  %v155 = vand.u32 %v142, 2147483648
  %v156 = vor.u32 1.1754944e-38, %v155
  %v157 = vsel %vm154, %v156, %v152
  %v158 = vmul.f32 1.0, %v157
  %v159 = vrcp.pop %v143
  %v160 = vmul.f32 %v143, %v159
  %v161 = vsub.f32 1.0, %v160
  %v162 = vmul.f32 %v159, %v161
  %v163 = vadd.f32 %v159, %v162
  %vm164 = vweird.f32 %v143
  %vm165 = vweird.f32 %v159
  %vm166 = vmor %vm164, %vm165
  %v167 = vsel %vm166, %v159, %v163
  %v168 = vand.u32 2147483647, %v143
  %vm169 = vcmp.eq.f32.partialorder %v168, 8.507059e+37
  %v170 = vand.u32 %v143, 2147483648
  %v171 = vor.u32 1.1754944e-38, %v170
  %v172 = vsel %vm169, %v171, %v167
  %v173 = vmul.f32 1.0, %v172
  %v174 = vmul.f32 %v132, %v158
  %v175 = vmul.f32 %v134, %v173
  %v176 = vld [vmem:[%s5] sm:$0xf]
  %v177 = vld [vmem:[%s5 + $0x4] sm:$0xf]
  %v178 = vld [vmem:[%s5 + $0x8] sm:$0xf]
  %v179 = vld [vmem:[%s5 + $0xc] sm:$0xf]
  %v180 = vld [vmem:[%s5 + $0x10] sm:$0xf]
  %v181 = vld [vmem:[%s5 + $0x14] sm:$0xf]
  %v182 = vld [vmem:[%s5 + $0x18] sm:$0xf]
  %v183 = vld [vmem:[%s5 + $0x1c] sm:$0xf]
  %v184 = vpack.c.bf16 %v175, %v174
  %v185 = vld [vmem:[%s6] sm:$0x1]
  %v186 = vunpack.c.l.bf16 %v185
  %v187 = vperm.slane %v186, 0
  %v196 = vunpack.c.l.b16 %v176
  %v197 = vunpack.c.l.b16 %v177
  %v198 = vunpack.c.l.b16 %v178
  %v199 = vunpack.c.l.b16 %v179
  %v200 = vunpack.c.l.b16 %v180
  %v201 = vunpack.c.l.b16 %v181
  %v202 = vunpack.c.l.b16 %v182
  %v203 = vunpack.c.l.b16 %v183
  %v204 = vpack.c.b16 %v197, %v196
  %v205 = vpack.c.b16 %v199, %v198
  %v206 = vpack.c.b16 %v201, %v200
  %v207 = vpack.c.b16 %v203, %v202
  %vm212 = vcmask 523264
  %v214 = vsel %vm212, %v184, 0
  %216 = vmatpush.bf16.msra.mxu0 0
  %217 = vmatpush.bf16.msra.mxu0 0
  %218 = vmatpush.bf16.msra.mxu0 0
  %219 = vmatpush.bf16.msra.mxu0 0
  %220 = vmatpush.bf16.msra.mxu0 %v207
  %221 = vmatpush.bf16.msra.mxu0 %v206
  %222 = vmatpush.bf16.msra.mxu0 %v205
  %223 = vmatpush.bf16.msra.mxu0 %v204
  %224 = vmatmul.bf16.gmra.mxu0 %v214
  %v225 = vpop.f32.mrf.mxu0
  %v226 = vadd.f32 %v187, %v225
  %v227 = vpop.f32.mrf.mxu0
  %v228 = vadd.f32 %v187, %v227
  %229 = vdwg.mxu0
  %v230 = vmul.f32 %v226, 0.5
  %v231 = vmul.f32 %v228, 0.5
  %v232 = vadd.f32 %v35, %v230
  %v233 = vadd.f32 %v36, %v231
  %v234 = vld [vmem:[%s7] sm:$0x1]
  %v235 = vld [vmem:[%s8] sm:$0x1]
  %v236 = vsel %vm39, %v232, 0.0
  %237 = vadd.xlane.f32.xlu0 %v236
  %v238 = vpop.xlane.xlu0 %237
  %v239 = vsel %vm39, %v233, 0.0
  %240 = vadd.xlane.f32.xlu0 %v239
  %v241 = vpop.xlane.xlu0 %240
  %v242 = vmul.f32 %v238, %v52
  %v243 = vmul.f32 %v241, %v52
  %v244 = vsub.f32 %v232, %v242
  %v245 = vsub.f32 %v233, %v243
  %v246 = vmul.f32 %v244, %v244
  %v247 = vmul.f32 %v245, %v245
  %v248 = vsel %vm39, %v246, 0.0
  %249 = vadd.xlane.f32.xlu0 %v248
  %v250 = vpop.xlane.xlu0 %249
  %v251 = vsel %vm39, %v247, 0.0
  %252 = vadd.xlane.f32.xlu0 %v251
  %v253 = vpop.xlane.xlu0 %252
  %v254 = vmul.f32 %v250, %v52
  %v255 = vmul.f32 %v253, %v52
  %v256 = vadd.f32 %v254, 1e-05
  %v257 = vadd.f32 %v255, 1e-05
  %v258 = vrsqrt.pop %v256
  %v259 = vmul.f32 %v258, %v256
  %v260 = vmul.f32 %v259, %v258
  %v261 = vmul.f32 0.5, %v260
  %v262 = vsub.f32 1.5, %v261
  %v263 = vmul.f32 %v258, %v262
  %vm264 = vweird.f32 %v256
  %vm265 = vweird.f32 %v258
  %vm266 = vmor %vm264, %vm265
  %v267 = vsel %vm266, %v258, %v263
  %v268 = vrsqrt.pop %v257
  %v269 = vmul.f32 %v268, %v257
  %v270 = vmul.f32 %v269, %v268
  %v271 = vmul.f32 0.5, %v270
  %v272 = vsub.f32 1.5, %v271
  %v273 = vmul.f32 %v268, %v272
  %vm274 = vweird.f32 %v257
  %vm275 = vweird.f32 %v268
  %vm276 = vmor %vm274, %vm275
  %v277 = vsel %vm276, %v268, %v273
  %v278 = vmul.f32 %v244, %v267
  %v279 = vmul.f32 %v245, %v277
  %v280 = vunpack.c.l.bf16 %v234
  %v281 = vperm.slane %v280, 0
  %v282 = vmul.f32 %v278, %v281
  %v283 = vmul.f32 %v279, %v281
  %v284 = vunpack.c.l.bf16 %v235
  %v285 = vperm.slane %v284, 0
  %v286 = vadd.f32 %v282, %v285
  %v287 = vadd.f32 %v283, %v285
  %v288 = vpack.c.bf16 %v286, %v286
  %v289 = vpack.c.bf16 %v287, %v287
  %vm290 = vcmask 257024
  %291 = vst.msk [vmem:[%s9] sm:$0xf] %vm290, %v288
  %292 = vst.msk [vmem:[%s9 + $0x4] sm:$0xf] %vm290, %v289
  // Predicated region
  $region38: #{_lambda_.24} parent=0 // pred_check
    _
  $region39: #{_lambda_.24} parent=0 // pred_check_branch
    %294 = sbr.rel (0) target = $region41
  $region40: #{_lambda_.24} parent=0 // pred_region
    _
  $region41: #{_lambda_.24} parent=0 // pred_fallthru
    _
  // Predicated region
  $region42: #{_lambda_.24} parent=0 // pred_check
    _
  $region43: #{_lambda_.24} parent=0 // pred_check_branch
    %296 = sbr.rel (0) target = $region45
  $region44: #{_lambda_.24} parent=0 // pred_region
    _
  $region45: #{_lambda_.24} parent=0 // pred_fallthru
    _

// kernel: _lambda_.33
$region0: #{_lambda_.33}
  #allocation0 [shape = 'u32[]', space=smem, size = 0x4, offset = 0x4, fixed_abs, tag = 'smem constant byte address 0x4 - core index']
  #allocation1 [shape = 'u32[72,128]{1,0:T(1,128)}', space=vmem, size = 0x9000, scoped, tag = 'internal scratch']
  %s0 = inlined_call_operand.vmem [shape: bf16[16,32], index: 0, kind: input, shape index: {}]
  %s1 = inlined_call_operand.vmem [shape: bf16[1,32], index: 1, kind: input, shape index: {}]
  %s2 = inlined_call_operand.vmem [shape: bf16[1,32], index: 2, kind: input, shape index: {}]
  %s3 = inlined_call_operand.hbm [shape: f32[16,32], index: 3, kind: output, shape index: {}]
  %s4 = sld [smem:[#allocation0]]
  $region22: #{_lambda_.33} parent=0
    _
  %s6 = ssub.s32 1, %s4
  %s7 = scalar_select 0, %s6, %s4
  $region1: #{_lambda_.33} parent=0
    #allocation2 [shape = 'u8[8192]{0}', space=vmem, size = 0x2000, scoped, tag = 'output window, operand 0, single buffered']
    #allocation3 [shape = 's32[1]{0}', space=sflag, size = 0x4, scoped, tag = 'scoped memory for _lambda_.33']
    %8 = vsyncpa [#allocation3], 0
    // Predicated region
    $region2: #{_lambda_.33} parent=1 // pred_check
      _
    $region3: #{_lambda_.33} parent=1 // pred_check_branch
      %10 = sbr.rel (0) target = $region5
    $region4: #{_lambda_.33} parent=1 // pred_region
      _
    $region5: #{_lambda_.33} parent=1 // pred_fallthru
      _
    // Predicated region
    $region6: #{_lambda_.33} parent=1 // pred_check
      _
    $region7: #{_lambda_.33} parent=1 // pred_check_branch
      %12 = sbr.rel (0) target = $region9
    $region8: #{_lambda_.33} parent=1 // pred_region
      _
    $region9: #{_lambda_.33} parent=1 // pred_fallthru
      _
    // Predicated region
    $region10: #{_lambda_.33} parent=1 // pred_check
      _
    $region11: #{_lambda_.33} parent=1 // pred_check_branch
      %14 = sbr.rel (0) target = $region13
    $region12: #{_lambda_.33} parent=1 // pred_region
      _
    $region13: #{_lambda_.33} parent=1 // pred_fallthru
      _
    %v15 = vld [vmem:[%s0] sm:$0xf]
    %v16 = vld [vmem:[%s0 + $0x4] sm:$0xf]
    %v17 = vld [vmem:[%s1] sm:$0x1]
    %v18 = vld [vmem:[%s2] sm:$0x1]
    %v19 = vunpack.c.l.bf16 %v15
    %v20 = vunpack.c.l.bf16 %v16
    %vm21 = vcmask 261120
    %v22 = vsel %vm21, %v19, 0.0
    %23 = vadd.xlane.f32.xlu0 %v22
    %v24 = vpop.xlane.xlu0 %23
    %v25 = vsel %vm21, %v20, 0.0
    %26 = vadd.xlane.f32.xlu0 %v25
    %v27 = vpop.xlane.xlu0 %26
    %v28 = vrcp.pop 32.0
    %v29 = vmul.f32 32.0, %v28
    %v30 = vsub.f32 1.0, %v29
    %v31 = vmul.f32 %v28, %v30
    %v32 = vadd.f32 %v28, %v31
    %vm33 = vweird.f32 %v28
    %v34 = vsel %vm33, %v28, %v32
    %v35 = vmul.f32 %v24, %v34
    %v36 = vmul.f32 %v27, %v34
    %v37 = vsub.f32 %v19, %v35
    %v38 = vsub.f32 %v20, %v36
    %v39 = vmul.f32 %v37, %v37
    %v40 = vmul.f32 %v38, %v38
    %v41 = vsel %vm21, %v39, 0.0
    %42 = vadd.xlane.f32.xlu0 %v41
    %v43 = vpop.xlane.xlu0 %42
    %v44 = vsel %vm21, %v40, 0.0
    %45 = vadd.xlane.f32.xlu0 %v44
    %v46 = vpop.xlane.xlu0 %45
    %v47 = vmul.f32 %v43, %v34
    %v48 = vmul.f32 %v46, %v34
    %v49 = vadd.f32 %v47, 1e-06
    %v50 = vadd.f32 %v48, 1e-06
    %v51 = vrsqrt.pop %v49
    %v52 = vmul.f32 %v51, %v49
    %v53 = vmul.f32 %v52, %v51
    %v54 = vmul.f32 0.5, %v53
    %v55 = vsub.f32 1.5, %v54
    %v56 = vmul.f32 %v51, %v55
    %vm57 = vweird.f32 %v49
    %vm58 = vweird.f32 %v51
    %vm59 = vmor %vm57, %vm58
    %v60 = vsel %vm59, %v51, %v56
    %v61 = vrsqrt.pop %v50
    %v62 = vmul.f32 %v61, %v50
    %v63 = vmul.f32 %v62, %v61
    %v64 = vmul.f32 0.5, %v63
    %v65 = vsub.f32 1.5, %v64
    %v66 = vmul.f32 %v61, %v65
    %vm67 = vweird.f32 %v50
    %vm68 = vweird.f32 %v61
    %vm69 = vmor %vm67, %vm68
    %v70 = vsel %vm69, %v61, %v66
    %v71 = vmul.f32 %v37, %v60
    %v72 = vmul.f32 %v38, %v70
    %v73 = vunpack.c.l.bf16 %v17
    %v74 = vperm.slane %v73, 0
    %v75 = vmul.f32 %v71, %v74
    %v76 = vmul.f32 %v72, %v74
    %v77 = vunpack.c.l.bf16 %v18
    %v78 = vperm.slane %v77, 0
    %v79 = vadd.f32 %v75, %v78
    %v80 = vadd.f32 %v76, %v78
    %81 = vst.msk [vmem:[#allocation2] sm:$0xff] %vm21, %v79
    %82 = vst.msk [vmem:[#allocation2 + $0x8] sm:$0xff] %vm21, %v80
    // Predicated region
    $region14: #{_lambda_.33} parent=1 // pred_check
      _
    $region15: #{_lambda_.33} parent=1 // pred_check_branch
      %84 = sbr.rel (0) target = $region17
    $region16: #{_lambda_.33} parent=1 // pred_region
      %86 = vsyncadd [#allocation3], 0
      %s87 = sshll.u32 [#allocation2], 4
      %s88 = int_to_ptr.vmem [resolvable:$true] %s87
      %s89 = sshll.u32 %s3, 4
      %s90 = int_to_ptr.hbm [resolvable:$true] %s89
      %95 = dma.vmem_to_hbm [thread:$0]  %s88, 256, %s90, [#allocation3], 128, 128, 8
    $region17: #{_lambda_.33} parent=1 // pred_fallthru
      _
    // Predicated region
    $region18: #{_lambda_.33} parent=1 // pred_check
      _
    $region19: #{_lambda_.33} parent=1 // pred_check_branch
      %97 = sbr.rel (0) target = $region21
    $region20: #{_lambda_.33} parent=1 // pred_region
      %99 = dma.done [#allocation3], 256
    $region21: #{_lambda_.33} parent=1 // pred_fallthru
      _
    %100 = vsyncpa [#allocation3], 1

</llo_original>
